<compile_context>
chip_gen: v5e
topology: v5e:2x2
jax: 0.10.0
libtpu: 0.0.40
codegen_flags: <defaults>
</compile_context>

<pallas_src>
import functools

import jax
import jax.numpy as jnp
import numpy as np
from jax.experimental import pallas as pl
from jax.experimental.pallas import tpu as pltpu

LANE = 128


# --------------------------- hardware detection -----------------------------

def _tpu_generation():
    try:
        kind = jax.devices()[0].device_kind.lower()
    except Exception:
        return 6
    for g in (7, 6, 5, 4, 3, 2):
        if f"v{g}" in kind or f"tpu{g}" in kind:
            return g
    return 6


def _physical_vmem_bytes(gen):
    try:
        info = pltpu.get_tpu_info()
        cap = getattr(info, "vmem_capacity_bytes", None)
        if cap:
            return int(cap)
    except Exception:
        pass
    return (64 << 20) if gen >= 7 else (128 << 20)


def _round_up(x, m):
    return -(-x // m) * m


# ----------------------------- Pallas kernel -------------------------------

def _make_conv3x3_kernel(*, stride, H, W, Ho, Wo, Hq, Cin, groups,
                         branch_cfgs, has_res):
    """3x3 conv(s) (padding=1) sharing one input block.

    Each tap becomes an unstrided window of the pre-padded, stride-phase
    decomposed input.  Taps are evaluated as grouped GEMMs on the MXU (K =
    len(group)*Cin) with an f32 accumulator; BN+ReLU prologue / epilogue and
    the residual add are fused around the GEMM chain."""
    s = stride
    P = s * s
    n_cols = 2 // s + 1          # distinct column offsets used by the taps

    def kernel(*refs):
        i = 0
        x_ref = refs[i]; i += 1                       # (P*Hq, Wq, Cin)
        br_refs = []
        for cfg in branch_cfgs:
            d = {}
            if cfg["in_bn"]:
                d["isc"], d["ibi"] = refs[i], refs[i + 1]; i += 2   # (1, Cin)
            d["w"] = refs[i]; i += 1                  # (n_groups, K, tn) bf16
            if cfg["out_bn"]:
                d["osc"], d["obi"] = refs[i], refs[i + 1]; i += 2   # (1, tn)
            br_refs.append(d)
        res_ref = None
        if has_res:
            res_ref = refs[i]; i += 1                 # (Ho, Wo, tn)
        out_refs = refs[i:]                           # one per branch

        x_raw = x_ref[...]

        # Validity mask for the zero-padding ring of the pre-padded / phased
        # input.  Needed only when a fused relu(bn(x)) prologue could turn the
        # zero padding into relu(bias) != 0.  Built from iota + Python-constant
        # bounds: zero DMA, zero VMEM footprint, no vector div/mod.
        mask = None
        if any(cfg["in_bn"] for cfg in branch_cfgs):
            R, C = x_raw.shape[0], x_raw.shape[1]
            rows = jax.lax.broadcasted_iota(jnp.int32, (R, C, 1), 0)
            cols = jax.lax.broadcasted_iota(jnp.int32, (R, C, 1), 1)
            valid = None
            for p in range(P):
                a, b = p // s, p % s
                hq_lo = max(0, -((a - 1) // s))
                hq_hi = min((H - a) // s, Hq - 1)
                wq_lo = max(0, -((b - 1) // s))
                wq_hi = min((W - b) // s, C - 1)
                v = ((rows >= p * Hq + hq_lo) & (rows <= p * Hq + hq_hi) &
                     (cols >= wq_lo) & (cols <= wq_hi))
                valid = v if valid is None else (valid | v)
            mask = valid.astype(jnp.float32)

        for bi, (cfg, d) in enumerate(zip(branch_cfgs, br_refs)):
            o_ref = out_refs[bi]
            tn = o_ref.shape[-1]

            # Fused BN+ReLU prologue in f32, then bf16 MXU operand.
            if cfg["in_bn"]:
                sc = d["isc"][...].reshape(1, 1, Cin)
                bb = d["ibi"][...].reshape(1, 1, Cin)
                xa = jnp.maximum(x_raw.astype(jnp.float32) * sc + bb, 0.0)
                if mask is not None:
                    xa = xa * mask                    # keep conv zero ring at 0
                xa = xa.astype(jnp.bfloat16)
            else:
                xa = x_raw if x_raw.dtype == jnp.bfloat16 else x_raw.astype(jnp.bfloat16)

            # Column-shifted window variants (<=3 relayouts); the row shifts
            # below are cheap leading-axis slices (review: avoid 9 per-tap
            # full-window relayout copies).
            xcols = [xa[:, c0:c0 + Wo, :] for c0 in range(n_cols)]

            w_ref = d["w"]
            acc = None                                 # init from first dot
            for gi, grp in enumerate(groups):
                parts = []
                for (dh, dw) in grp:
                    ph = (dh % s) * s + (dw % s)       # stride phase (static)
                    r0 = ph * Hq + dh // s
                    parts.append(xcols[dw // s][r0:r0 + Ho])
                lhs = parts[0] if len(parts) == 1 else jnp.concatenate(parts, axis=-1)
                contrib = jnp.dot(lhs.reshape(Ho * Wo, lhs.shape[-1]), w_ref[gi],
                                  preferred_element_type=jnp.float32)
                acc = contrib if acc is None else acc + contrib

            if has_res and bi == 0:
                acc = acc + res_ref[...].astype(jnp.float32).reshape(Ho * Wo, tn)
            if cfg["out_bn"]:
                acc = jnp.maximum(acc * d["osc"][...] + d["obi"][...], 0.0)

            o_ref[...] = acc.reshape(Ho, Wo, tn).astype(o_ref.dtype)

    return kernel


# ------------------------------ JAX-side glue -------------------------------

def _pad_and_phase(x_nhwc, stride):
    """Spatial pad by 1 and stride-phase decomposition so every in-kernel tap
    is an UNSTRIDED shifted window.  For stride 1 this is a single XLA pad.
    TODO(synk): fuse this pad into the producing kernel's output layout
    (write a +1 zero ring from conv1) to drop the remaining host-side HBM
    round trip of the activation."""
    N, H, W, C = x_nhwc.shape
    s = stride
    Hpp = _round_up(H + 2, s)
    Wpp = _round_up(W + 2, s)
    Hq, Wq = Hpp // s, Wpp // s
    xp = jnp.pad(x_nhwc, ((0, 0), (1, Hpp - H - 1), (1, Wpp - W - 1), (0, 0)))
    if s == 1:
        return xp, (Hq, Wq)
    x_ph = (xp.reshape(N, Hq, s, Wq, s, C)
              .transpose(0, 2, 4, 1, 3, 5)
              .reshape(N, s * s * Hq, Wq, C))
    return x_ph, (Hq, Wq)


def conv3x3_fused(x_nhwc, branches, stride, *, residual=None):
    """Fused 3x3 conv(s) with padding=1 sharing one read of x.

    branches: list of dicts with keys
      w          : (Cout, Cin_w, 3, 3) weights (Cin_w <= x channels; padded)
      in_scale / in_bias   : folded input BN (or None)  -> relu(bn(x)) prologue
      out_scale / out_bias : folded output BN (or None) -> relu(bn(.)) epilogue
      out_dtype  : output dtype
    residual: optional (N, Ho, Wo, C_r), added to branch 0 before its epilogue.
    Returns a list of (N, Ho, Wo, Coutp) outputs, Coutp = Cout rounded up to a
    multiple of 128 lanes (caller slices the pad off at the end)."""
    assert stride in (1, 2)
    assert residual is None or len(branches) == 1
    N, H, W, Cin = x_nhwc.shape
    s = stride
    gen = _tpu_generation()

    x_in, (Hq, Wq) = _pad_and_phase(x_nhwc, s)
    Ho = (H - 1) // s + 1
    Wo = (W - 1) // s + 1
    P = s * s
    R = P * Hq

    Cout = int(branches[0]["w"].shape[0])
    assert all(int(br["w"].shape[0]) == Cout for br in branches)
    Coutp = _round_up(Cout, LANE)

    # Lane-dense Cout tiling: never let tn fall below 128 (pad instead);
    # prefer 256 on v6e/v7x, 128 on v5e and older.
    tn = 256 if (gen >= 6 and Coutp % 256 == 0) else LANE
    nj = Coutp // tn

    # MXU contraction target: pack 3 row-taps per column into one K = 3*Cin
    # GEMM when Cin is shallow.  TODO(synk): also pack for very shallow /
    # odd Cin once unaligned minor-dim concat is verified on all generations.
    k_target = 256 if gen >= 6 else 128
    pack = (Cin < k_target) and (3 * Cin >= 128) and (Cin % 8 == 0)
    if pack:
        groups = [[(0, dw), (1, dw), (2, dw)] for dw in range(3)]
    else:
        groups = [[(dh, dw)] for dh in range(3) for dw in range(3)]
    n_groups = len(groups)
    glen = len(groups[0])

    def _prep_w(w_oihw):
        co, ci = int(w_oihw.shape[0]), int(w_oihw.shape[1])
        assert ci <= Cin and co == Cout
        w = jnp.transpose(w_oihw, (2, 3, 1, 0))                    # (3,3,ci,co)
        w = jnp.pad(w, ((0, 0), (0, 0), (0, Cin - ci), (0, Coutp - co)))
        wg = jnp.stack([jnp.concatenate([w[dh, dw] for (dh, dw) in grp], axis=0)
                        for grp in groups])                         # (ng, K, Coutp)
        return wg.astype(jnp.bfloat16)

    # Grid-axis order: keep the bigger operand VMEM-resident across the inner
    # axis (weights resident across batch for weight-heavy layers).
    x_blk_bytes = R * Wq * Cin * np.dtype(x_in.dtype).itemsize
    w_blk_bytes = len(branches) * 9 * Cin * tn * 2
    cout_outer = w_blk_bytes > x_blk_bytes
    if cout_outer:
        grid = (nj, N)
        _n = lambda a, b: b
        _j = lambda a, b: a
    else:
        grid = (N, nj)
        _n = lambda a, b: a
        _j = lambda a, b: b

    in_specs = [pl.BlockSpec((None, R, Wq, Cin), lambda a, b: (_n(a, b), 0, 0, 0))]
    args = [x_in]
    branch_cfgs = []
    for br in branches:
        cfg = {"in_bn": br.get("in_scale") is not None,
               "out_bn": br.get("out_scale") is not None}
        branch_cfgs.append(cfg)
        if cfg["in_bn"]:
            in_specs += [pl.BlockSpec((1, Cin), lambda a, b: (0, 0)),
                         pl.BlockSpec((1, Cin), lambda a, b: (0, 0))]
            args += [br["in_scale"].reshape(1, Cin).astype(jnp.float32),
                     br["in_bias"].reshape(1, Cin).astype(jnp.float32)]
        in_specs.append(pl.BlockSpec((n_groups, glen * Cin, tn),
                                     lambda a, b: (0, 0, _j(a, b))))
        args.append(_prep_w(br["w"]))
        if cfg["out_bn"]:
            osc = jnp.pad(br["out_scale"].astype(jnp.float32), (0, Coutp - Cout))
            obi = jnp.pad(br["out_bias"].astype(jnp.float32), (0, Coutp - Cout))
            in_specs += [pl.BlockSpec((1, tn), lambda a, b: (0, _j(a, b))),
                         pl.BlockSpec((1, tn), lambda a, b: (0, _j(a, b)))]
            args += [osc.reshape(1, Coutp), obi.reshape(1, Coutp)]

    has_res = residual is not None
    if has_res:
        if residual.shape[-1] != Coutp:
            # TODO(synk): lane-pad inside the kernel when nj == 1 to avoid this
            # (small) XLA pass; only hit when Cout is not a multiple of 128.
            residual = jnp.pad(
                residual, ((0, 0), (0, 0), (0, 0), (0, Coutp - residual.shape[-1])))
        in_specs.append(pl.BlockSpec((None, Ho, Wo, tn),
                                     lambda a, b: (_n(a, b), 0, 0, _j(a, b))))
        args.append(residual)

    out_shapes = tuple(jax.ShapeDtypeStruct((N, Ho, Wo, Coutp), br["out_dtype"])
                       for br in branches)
    out_specs = tuple(pl.BlockSpec((None, Ho, Wo, tn),
                                   lambda a, b: (_n(a, b), 0, 0, _j(a, b)))
                      for _ in branches)

    kernel = _make_conv3x3_kernel(stride=s, H=H, W=W, Ho=Ho, Wo=Wo, Hq=Hq,
                                  Cin=Cin, groups=groups,
                                  branch_cfgs=branch_cfgs, has_res=has_res)

    # VMEM budget from actual per-block byte counts: 2x (double-buffered) for
    # every pipelined operand + in-kernel values (bf16 activation variants,
    # packed LHS, f32 accumulators) + headroom, clamped to 0.75x physical.
    # TODO(synk): add an Ho-row grid axis with halo'd input rows (manual DMA)
    # for large spatial maps so blocks stay inside v7x's 64 MiB VMEM.
    isz = lambda dt: np.dtype(dt).itemsize
    blk_in = R * Wq * Cin * isz(x_in.dtype)
    blk_w = len(branches) * 9 * Cin * tn * 2
    blk_res = Ho * Wo * tn * isz(residual.dtype) if has_res else 0
    blk_out = sum(Ho * Wo * tn * isz(br["out_dtype"]) for br in branches)
    compute = len(branches) * (4 * R * Wq * Cin * 2
                               + Ho * Wo * (4 * tn + 4 * glen * Cin))
    needed = 2 * (blk_in + blk_w + blk_res + blk_out) + compute + (8 << 20)
    phys = _physical_vmem_bytes(gen)
    vmem_limit = int(min(max(needed, 32 << 20), int(0.75 * phys)))

    outs = pl.pallas_call(
        kernel,
        out_shape=out_shapes,
        grid=grid,
        in_specs=in_specs,
        out_specs=out_specs,
        compiler_params=pltpu.CompilerParams(
            dimension_semantics=("parallel", "parallel"),
            vmem_limit_bytes=vmem_limit),
    )(*args)
    return list(outs) if isinstance(outs, (tuple, list)) else [outs]


def fold_bn(gamma, beta, mean, var, eps=1e-5):
    scale = gamma * jax.lax.rsqrt(var + eps)
    bias = beta - mean * scale
    return scale, bias


# ------------------------------ BasicBlock ---------------------------------

def basic_block_forward(x_nchw, params, *, inf, outf, stride):
    x = jnp.transpose(x_nchw, (0, 2, 3, 1)).astype(jnp.float32)   # NHWC

    s1, b1 = fold_bn(**params["bn1"])
    s2, b2 = fold_bn(**params["bn2"])

    # conv1: bn1+relu fused as prologue, bn2+relu fused as epilogue; output
    # only feeds conv2's MXU so it is stored bf16 (precision contract: bf16
    # MXU operands, f32 accumulation / BN / residual math).
    # TODO(synk): nn.Dropout (between conv1 and bn2) is stochastic in training
    # mode; implemented here as the inference-mode identity.
    conv1_branch = dict(w=params["conv1_w"], in_scale=s1, in_bias=b1,
                        out_scale=s2, out_bias=b2, out_dtype=jnp.bfloat16)

    if inf == outf:
        assert stride == 1, "identity shortcut needs stride == 1"
        (t2,) = conv3x3_fused(x, [conv1_branch], stride)
        r = x                                              # identity residual
    else:
        ss, bs = fold_bn(**params["bn_s"])
        sc_branch = dict(w=params["conv_s_w"], in_scale=ss, in_bias=bs,
                         out_scale=None, out_bias=None, out_dtype=jnp.float32)
        # conv1 and the shortcut conv share ONE read of x (single kernel,
        # two outputs).
        t2, r = conv3x3_fused(x, [conv1_branch, sc_branch], stride)

    conv2_branch = dict(w=params["conv2_w"], in_scale=None, in_bias=None,
                        out_scale=None, out_bias=None, out_dtype=jnp.float32)
    # conv2 with the residual add (x2.add_(r)) fused into its epilogue.
    (y,) = conv3x3_fused(t2, [conv2_branch], 1, residual=r)

    y = y[..., :outf]                                      # strip lane padding
    return jnp.transpose(y, (0, 3, 1, 2))                  # NCHW


# ------------------------ deterministic parameter init ---------------------

def _bn_params(key, c):
    k = jax.random.split(key, 4)
    return dict(
        gamma=1.0 + 0.1 * jax.random.normal(k[0], (c,), jnp.float32),
        beta=0.1 * jax.random.normal(k[1], (c,), jnp.float32),
        mean=0.1 * jax.random.normal(k[2], (c,), jnp.float32),
        var=jnp.abs(1.0 + 0.1 * jax.random.normal(k[3], (c,), jnp.float32)),
    )


def _conv_w(key, cout, cin):
    fan_in = cin * 9
    return jax.random.normal(key, (cout, cin, 3, 3), jnp.float32) / jnp.sqrt(fan_in)


def init_basic_block(key, inf, outf):
    ks = jax.random.split(key, 6)
    p = {
        "bn1": _bn_params(ks[0], inf),
        "conv1_w": _conv_w(ks[1], outf, inf),
        "bn2": _bn_params(ks[2], outf),
        "conv2_w": _conv_w(ks[3], outf, outf),
    }
    if inf != outf:
        p["bn_s"] = _bn_params(ks[4], inf)
        p["conv_s_w"] = _conv_w(ks[5], outf, inf)
    return p


# ---------------------------- pure-JAX reference ----------------------------

def _ref_conv3x3(x_nhwc, w_oihw, stride, conv_dtype):
    return jax.lax.conv_general_dilated(
        x_nhwc.astype(conv_dtype),
        jnp.transpose(w_oihw, (2, 3, 1, 0)).astype(conv_dtype),
        window_strides=(stride, stride), padding=((1, 1), (1, 1)),
        dimension_numbers=("NHWC", "HWIO", "NHWC"),
        preferred_element_type=jnp.float32)


def basic_block_ref(x_nchw, params, *, inf, outf, stride, conv_dtype):
    """Pure-JAX reference.  conv_dtype=bfloat16 mirrors the kernel's MXU
    operand precision (f32 accumulation in both); float32 is the original
    module's precision."""
    x = jnp.transpose(x_nchw, (0, 2, 3, 1)).astype(jnp.float32)
    s1, b1 = fold_bn(**params["bn1"])
    t1 = jnp.maximum(x * s1 + b1, 0.0)
    y1 = _ref_conv3x3(t1, params["conv1_w"], stride, conv_dtype)
    s2, b2 = fold_bn(**params["bn2"])
    t2 = jnp.maximum(y1 * s2 + b2, 0.0)
    if inf == outf:
        r = x
    else:
        ss, bs = fold_bn(**params["bn_s"])
        ts = jnp.maximum(x * ss + bs, 0.0)
        r = _ref_conv3x3(ts, params["conv_s_w"], stride, conv_dtype)
    y2 = _ref_conv3x3(t2, params["conv2_w"], 1, conv_dtype) + r
    return jnp.transpose(y2, (0, 3, 1, 2))


# ----------------------------------- main -----------------------------------

if __name__ == "__main__":
    key = jax.random.PRNGKey(0)

    def run_case(case_key, inf, outf, stride, n=2, h=16, w=16):
        kx, kp = jax.random.split(case_key)
        x = jax.random.normal(kx, (n, inf, h, w), jnp.float32)  # NCHW like torch
        params = init_basic_block(kp, inf, outf)

        fwd = jax.jit(functools.partial(basic_block_forward,
                                        inf=inf, outf=outf, stride=stride))
        out = jax.block_until_ready(fwd(x, params))

        ho = (h - 1) // stride + 1
        wo = (w - 1) // stride + 1
        assert out.shape == (n, outf, ho, wo)

        # Reference with matching bf16 MXU-operand precision -> tight check.
        ref_bf16 = basic_block_ref(x, params, inf=inf, outf=outf,
                                   stride=stride, conv_dtype=jnp.bfloat16)
        np.testing.assert_allclose(np.asarray(out), np.asarray(ref_bf16),
                                   rtol=1e-2, atol=1e-2)
        # Full-f32 reference (original module precision) -> sanity check on
        # the bf16-operand quantization error.
        ref_f32 = basic_block_ref(x, params, inf=inf, outf=outf,
                                  stride=stride, conv_dtype=jnp.float32)
        np.testing.assert_allclose(np.asarray(out), np.asarray(ref_f32),
                                   rtol=5e-2, atol=5e-2)

    k1, k2 = jax.random.split(key)
    run_case(k1, 4, 8, 2)   # downsampling block: fused conv1+shortcut, stride 2
    run_case(k2, 8, 8, 1)   # identity-shortcut block, stride 1

    print("KERNEL_OK")
</pallas_src>

<mosaic_0001>
module attributes {stable_mosaic.version = 11 : i64} {
  func.func @kernel(%arg0: i32, %arg1: i32, %arg2: memref<1x36x9x4xf32, #tpu.memory_space<vmem>>, %arg3: memref<1x4xf32, #tpu.memory_space<vmem>>, %arg4: memref<1x4xf32, #tpu.memory_space<vmem>>, %arg5: memref<9x4x128xbf16, #tpu.memory_space<vmem>>, %arg6: memref<1x128xf32, #tpu.memory_space<vmem>>, %arg7: memref<1x128xf32, #tpu.memory_space<vmem>>, %arg8: memref<1x4xf32, #tpu.memory_space<vmem>>, %arg9: memref<1x4xf32, #tpu.memory_space<vmem>>, %arg10: memref<9x4x128xbf16, #tpu.memory_space<vmem>>, %arg11: memref<1x8x8x128xbf16, #tpu.memory_space<vmem>>, %arg12: memref<1x8x8x128xf32, #tpu.memory_space<vmem>>) attributes {dimension_semantics = [#tpu.dimension_semantics<parallel>, #tpu.dimension_semantics<parallel>], iteration_bounds = array<i64: 1, 2>, scalar_prefetch = 0 : i64, scratch_operands = 0 : i64, tpu.core_type = #tpu.core_type<tc>, window_params = [{transform_indices = @transform_0, window_bounds = array<i64: 1, 36, 9, 4>}, {pipeline_mode = #tpu.pipeline_mode<synchronous>, transform_indices = @transform_1, window_bounds = array<i64: 1, 4>}, {pipeline_mode = #tpu.pipeline_mode<synchronous>, transform_indices = @transform_2, window_bounds = array<i64: 1, 4>}, {transform_indices = @transform_3, window_bounds = array<i64: 9, 4, 128>}, {transform_indices = @transform_4, window_bounds = array<i64: 1, 128>}, {transform_indices = @transform_5, window_bounds = array<i64: 1, 128>}, {pipeline_mode = #tpu.pipeline_mode<synchronous>, transform_indices = @transform_6, window_bounds = array<i64: 1, 4>}, {pipeline_mode = #tpu.pipeline_mode<synchronous>, transform_indices = @transform_7, window_bounds = array<i64: 1, 4>}, {transform_indices = @transform_8, window_bounds = array<i64: 9, 4, 128>}, {transform_indices = @transform_9, window_bounds = array<i64: 1, 8, 8, 128>}, {transform_indices = @transform_10, window_bounds = array<i64: 1, 8, 8, 128>}]} {
    %c0 = arith.constant 0 : index
    %c0_0 = arith.constant 0 : index
    %c0_1 = arith.constant 0 : index
    %c0_2 = arith.constant 0 : index
    %0 = vector.load %arg2[%c0, %c0_0, %c0_1, %c0_2] : memref<1x36x9x4xf32, #tpu.memory_space<vmem>>, vector<1x36x9x4xf32>
    %1 = vector.shape_cast %0 : vector<1x36x9x4xf32> to vector<36x9x4xf32>
    %2 = tpu.iota {dimensions = array<i32: 0>} : vector<36x9x1xi32>
    %3 = tpu.iota {dimensions = array<i32: 1>} : vector<36x9x1xi32>
    %c1_i32 = arith.constant 1 : i32
    %4 = vector.broadcast %c1_i32 : i32 to vector<36x9x1xi32>
    %5 = arith.cmpi sge, %2, %4 : vector<36x9x1xi32>
    %c8_i32 = arith.constant 8 : i32
    %6 = vector.broadcast %c8_i32 : i32 to vector<36x9x1xi32>
    %7 = arith.cmpi sle, %2, %6 : vector<36x9x1xi32>
    %8 = arith.andi %5, %7 : vector<36x9x1xi1>
    %c1_i32_3 = arith.constant 1 : i32
    %9 = vector.broadcast %c1_i32_3 : i32 to vector<36x9x1xi32>
    %10 = arith.cmpi sge, %3, %9 : vector<36x9x1xi32>
    %11 = arith.andi %8, %10 : vector<36x9x1xi1>
    %c8_i32_4 = arith.constant 8 : i32
    %12 = vector.broadcast %c8_i32_4 : i32 to vector<36x9x1xi32>
    %13 = arith.cmpi sle, %3, %12 : vector<36x9x1xi32>
    %14 = arith.andi %11, %13 : vector<36x9x1xi1>
    %c10_i32 = arith.constant 10 : i32
    %15 = vector.broadcast %c10_i32 : i32 to vector<36x9x1xi32>
    %16 = arith.cmpi sge, %2, %15 : vector<36x9x1xi32>
    %c17_i32 = arith.constant 17 : i32
    %17 = vector.broadcast %c17_i32 : i32 to vector<36x9x1xi32>
    %18 = arith.cmpi sle, %2, %17 : vector<36x9x1xi32>
    %19 = arith.andi %16, %18 : vector<36x9x1xi1>
    %c0_i32 = arith.constant 0 : i32
    %20 = vector.broadcast %c0_i32 : i32 to vector<36x9x1xi32>
    %21 = arith.cmpi sge, %3, %20 : vector<36x9x1xi32>
    %22 = arith.andi %19, %21 : vector<36x9x1xi1>
    %c7_i32 = arith.constant 7 : i32
    %23 = vector.broadcast %c7_i32 : i32 to vector<36x9x1xi32>
    %24 = arith.cmpi sle, %3, %23 : vector<36x9x1xi32>
    %25 = arith.andi %22, %24 : vector<36x9x1xi1>
    %26 = arith.ori %14, %25 : vector<36x9x1xi1>
    %c18_i32 = arith.constant 18 : i32
    %27 = vector.broadcast %c18_i32 : i32 to vector<36x9x1xi32>
    %28 = arith.cmpi sge, %2, %27 : vector<36x9x1xi32>
    %c25_i32 = arith.constant 25 : i32
    %29 = vector.broadcast %c25_i32 : i32 to vector<36x9x1xi32>
    %30 = arith.cmpi sle, %2, %29 : vector<36x9x1xi32>
    %31 = arith.andi %28, %30 : vector<36x9x1xi1>
    %c1_i32_5 = arith.constant 1 : i32
    %32 = vector.broadcast %c1_i32_5 : i32 to vector<36x9x1xi32>
    %33 = arith.cmpi sge, %3, %32 : vector<36x9x1xi32>
    %34 = arith.andi %31, %33 : vector<36x9x1xi1>
    %c8_i32_6 = arith.constant 8 : i32
    %35 = vector.broadcast %c8_i32_6 : i32 to vector<36x9x1xi32>
    %36 = arith.cmpi sle, %3, %35 : vector<36x9x1xi32>
    %37 = arith.andi %34, %36 : vector<36x9x1xi1>
    %38 = arith.ori %26, %37 : vector<36x9x1xi1>
    %c27_i32 = arith.constant 27 : i32
    %39 = vector.broadcast %c27_i32 : i32 to vector<36x9x1xi32>
    %40 = arith.cmpi sge, %2, %39 : vector<36x9x1xi32>
    %c34_i32 = arith.constant 34 : i32
    %41 = vector.broadcast %c34_i32 : i32 to vector<36x9x1xi32>
    %42 = arith.cmpi sle, %2, %41 : vector<36x9x1xi32>
    %43 = arith.andi %40, %42 : vector<36x9x1xi1>
    %c0_i32_7 = arith.constant 0 : i32
    %44 = vector.broadcast %c0_i32_7 : i32 to vector<36x9x1xi32>
    %45 = arith.cmpi sge, %3, %44 : vector<36x9x1xi32>
    %46 = arith.andi %43, %45 : vector<36x9x1xi1>
    %c7_i32_8 = arith.constant 7 : i32
    %47 = vector.broadcast %c7_i32_8 : i32 to vector<36x9x1xi32>
    %48 = arith.cmpi sle, %3, %47 : vector<36x9x1xi32>
    %49 = arith.andi %46, %48 : vector<36x9x1xi1>
    %50 = arith.ori %38, %49 : vector<36x9x1xi1>
    %51 = arith.extui %50 : vector<36x9x1xi1> to vector<36x9x1xi32>
    %52 = arith.sitofp %51 : vector<36x9x1xi32> to vector<36x9x1xf32>
    %c0_9 = arith.constant 0 : index
    %c0_10 = arith.constant 0 : index
    %53 = vector.load %arg3[%c0_9, %c0_10] : memref<1x4xf32, #tpu.memory_space<vmem>>, vector<1x4xf32>
    %54 = vector.shape_cast %53 : vector<1x4xf32> to vector<1x1x4xf32>
    %c0_11 = arith.constant 0 : index
    %c0_12 = arith.constant 0 : index
    %55 = vector.load %arg4[%c0_11, %c0_12] : memref<1x4xf32, #tpu.memory_space<vmem>>, vector<1x4xf32>
    %56 = vector.shape_cast %55 : vector<1x4xf32> to vector<1x1x4xf32>
    %57 = vector.broadcast %54 : vector<1x1x4xf32> to vector<36x9x4xf32>
    %58 = arith.mulf %1, %57 : vector<36x9x4xf32>
    %59 = vector.broadcast %56 : vector<1x1x4xf32> to vector<36x9x4xf32>
    %60 = arith.addf %58, %59 : vector<36x9x4xf32>
    %cst = arith.constant 0.000000e+00 : f32
    %61 = vector.broadcast %cst : f32 to vector<36x9x4xf32>
    %62 = arith.maximumf %60, %61 : vector<36x9x4xf32>
    %63 = vector.broadcast %52 : vector<36x9x1xf32> to vector<36x9x4xf32>
    %64 = arith.mulf %62, %63 : vector<36x9x4xf32>
    %65 = arith.truncf %64 : vector<36x9x4xf32> to vector<36x9x4xbf16>
    %66 = vector.extract_strided_slice %65 {offsets = [0, 0, 0], sizes = [36, 8, 4], strides = [1, 1, 1]} : vector<36x9x4xbf16> to vector<36x8x4xbf16>
    %67 = vector.extract_strided_slice %65 {offsets = [0, 1, 0], sizes = [36, 8, 4], strides = [1, 1, 1]} : vector<36x9x4xbf16> to vector<36x8x4xbf16>
    %68 = vector.extract_strided_slice %66 {offsets = [0, 0, 0], sizes = [8, 8, 4], strides = [1, 1, 1]} : vector<36x8x4xbf16> to vector<8x8x4xbf16>
    %69 = vector.shape_cast %68 : vector<8x8x4xbf16> to vector<64x4xbf16>
    %c0_13 = arith.constant 0 : index
    %c0_14 = arith.constant 0 : index
    %c0_15 = arith.constant 0 : index
    %70 = vector.load %arg5[%c0_13, %c0_14, %c0_15] : memref<9x4x128xbf16, #tpu.memory_space<vmem>>, vector<1x4x128xbf16>
    %71 = vector.shape_cast %70 : vector<1x4x128xbf16> to vector<4x128xbf16>
    %cst_16 = arith.constant dense<0.000000e+00> : vector<64x128xf32>
    %72 = tpu.matmul %69, %71, %cst_16 {dimension_numbers = #tpu.dot_dimension_numbers<[1], [0], [0], [1], [0, 0, 1, 1], [], []>} : vector<64x4xbf16>, vector<4x128xbf16>, vector<64x128xf32> -> vector<64x128xf32>
    %73 = vector.extract_strided_slice %66 {offsets = [9, 0, 0], sizes = [8, 8, 4], strides = [1, 1, 1]} : vector<36x8x4xbf16> to vector<8x8x4xbf16>
    %74 = vector.shape_cast %73 : vector<8x8x4xbf16> to vector<64x4xbf16>
    %c1 = arith.constant 1 : index
    %c0_17 = arith.constant 0 : index
    %c0_18 = arith.constant 0 : index
    %75 = vector.load %arg5[%c1, %c0_17, %c0_18] : memref<9x4x128xbf16, #tpu.memory_space<vmem>>, vector<1x4x128xbf16>
    %76 = vector.shape_cast %75 : vector<1x4x128xbf16> to vector<4x128xbf16>
    %cst_19 = arith.constant dense<0.000000e+00> : vector<64x128xf32>
    %77 = tpu.matmul %74, %76, %cst_19 {dimension_numbers = #tpu.dot_dimension_numbers<[1], [0], [0], [1], [0, 0, 1, 1], [], []>} : vector<64x4xbf16>, vector<4x128xbf16>, vector<64x128xf32> -> vector<64x128xf32>
    %78 = arith.addf %72, %77 : vector<64x128xf32>
    %79 = vector.extract_strided_slice %67 {offsets = [0, 0, 0], sizes = [8, 8, 4], strides = [1, 1, 1]} : vector<36x8x4xbf16> to vector<8x8x4xbf16>
    %80 = vector.shape_cast %79 : vector<8x8x4xbf16> to vector<64x4xbf16>
    %c2 = arith.constant 2 : index
    %c0_20 = arith.constant 0 : index
    %c0_21 = arith.constant 0 : index
    %81 = vector.load %arg5[%c2, %c0_20, %c0_21] : memref<9x4x128xbf16, #tpu.memory_space<vmem>>, vector<1x4x128xbf16>
    %82 = vector.shape_cast %81 : vector<1x4x128xbf16> to vector<4x128xbf16>
    %cst_22 = arith.constant dense<0.000000e+00> : vector<64x128xf32>
    %83 = tpu.matmul %80, %82, %cst_22 {dimension_numbers = #tpu.dot_dimension_numbers<[1], [0], [0], [1], [0, 0, 1, 1], [], []>} : vector<64x4xbf16>, vector<4x128xbf16>, vector<64x128xf32> -> vector<64x128xf32>
    %84 = arith.addf %78, %83 : vector<64x128xf32>
    %85 = vector.extract_strided_slice %66 {offsets = [18, 0, 0], sizes = [8, 8, 4], strides = [1, 1, 1]} : vector<36x8x4xbf16> to vector<8x8x4xbf16>
    %86 = vector.shape_cast %85 : vector<8x8x4xbf16> to vector<64x4xbf16>
    %c3 = arith.constant 3 : index
    %c0_23 = arith.constant 0 : index
    %c0_24 = arith.constant 0 : index
    %87 = vector.load %arg5[%c3, %c0_23, %c0_24] : memref<9x4x128xbf16, #tpu.memory_space<vmem>>, vector<1x4x128xbf16>
    %88 = vector.shape_cast %87 : vector<1x4x128xbf16> to vector<4x128xbf16>
    %cst_25 = arith.constant dense<0.000000e+00> : vector<64x128xf32>
    %89 = tpu.matmul %86, %88, %cst_25 {dimension_numbers = #tpu.dot_dimension_numbers<[1], [0], [0], [1], [0, 0, 1, 1], [], []>} : vector<64x4xbf16>, vector<4x128xbf16>, vector<64x128xf32> -> vector<64x128xf32>
    %90 = arith.addf %84, %89 : vector<64x128xf32>
    %91 = vector.extract_strided_slice %66 {offsets = [27, 0, 0], sizes = [8, 8, 4], strides = [1, 1, 1]} : vector<36x8x4xbf16> to vector<8x8x4xbf16>
    %92 = vector.shape_cast %91 : vector<8x8x4xbf16> to vector<64x4xbf16>
    %c4 = arith.constant 4 : index
    %c0_26 = arith.constant 0 : index
    %c0_27 = arith.constant 0 : index
    %93 = vector.load %arg5[%c4, %c0_26, %c0_27] : memref<9x4x128xbf16, #tpu.memory_space<vmem>>, vector<1x4x128xbf16>
    %94 = vector.shape_cast %93 : vector<1x4x128xbf16> to vector<4x128xbf16>
    %cst_28 = arith.constant dense<0.000000e+00> : vector<64x128xf32>
    %95 = tpu.matmul %92, %94, %cst_28 {dimension_numbers = #tpu.dot_dimension_numbers<[1], [0], [0], [1], [0, 0, 1, 1], [], []>} : vector<64x4xbf16>, vector<4x128xbf16>, vector<64x128xf32> -> vector<64x128xf32>
    %96 = arith.addf %90, %95 : vector<64x128xf32>
    %97 = vector.extract_strided_slice %67 {offsets = [18, 0, 0], sizes = [8, 8, 4], strides = [1, 1, 1]} : vector<36x8x4xbf16> to vector<8x8x4xbf16>
    %98 = vector.shape_cast %97 : vector<8x8x4xbf16> to vector<64x4xbf16>
    %c5 = arith.constant 5 : index
    %c0_29 = arith.constant 0 : index
    %c0_30 = arith.constant 0 : index
    %99 = vector.load %arg5[%c5, %c0_29, %c0_30] : memref<9x4x128xbf16, #tpu.memory_space<vmem>>, vector<1x4x128xbf16>
    %100 = vector.shape_cast %99 : vector<1x4x128xbf16> to vector<4x128xbf16>
    %cst_31 = arith.constant dense<0.000000e+00> : vector<64x128xf32>
    %101 = tpu.matmul %98, %100, %cst_31 {dimension_numbers = #tpu.dot_dimension_numbers<[1], [0], [0], [1], [0, 0, 1, 1], [], []>} : vector<64x4xbf16>, vector<4x128xbf16>, vector<64x128xf32> -> vector<64x128xf32>
    %102 = arith.addf %96, %101 : vector<64x128xf32>
    %103 = vector.extract_strided_slice %66 {offsets = [1, 0, 0], sizes = [8, 8, 4], strides = [1, 1, 1]} : vector<36x8x4xbf16> to vector<8x8x4xbf16>
    %104 = vector.shape_cast %103 : vector<8x8x4xbf16> to vector<64x4xbf16>
    %c6 = arith.constant 6 : index
    %c0_32 = arith.constant 0 : index
    %c0_33 = arith.constant 0 : index
    %105 = vector.load %arg5[%c6, %c0_32, %c0_33] : memref<9x4x128xbf16, #tpu.memory_space<vmem>>, vector<1x4x128xbf16>
    %106 = vector.shape_cast %105 : vector<1x4x128xbf16> to vector<4x128xbf16>
    %cst_34 = arith.constant dense<0.000000e+00> : vector<64x128xf32>
    %107 = tpu.matmul %104, %106, %cst_34 {dimension_numbers = #tpu.dot_dimension_numbers<[1], [0], [0], [1], [0, 0, 1, 1], [], []>} : vector<64x4xbf16>, vector<4x128xbf16>, vector<64x128xf32> -> vector<64x128xf32>
    %108 = arith.addf %102, %107 : vector<64x128xf32>
    %109 = vector.extract_strided_slice %66 {offsets = [10, 0, 0], sizes = [8, 8, 4], strides = [1, 1, 1]} : vector<36x8x4xbf16> to vector<8x8x4xbf16>
    %110 = vector.shape_cast %109 : vector<8x8x4xbf16> to vector<64x4xbf16>
    %c7 = arith.constant 7 : index
    %c0_35 = arith.constant 0 : index
    %c0_36 = arith.constant 0 : index
    %111 = vector.load %arg5[%c7, %c0_35, %c0_36] : memref<9x4x128xbf16, #tpu.memory_space<vmem>>, vector<1x4x128xbf16>
    %112 = vector.shape_cast %111 : vector<1x4x128xbf16> to vector<4x128xbf16>
    %cst_37 = arith.constant dense<0.000000e+00> : vector<64x128xf32>
    %113 = tpu.matmul %110, %112, %cst_37 {dimension_numbers = #tpu.dot_dimension_numbers<[1], [0], [0], [1], [0, 0, 1, 1], [], []>} : vector<64x4xbf16>, vector<4x128xbf16>, vector<64x128xf32> -> vector<64x128xf32>
    %114 = arith.addf %108, %113 : vector<64x128xf32>
    %115 = vector.extract_strided_slice %67 {offsets = [1, 0, 0], sizes = [8, 8, 4], strides = [1, 1, 1]} : vector<36x8x4xbf16> to vector<8x8x4xbf16>
    %116 = vector.shape_cast %115 : vector<8x8x4xbf16> to vector<64x4xbf16>
    %c8 = arith.constant 8 : index
    %c0_38 = arith.constant 0 : index
    %c0_39 = arith.constant 0 : index
    %117 = vector.load %arg5[%c8, %c0_38, %c0_39] : memref<9x4x128xbf16, #tpu.memory_space<vmem>>, vector<1x4x128xbf16>
    %118 = vector.shape_cast %117 : vector<1x4x128xbf16> to vector<4x128xbf16>
    %cst_40 = arith.constant dense<0.000000e+00> : vector<64x128xf32>
    %119 = tpu.matmul %116, %118, %cst_40 {dimension_numbers = #tpu.dot_dimension_numbers<[1], [0], [0], [1], [0, 0, 1, 1], [], []>} : vector<64x4xbf16>, vector<4x128xbf16>, vector<64x128xf32> -> vector<64x128xf32>
    %120 = arith.addf %114, %119 : vector<64x128xf32>
    %c0_41 = arith.constant 0 : index
    %c0_42 = arith.constant 0 : index
    %121 = vector.load %arg6[%c0_41, %c0_42] : memref<1x128xf32, #tpu.memory_space<vmem>>, vector<1x128xf32>
    %122 = vector.broadcast %121 : vector<1x128xf32> to vector<64x128xf32>
    %123 = arith.mulf %120, %122 : vector<64x128xf32>
    %c0_43 = arith.constant 0 : index
    %c0_44 = arith.constant 0 : index
    %124 = vector.load %arg7[%c0_43, %c0_44] : memref<1x128xf32, #tpu.memory_space<vmem>>, vector<1x128xf32>
    %125 = vector.broadcast %124 : vector<1x128xf32> to vector<64x128xf32>
    %126 = arith.addf %123, %125 : vector<64x128xf32>
    %cst_45 = arith.constant 0.000000e+00 : f32
    %127 = vector.broadcast %cst_45 : f32 to vector<64x128xf32>
    %128 = arith.maximumf %126, %127 : vector<64x128xf32>
    %129 = vector.shape_cast %128 : vector<64x128xf32> to vector<8x8x128xf32>
    %130 = arith.truncf %129 : vector<8x8x128xf32> to vector<8x8x128xbf16>
    %c0_46 = arith.constant 0 : index
    %c0_47 = arith.constant 0 : index
    %c0_48 = arith.constant 0 : index
    %c0_49 = arith.constant 0 : index
    %131 = vector.load %arg11[%c0_46, %c0_47, %c0_48, %c0_49] : memref<1x8x8x128xbf16, #tpu.memory_space<vmem>>, vector<1x8x8x128xbf16>
    %132 = vector.shape_cast %131 : vector<1x8x8x128xbf16> to vector<8x8x128xbf16>
    %133 = vector.shape_cast %130 : vector<8x8x128xbf16> to vector<1x8x8x128xbf16>
    tpu.vector_store %arg11[%c0_46, %c0_47, %c0_48, %c0_49], %133 {strides = array<i32>} : memref<1x8x8x128xbf16, #tpu.memory_space<vmem>>, vector<1x8x8x128xbf16>,
    %c0_50 = arith.constant 0 : index
    %c0_51 = arith.constant 0 : index
    %134 = vector.load %arg8[%c0_50, %c0_51] : memref<1x4xf32, #tpu.memory_space<vmem>>, vector<1x4xf32>
    %135 = vector.shape_cast %134 : vector<1x4xf32> to vector<1x1x4xf32>
    %c0_52 = arith.constant 0 : index
    %c0_53 = arith.constant 0 : index
    %136 = vector.load %arg9[%c0_52, %c0_53] : memref<1x4xf32, #tpu.memory_space<vmem>>, vector<1x4xf32>
    %137 = vector.shape_cast %136 : vector<1x4xf32> to vector<1x1x4xf32>
    %138 = vector.broadcast %135 : vector<1x1x4xf32> to vector<36x9x4xf32>
    %139 = arith.mulf %1, %138 : vector<36x9x4xf32>
    %140 = vector.broadcast %137 : vector<1x1x4xf32> to vector<36x9x4xf32>
    %141 = arith.addf %139, %140 : vector<36x9x4xf32>
    %cst_54 = arith.constant 0.000000e+00 : f32
    %142 = vector.broadcast %cst_54 : f32 to vector<36x9x4xf32>
    %143 = arith.maximumf %141, %142 : vector<36x9x4xf32>
    %144 = vector.broadcast %52 : vector<36x9x1xf32> to vector<36x9x4xf32>
    %145 = arith.mulf %143, %144 : vector<36x9x4xf32>
    %146 = arith.truncf %145 : vector<36x9x4xf32> to vector<36x9x4xbf16>
    %147 = vector.extract_strided_slice %146 {offsets = [0, 0, 0], sizes = [36, 8, 4], strides = [1, 1, 1]} : vector<36x9x4xbf16> to vector<36x8x4xbf16>
    %148 = vector.extract_strided_slice %146 {offsets = [0, 1, 0], sizes = [36, 8, 4], strides = [1, 1, 1]} : vector<36x9x4xbf16> to vector<36x8x4xbf16>
    %149 = vector.extract_strided_slice %147 {offsets = [0, 0, 0], sizes = [8, 8, 4], strides = [1, 1, 1]} : vector<36x8x4xbf16> to vector<8x8x4xbf16>
    %150 = vector.shape_cast %149 : vector<8x8x4xbf16> to vector<64x4xbf16>
    %c0_55 = arith.constant 0 : index
    %c0_56 = arith.constant 0 : index
    %c0_57 = arith.constant 0 : index
    %151 = vector.load %arg10[%c0_55, %c0_56, %c0_57] : memref<9x4x128xbf16, #tpu.memory_space<vmem>>, vector<1x4x128xbf16>
    %152 = vector.shape_cast %151 : vector<1x4x128xbf16> to vector<4x128xbf16>
    %cst_58 = arith.constant dense<0.000000e+00> : vector<64x128xf32>
    %153 = tpu.matmul %150, %152, %cst_58 {dimension_numbers = #tpu.dot_dimension_numbers<[1], [0], [0], [1], [0, 0, 1, 1], [], []>} : vector<64x4xbf16>, vector<4x128xbf16>, vector<64x128xf32> -> vector<64x128xf32>
    %154 = vector.extract_strided_slice %147 {offsets = [9, 0, 0], sizes = [8, 8, 4], strides = [1, 1, 1]} : vector<36x8x4xbf16> to vector<8x8x4xbf16>
    %155 = vector.shape_cast %154 : vector<8x8x4xbf16> to vector<64x4xbf16>
    %c1_59 = arith.constant 1 : index
    %c0_60 = arith.constant 0 : index
    %c0_61 = arith.constant 0 : index
    %156 = vector.load %arg10[%c1_59, %c0_60, %c0_61] : memref<9x4x128xbf16, #tpu.memory_space<vmem>>, vector<1x4x128xbf16>
    %157 = vector.shape_cast %156 : vector<1x4x128xbf16> to vector<4x128xbf16>
    %cst_62 = arith.constant dense<0.000000e+00> : vector<64x128xf32>
    %158 = tpu.matmul %155, %157, %cst_62 {dimension_numbers = #tpu.dot_dimension_numbers<[1], [0], [0], [1], [0, 0, 1, 1], [], []>} : vector<64x4xbf16>, vector<4x128xbf16>, vector<64x128xf32> -> vector<64x128xf32>
    %159 = arith.addf %153, %158 : vector<64x128xf32>
    %160 = vector.extract_strided_slice %148 {offsets = [0, 0, 0], sizes = [8, 8, 4], strides = [1, 1, 1]} : vector<36x8x4xbf16> to vector<8x8x4xbf16>
    %161 = vector.shape_cast %160 : vector<8x8x4xbf16> to vector<64x4xbf16>
    %c2_63 = arith.constant 2 : index
    %c0_64 = arith.constant 0 : index
    %c0_65 = arith.constant 0 : index
    %162 = vector.load %arg10[%c2_63, %c0_64, %c0_65] : memref<9x4x128xbf16, #tpu.memory_space<vmem>>, vector<1x4x128xbf16>
    %163 = vector.shape_cast %162 : vector<1x4x128xbf16> to vector<4x128xbf16>
    %cst_66 = arith.constant dense<0.000000e+00> : vector<64x128xf32>
    %164 = tpu.matmul %161, %163, %cst_66 {dimension_numbers = #tpu.dot_dimension_numbers<[1], [0], [0], [1], [0, 0, 1, 1], [], []>} : vector<64x4xbf16>, vector<4x128xbf16>, vector<64x128xf32> -> vector<64x128xf32>
    %165 = arith.addf %159, %164 : vector<64x128xf32>
    %166 = vector.extract_strided_slice %147 {offsets = [18, 0, 0], sizes = [8, 8, 4], strides = [1, 1, 1]} : vector<36x8x4xbf16> to vector<8x8x4xbf16>
    %167 = vector.shape_cast %166 : vector<8x8x4xbf16> to vector<64x4xbf16>
    %c3_67 = arith.constant 3 : index
    %c0_68 = arith.constant 0 : index
    %c0_69 = arith.constant 0 : index
    %168 = vector.load %arg10[%c3_67, %c0_68, %c0_69] : memref<9x4x128xbf16, #tpu.memory_space<vmem>>, vector<1x4x128xbf16>
    %169 = vector.shape_cast %168 : vector<1x4x128xbf16> to vector<4x128xbf16>
    %cst_70 = arith.constant dense<0.000000e+00> : vector<64x128xf32>
    %170 = tpu.matmul %167, %169, %cst_70 {dimension_numbers = #tpu.dot_dimension_numbers<[1], [0], [0], [1], [0, 0, 1, 1], [], []>} : vector<64x4xbf16>, vector<4x128xbf16>, vector<64x128xf32> -> vector<64x128xf32>
    %171 = arith.addf %165, %170 : vector<64x128xf32>
    %172 = vector.extract_strided_slice %147 {offsets = [27, 0, 0], sizes = [8, 8, 4], strides = [1, 1, 1]} : vector<36x8x4xbf16> to vector<8x8x4xbf16>
    %173 = vector.shape_cast %172 : vector<8x8x4xbf16> to vector<64x4xbf16>
    %c4_71 = arith.constant 4 : index
    %c0_72 = arith.constant 0 : index
    %c0_73 = arith.constant 0 : index
    %174 = vector.load %arg10[%c4_71, %c0_72, %c0_73] : memref<9x4x128xbf16, #tpu.memory_space<vmem>>, vector<1x4x128xbf16>
    %175 = vector.shape_cast %174 : vector<1x4x128xbf16> to vector<4x128xbf16>
    %cst_74 = arith.constant dense<0.000000e+00> : vector<64x128xf32>
    %176 = tpu.matmul %173, %175, %cst_74 {dimension_numbers = #tpu.dot_dimension_numbers<[1], [0], [0], [1], [0, 0, 1, 1], [], []>} : vector<64x4xbf16>, vector<4x128xbf16>, vector<64x128xf32> -> vector<64x128xf32>
    %177 = arith.addf %171, %176 : vector<64x128xf32>
    %178 = vector.extract_strided_slice %148 {offsets = [18, 0, 0], sizes = [8, 8, 4], strides = [1, 1, 1]} : vector<36x8x4xbf16> to vector<8x8x4xbf16>
    %179 = vector.shape_cast %178 : vector<8x8x4xbf16> to vector<64x4xbf16>
    %c5_75 = arith.constant 5 : index
    %c0_76 = arith.constant 0 : index
    %c0_77 = arith.constant 0 : index
    %180 = vector.load %arg10[%c5_75, %c0_76, %c0_77] : memref<9x4x128xbf16, #tpu.memory_space<vmem>>, vector<1x4x128xbf16>
    %181 = vector.shape_cast %180 : vector<1x4x128xbf16> to vector<4x128xbf16>
    %cst_78 = arith.constant dense<0.000000e+00> : vector<64x128xf32>
    %182 = tpu.matmul %179, %181, %cst_78 {dimension_numbers = #tpu.dot_dimension_numbers<[1], [0], [0], [1], [0, 0, 1, 1], [], []>} : vector<64x4xbf16>, vector<4x128xbf16>, vector<64x128xf32> -> vector<64x128xf32>
    %183 = arith.addf %177, %182 : vector<64x128xf32>
    %184 = vector.extract_strided_slice %147 {offsets = [1, 0, 0], sizes = [8, 8, 4], strides = [1, 1, 1]} : vector<36x8x4xbf16> to vector<8x8x4xbf16>
    %185 = vector.shape_cast %184 : vector<8x8x4xbf16> to vector<64x4xbf16>
    %c6_79 = arith.constant 6 : index
    %c0_80 = arith.constant 0 : index
    %c0_81 = arith.constant 0 : index
    %186 = vector.load %arg10[%c6_79, %c0_80, %c0_81] : memref<9x4x128xbf16, #tpu.memory_space<vmem>>, vector<1x4x128xbf16>
    %187 = vector.shape_cast %186 : vector<1x4x128xbf16> to vector<4x128xbf16>
    %cst_82 = arith.constant dense<0.000000e+00> : vector<64x128xf32>
    %188 = tpu.matmul %185, %187, %cst_82 {dimension_numbers = #tpu.dot_dimension_numbers<[1], [0], [0], [1], [0, 0, 1, 1], [], []>} : vector<64x4xbf16>, vector<4x128xbf16>, vector<64x128xf32> -> vector<64x128xf32>
    %189 = arith.addf %183, %188 : vector<64x128xf32>
    %190 = vector.extract_strided_slice %147 {offsets = [10, 0, 0], sizes = [8, 8, 4], strides = [1, 1, 1]} : vector<36x8x4xbf16> to vector<8x8x4xbf16>
    %191 = vector.shape_cast %190 : vector<8x8x4xbf16> to vector<64x4xbf16>
    %c7_83 = arith.constant 7 : index
    %c0_84 = arith.constant 0 : index
    %c0_85 = arith.constant 0 : index
    %192 = vector.load %arg10[%c7_83, %c0_84, %c0_85] : memref<9x4x128xbf16, #tpu.memory_space<vmem>>, vector<1x4x128xbf16>
    %193 = vector.shape_cast %192 : vector<1x4x128xbf16> to vector<4x128xbf16>
    %cst_86 = arith.constant dense<0.000000e+00> : vector<64x128xf32>
    %194 = tpu.matmul %191, %193, %cst_86 {dimension_numbers = #tpu.dot_dimension_numbers<[1], [0], [0], [1], [0, 0, 1, 1], [], []>} : vector<64x4xbf16>, vector<4x128xbf16>, vector<64x128xf32> -> vector<64x128xf32>
    %195 = arith.addf %189, %194 : vector<64x128xf32>
    %196 = vector.extract_strided_slice %148 {offsets = [1, 0, 0], sizes = [8, 8, 4], strides = [1, 1, 1]} : vector<36x8x4xbf16> to vector<8x8x4xbf16>
    %197 = vector.shape_cast %196 : vector<8x8x4xbf16> to vector<64x4xbf16>
    %c8_87 = arith.constant 8 : index
    %c0_88 = arith.constant 0 : index
    %c0_89 = arith.constant 0 : index
    %198 = vector.load %arg10[%c8_87, %c0_88, %c0_89] : memref<9x4x128xbf16, #tpu.memory_space<vmem>>, vector<1x4x128xbf16>
    %199 = vector.shape_cast %198 : vector<1x4x128xbf16> to vector<4x128xbf16>
    %cst_90 = arith.constant dense<0.000000e+00> : vector<64x128xf32>
    %200 = tpu.matmul %197, %199, %cst_90 {dimension_numbers = #tpu.dot_dimension_numbers<[1], [0], [0], [1], [0, 0, 1, 1], [], []>} : vector<64x4xbf16>, vector<4x128xbf16>, vector<64x128xf32> -> vector<64x128xf32>
    %201 = arith.addf %195, %200 : vector<64x128xf32>
    %202 = vector.shape_cast %201 : vector<64x128xf32> to vector<8x8x128xf32>
    %c0_91 = arith.constant 0 : index
    %c0_92 = arith.constant 0 : index
    %c0_93 = arith.constant 0 : index
    %c0_94 = arith.constant 0 : index
    %203 = vector.load %arg12[%c0_91, %c0_92, %c0_93, %c0_94] : memref<1x8x8x128xf32, #tpu.memory_space<vmem>>, vector<1x8x8x128xf32>
    %204 = vector.shape_cast %203 : vector<1x8x8x128xf32> to vector<8x8x128xf32>
    %205 = vector.shape_cast %202 : vector<8x8x128xf32> to vector<1x8x8x128xf32>
    tpu.vector_store %arg12[%c0_91, %c0_92, %c0_93, %c0_94], %205 {strides = array<i32>} : memref<1x8x8x128xf32, #tpu.memory_space<vmem>>, vector<1x8x8x128xf32>,
    return
  }
  func.func @transform_0(%arg0: i32, %arg1: i32) -> (i32, i32, i32, i32) {
    %c0_i32 = arith.constant 0 : i32
    %c0_i32_0 = arith.constant 0 : i32
    %c0_i32_1 = arith.constant 0 : i32
    %c0_i32_2 = arith.constant 0 : i32
    return %arg1, %c0_i32, %c0_i32_0, %c0_i32_1 : i32, i32, i32, i32
  }
  func.func @transform_1(%arg0: i32, %arg1: i32) -> (i32, i32) {
    %c0_i32 = arith.constant 0 : i32
    %c0_i32_0 = arith.constant 0 : i32
    %c0_i32_1 = arith.constant 0 : i32
    return %c0_i32, %c0_i32_0 : i32, i32
  }
  func.func @transform_2(%arg0: i32, %arg1: i32) -> (i32, i32) {
    %c0_i32 = arith.constant 0 : i32
    %c0_i32_0 = arith.constant 0 : i32
    %c0_i32_1 = arith.constant 0 : i32
    return %c0_i32, %c0_i32_0 : i32, i32
  }
  func.func @transform_3(%arg0: i32, %arg1: i32) -> (i32, i32, i32) {
    %c0_i32 = arith.constant 0 : i32
    %c0_i32_0 = arith.constant 0 : i32
    %c0_i32_1 = arith.constant 0 : i32
    return %c0_i32, %c0_i32_0, %arg0 : i32, i32, i32
  }
  func.func @transform_4(%arg0: i32, %arg1: i32) -> (i32, i32) {
    %c0_i32 = arith.constant 0 : i32
    %c0_i32_0 = arith.constant 0 : i32
    return %c0_i32, %arg0 : i32, i32
  }
  func.func @transform_5(%arg0: i32, %arg1: i32) -> (i32, i32) {
    %c0_i32 = arith.constant 0 : i32
    %c0_i32_0 = arith.constant 0 : i32
    return %c0_i32, %arg0 : i32, i32
  }
  func.func @transform_6(%arg0: i32, %arg1: i32) -> (i32, i32) {
    %c0_i32 = arith.constant 0 : i32
    %c0_i32_0 = arith.constant 0 : i32
    %c0_i32_1 = arith.constant 0 : i32
    return %c0_i32, %c0_i32_0 : i32, i32
  }
  func.func @transform_7(%arg0: i32, %arg1: i32) -> (i32, i32) {
    %c0_i32 = arith.constant 0 : i32
    %c0_i32_0 = arith.constant 0 : i32
    %c0_i32_1 = arith.constant 0 : i32
    return %c0_i32, %c0_i32_0 : i32, i32
  }
  func.func @transform_8(%arg0: i32, %arg1: i32) -> (i32, i32, i32) {
    %c0_i32 = arith.constant 0 : i32
    %c0_i32_0 = arith.constant 0 : i32
    %c0_i32_1 = arith.constant 0 : i32
    return %c0_i32, %c0_i32_0, %arg0 : i32, i32, i32
  }
  func.func @transform_9(%arg0: i32, %arg1: i32) -> (i32, i32, i32, i32) {
    %c0_i32 = arith.constant 0 : i32
    %c0_i32_0 = arith.constant 0 : i32
    %c0_i32_1 = arith.constant 0 : i32
    return %arg1, %c0_i32, %c0_i32_0, %arg0 : i32, i32, i32, i32
  }
  func.func @transform_10(%arg0: i32, %arg1: i32) -> (i32, i32, i32, i32) {
    %c0_i32 = arith.constant 0 : i32
    %c0_i32_0 = arith.constant 0 : i32
    %c0_i32_1 = arith.constant 0 : i32
    return %arg1, %c0_i32, %c0_i32_0, %arg0 : i32, i32, i32, i32
  }
}

module attributes {stable_mosaic.version = 11 : i64} {
  func.func @kernel(%arg0: i32, %arg1: i32, %arg2: memref<1x10x10x128xbf16, #tpu.memory_space<vmem>>, %arg3: memref<3x384x128xbf16, #tpu.memory_space<vmem>>, %arg4: memref<1x8x8x128xf32, #tpu.memory_space<vmem>>, %arg5: memref<1x8x8x128xf32, #tpu.memory_space<vmem>>) attributes {dimension_semantics = [#tpu.dimension_semantics<parallel>, #tpu.dimension_semantics<parallel>], iteration_bounds = array<i64: 1, 2>, scalar_prefetch = 0 : i64, scratch_operands = 0 : i64, tpu.core_type = #tpu.core_type<tc>, window_params = [{transform_indices = @transform_0, window_bounds = array<i64: 1, 10, 10, 128>}, {transform_indices = @transform_1, window_bounds = array<i64: 3, 384, 128>}, {transform_indices = @transform_2, window_bounds = array<i64: 1, 8, 8, 128>}, {transform_indices = @transform_3, window_bounds = array<i64: 1, 8, 8, 128>}]} {
    %c0 = arith.constant 0 : index
    %c0_0 = arith.constant 0 : index
    %c0_1 = arith.constant 0 : index
    %c0_2 = arith.constant 0 : index
    %0 = vector.load %arg2[%c0, %c0_0, %c0_1, %c0_2] : memref<1x10x10x128xbf16, #tpu.memory_space<vmem>>, vector<1x10x10x128xbf16>
    %1 = vector.shape_cast %0 : vector<1x10x10x128xbf16> to vector<10x10x128xbf16>
    %2 = vector.extract_strided_slice %1 {offsets = [0, 0, 0], sizes = [10, 8, 128], strides = [1, 1, 1]} : vector<10x10x128xbf16> to vector<10x8x128xbf16>
    %3 = vector.extract_strided_slice %1 {offsets = [0, 1, 0], sizes = [10, 8, 128], strides = [1, 1, 1]} : vector<10x10x128xbf16> to vector<10x8x128xbf16>
    %4 = vector.extract_strided_slice %1 {offsets = [0, 2, 0], sizes = [10, 8, 128], strides = [1, 1, 1]} : vector<10x10x128xbf16> to vector<10x8x128xbf16>
    %5 = vector.extract_strided_slice %2 {offsets = [0, 0, 0], sizes = [8, 8, 128], strides = [1, 1, 1]} : vector<10x8x128xbf16> to vector<8x8x128xbf16>
    %6 = vector.extract_strided_slice %2 {offsets = [1, 0, 0], sizes = [8, 8, 128], strides = [1, 1, 1]} : vector<10x8x128xbf16> to vector<8x8x128xbf16>
    %7 = vector.extract_strided_slice %2 {offsets = [2, 0, 0], sizes = [8, 8, 128], strides = [1, 1, 1]} : vector<10x8x128xbf16> to vector<8x8x128xbf16>
    %8 = tpu.concatenate %5, %6, %7 in 2 : vector<8x8x128xbf16>, vector<8x8x128xbf16>, vector<8x8x128xbf16> -> vector<8x8x384xbf16>
    %9 = vector.shape_cast %8 : vector<8x8x384xbf16> to vector<64x384xbf16>
    %c0_3 = arith.constant 0 : index
    %c0_4 = arith.constant 0 : index
    %c0_5 = arith.constant 0 : index
    %10 = vector.load %arg3[%c0_3, %c0_4, %c0_5] : memref<3x384x128xbf16, #tpu.memory_space<vmem>>, vector<1x384x128xbf16>
    %11 = vector.shape_cast %10 : vector<1x384x128xbf16> to vector<384x128xbf16>
    %cst = arith.constant dense<0.000000e+00> : vector<64x128xf32>
    %12 = tpu.matmul %9, %11, %cst {dimension_numbers = #tpu.dot_dimension_numbers<[1], [0], [0], [1], [0, 0, 1, 1], [], []>} : vector<64x384xbf16>, vector<384x128xbf16>, vector<64x128xf32> -> vector<64x128xf32>
    %13 = vector.extract_strided_slice %3 {offsets = [0, 0, 0], sizes = [8, 8, 128], strides = [1, 1, 1]} : vector<10x8x128xbf16> to vector<8x8x128xbf16>
    %14 = vector.extract_strided_slice %3 {offsets = [1, 0, 0], sizes = [8, 8, 128], strides = [1, 1, 1]} : vector<10x8x128xbf16> to vector<8x8x128xbf16>
    %15 = vector.extract_strided_slice %3 {offsets = [2, 0, 0], sizes = [8, 8, 128], strides = [1, 1, 1]} : vector<10x8x128xbf16> to vector<8x8x128xbf16>
    %16 = tpu.concatenate %13, %14, %15 in 2 : vector<8x8x128xbf16>, vector<8x8x128xbf16>, vector<8x8x128xbf16> -> vector<8x8x384xbf16>
    %17 = vector.shape_cast %16 : vector<8x8x384xbf16> to vector<64x384xbf16>
    %c1 = arith.constant 1 : index
    %c0_6 = arith.constant 0 : index
    %c0_7 = arith.constant 0 : index
    %18 = vector.load %arg3[%c1, %c0_6, %c0_7] : memref<3x384x128xbf16, #tpu.memory_space<vmem>>, vector<1x384x128xbf16>
    %19 = vector.shape_cast %18 : vector<1x384x128xbf16> to vector<384x128xbf16>
    %cst_8 = arith.constant dense<0.000000e+00> : vector<64x128xf32>
    %20 = tpu.matmul %17, %19, %cst_8 {dimension_numbers = #tpu.dot_dimension_numbers<[1], [0], [0], [1], [0, 0, 1, 1], [], []>} : vector<64x384xbf16>, vector<384x128xbf16>, vector<64x128xf32> -> vector<64x128xf32>
    %21 = arith.addf %12, %20 : vector<64x128xf32>
    %22 = vector.extract_strided_slice %4 {offsets = [0, 0, 0], sizes = [8, 8, 128], strides = [1, 1, 1]} : vector<10x8x128xbf16> to vector<8x8x128xbf16>
    %23 = vector.extract_strided_slice %4 {offsets = [1, 0, 0], sizes = [8, 8, 128], strides = [1, 1, 1]} : vector<10x8x128xbf16> to vector<8x8x128xbf16>
    %24 = vector.extract_strided_slice %4 {offsets = [2, 0, 0], sizes = [8, 8, 128], strides = [1, 1, 1]} : vector<10x8x128xbf16> to vector<8x8x128xbf16>
    %25 = tpu.concatenate %22, %23, %24 in 2 : vector<8x8x128xbf16>, vector<8x8x128xbf16>, vector<8x8x128xbf16> -> vector<8x8x384xbf16>
    %26 = vector.shape_cast %25 : vector<8x8x384xbf16> to vector<64x384xbf16>
    %c2 = arith.constant 2 : index
    %c0_9 = arith.constant 0 : index
    %c0_10 = arith.constant 0 : index
    %27 = vector.load %arg3[%c2, %c0_9, %c0_10] : memref<3x384x128xbf16, #tpu.memory_space<vmem>>, vector<1x384x128xbf16>
    %28 = vector.shape_cast %27 : vector<1x384x128xbf16> to vector<384x128xbf16>
    %cst_11 = arith.constant dense<0.000000e+00> : vector<64x128xf32>
    %29 = tpu.matmul %26, %28, %cst_11 {dimension_numbers = #tpu.dot_dimension_numbers<[1], [0], [0], [1], [0, 0, 1, 1], [], []>} : vector<64x384xbf16>, vector<384x128xbf16>, vector<64x128xf32> -> vector<64x128xf32>
    %30 = arith.addf %21, %29 : vector<64x128xf32>
    %c0_12 = arith.constant 0 : index
    %c0_13 = arith.constant 0 : index
    %c0_14 = arith.constant 0 : index
    %c0_15 = arith.constant 0 : index
    %31 = vector.load %arg4[%c0_12, %c0_13, %c0_14, %c0_15] : memref<1x8x8x128xf32, #tpu.memory_space<vmem>>, vector<1x8x8x128xf32>
    %32 = vector.shape_cast %31 : vector<1x8x8x128xf32> to vector<8x8x128xf32>
    %33 = vector.shape_cast %32 : vector<8x8x128xf32> to vector<64x128xf32>
    %34 = arith.addf %30, %33 : vector<64x128xf32>
    %35 = vector.shape_cast %34 : vector<64x128xf32> to vector<8x8x128xf32>
    %c0_16 = arith.constant 0 : index
    %c0_17 = arith.constant 0 : index
    %c0_18 = arith.constant 0 : index
    %c0_19 = arith.constant 0 : index
    %36 = vector.load %arg5[%c0_16, %c0_17, %c0_18, %c0_19] : memref<1x8x8x128xf32, #tpu.memory_space<vmem>>, vector<1x8x8x128xf32>
    %37 = vector.shape_cast %36 : vector<1x8x8x128xf32> to vector<8x8x128xf32>
    %38 = vector.shape_cast %35 : vector<8x8x128xf32> to vector<1x8x8x128xf32>
    tpu.vector_store %arg5[%c0_16, %c0_17, %c0_18, %c0_19], %38 {strides = array<i32>} : memref<1x8x8x128xf32, #tpu.memory_space<vmem>>, vector<1x8x8x128xf32>,
    return
  }
  func.func @transform_0(%arg0: i32, %arg1: i32) -> (i32, i32, i32, i32) {
    %c0_i32 = arith.constant 0 : i32
    %c0_i32_0 = arith.constant 0 : i32
    %c0_i32_1 = arith.constant 0 : i32
    %c0_i32_2 = arith.constant 0 : i32
    return %arg1, %c0_i32, %c0_i32_0, %c0_i32_1 : i32, i32, i32, i32
  }
  func.func @transform_1(%arg0: i32, %arg1: i32) -> (i32, i32, i32) {
    %c0_i32 = arith.constant 0 : i32
    %c0_i32_0 = arith.constant 0 : i32
    %c0_i32_1 = arith.constant 0 : i32
    return %c0_i32, %c0_i32_0, %arg0 : i32, i32, i32
  }
  func.func @transform_2(%arg0: i32, %arg1: i32) -> (i32, i32, i32, i32) {
    %c0_i32 = arith.constant 0 : i32
    %c0_i32_0 = arith.constant 0 : i32
    %c0_i32_1 = arith.constant 0 : i32
    return %arg1, %c0_i32, %c0_i32_0, %arg0 : i32, i32, i32, i32
  }
  func.func @transform_3(%arg0: i32, %arg1: i32) -> (i32, i32, i32, i32) {
    %c0_i32 = arith.constant 0 : i32
    %c0_i32_0 = arith.constant 0 : i32
    %c0_i32_1 = arith.constant 0 : i32
    return %arg1, %c0_i32, %c0_i32_0, %arg0 : i32, i32, i32, i32
  }
}

</mosaic_0001>

<llo_original>
// kernel: basic_block_forward.3
$region0: #{basic_block_forward.3}
  #allocation0 [shape = 'u32[]', space=smem, size = 0x4, offset = 0x4, fixed_abs, tag = 'smem constant byte address 0x4 - core index']
  #allocation1 [shape = 'u32[72,128]{1,0:T(1,128)}', space=vmem, size = 0x9000, scoped, tag = 'internal scratch']
  %s0 = inlined_call_operand.vmem [shape: bf16[2,10,10,128], index: 0, kind: input, shape index: {}]
  %s1 = inlined_call_operand.vmem [shape: bf16[3,384,128], index: 1, kind: input, shape index: {}]
  %s2 = inlined_call_operand.vmem [shape: f32[2,8,8,128], index: 2, kind: input, shape index: {}]
  %s3 = inlined_call_operand.vmem [shape: f32[2,8,8,128], index: 3, kind: output, shape index: {}]
  %s4 = sld [smem:[#allocation0]]
  $region45: #{basic_block_forward.3} parent=0
    _
  %s6 = ssub.s32 1, %s4
  %s7 = scalar_select 0, %s6, %s4
  loop: start=0, step=1, limit=4
  $region2: #{basic_block_forward.3} parent=0 // loop_pre_header
    _
  $region3: #{basic_block_forward.3} parent=0 // loop_header
    %s9 = sphi 0, %s13
    %p10 = scmp.ge.s32.totalorder %s9, 4
    %s16 = sphi 0, %s28
    %s17 = sphi 0, %s24
    %s18 = sphi 0, %s16
    %s19 = sphi 0, %s17
    %s20 = sphi 0, %s18
    %s21 = sphi 0, %s19
    %s31 = sphi 0, %s33
    %s34 = sphi 0, %s31
    %s35 = sphi 0, %s34
    %s51 = sphi 0, %s35
    %s57 = sphi 0, %s59
    %s60 = sphi 0, %s57
    %s61 = sphi 0, %s60
    %s77 = sphi 0, %s61
    %s85 = sphi 0, %s87
    %s88 = sphi 0, %s85
    %s89 = sphi 0, %s88
    %s105 = sphi 0, %s89
    %s113 = sphi 0, %s115
    %s116 = sphi 0, %s113
    %s117 = sphi 0, %s116
    %s133 = sphi 0, %s117
  $region4: #{basic_block_forward.3} parent=0 // loop_header_branch
    %12 = sbr.rel (%p10) target = $region8
  $region5: #{basic_block_forward.3} parent=0 // loop_body
    %s14 = ssub.s32 %s9, 1
    %s15 = ssub.s32 %s9, 2
    %s22 = sadd.s32 1, %s17
    %p23 = scmp.ge.s32.totalorder %s22, 2
    %s24 = scalar_select %p23, 0, %s22
    %s25 = sadd.s32 1, %s16
    %s26 = scalar_select %p23, %s25, %s16
    %p27 = scmp.ge.s32.totalorder %s26, 1
    %s28 = scalar_select %p27, 0, %s26
    %s29 = ssub.s32 %s17, %s24
    %p30 = scmp.eq.s32.totalorder %s29, 0
    %s32 = sadd.s32 %s31, 1
    %s33 = scalar_select %p30, %s31, %s32
    %p36 = pneg %p30
    %p37 = scmp.eq.s32.totalorder %s9, 1
    %p38 = por %p36, %p37
    %p39 = scmp.ne.s32.totalorder %s31, %s34
    %p40 = scmp.eq.s32.totalorder %s9, 0
    %p41 = por %p39, %p40
    %p42 = scmp.ne.s32.totalorder %s31, %s34
    %p43 = scmp.eq.s32.totalorder %s14, 1
    %p44 = por %p42, %p43
    %p45 = scmp.ne.s32.totalorder %s34, %s35
    %p46 = scmp.eq.s32.totalorder %s14, 0
    %p47 = por %p45, %p46
    %p48 = scmp.ne.s32.totalorder %s34, %s35
    %p49 = scmp.eq.s32.totalorder %s15, 1
    %p50 = por %p48, %p49
    %p52 = scmp.ne.s32.totalorder %s35, %s51
    %p53 = scmp.eq.s32.totalorder %s15, 0
    %p54 = por %p52, %p53
    %s55 = ssub.s32 %s16, %s28
    %p56 = scmp.eq.s32.totalorder %s55, 0
    %s58 = sadd.s32 %s57, 1
    %s59 = scalar_select %p56, %s57, %s58
    %p62 = pneg %p56
    %p63 = scmp.eq.s32.totalorder %s9, 1
    %p64 = por %p62, %p63
    %p65 = scmp.ne.s32.totalorder %s57, %s60
    %p66 = scmp.eq.s32.totalorder %s9, 0
    %p67 = por %p65, %p66
    %p68 = scmp.ne.s32.totalorder %s57, %s60
    %p69 = scmp.eq.s32.totalorder %s14, 1
    %p70 = por %p68, %p69
    %p71 = scmp.ne.s32.totalorder %s60, %s61
    %p72 = scmp.eq.s32.totalorder %s14, 0
    %p73 = por %p71, %p72
    %p74 = scmp.ne.s32.totalorder %s60, %s61
    %p75 = scmp.eq.s32.totalorder %s15, 1
    %p76 = por %p74, %p75
    %p78 = scmp.ne.s32.totalorder %s61, %s77
    %p79 = scmp.eq.s32.totalorder %s15, 0
    %p80 = por %p78, %p79
    %s81 = ssub.s32 %s17, %s24
    %s82 = ssub.s32 %s16, %s28
    %s83 = sor.u32 %s81, %s82
    %p84 = scmp.eq.s32.totalorder %s83, 0
    %s86 = sadd.s32 %s85, 1
    %s87 = scalar_select %p84, %s85, %s86
    %p90 = pneg %p84
    %p91 = scmp.eq.s32.totalorder %s9, 1
    %p92 = por %p90, %p91
    %p93 = scmp.ne.s32.totalorder %s85, %s88
    %p94 = scmp.eq.s32.totalorder %s9, 0
    %p95 = por %p93, %p94
    %p96 = scmp.ne.s32.totalorder %s85, %s88
    %p97 = scmp.eq.s32.totalorder %s14, 1
    %p98 = por %p96, %p97
    %p99 = scmp.ne.s32.totalorder %s88, %s89
    %p100 = scmp.eq.s32.totalorder %s14, 0
    %p101 = por %p99, %p100
    %p102 = scmp.ne.s32.totalorder %s88, %s89
    %p103 = scmp.eq.s32.totalorder %s15, 1
    %p104 = por %p102, %p103
    %p106 = scmp.ne.s32.totalorder %s89, %s105
    %p107 = scmp.eq.s32.totalorder %s15, 0
    %p108 = por %p106, %p107
    %s109 = ssub.s32 %s17, %s24
    %s110 = ssub.s32 %s16, %s28
    %s111 = sor.u32 %s109, %s110
    %p112 = scmp.eq.s32.totalorder %s111, 0
    %s114 = sadd.s32 %s113, 1
    %s115 = scalar_select %p112, %s113, %s114
    %p118 = pneg %p112
    %p119 = scmp.eq.s32.totalorder %s9, 1
    %p120 = por %p118, %p119
    %p121 = scmp.ne.s32.totalorder %s113, %s116
    %p122 = scmp.eq.s32.totalorder %s9, 0
    %p123 = por %p121, %p122
    %p124 = scmp.ne.s32.totalorder %s113, %s116
    %p125 = scmp.eq.s32.totalorder %s14, 1
    %p126 = por %p124, %p125
    %p127 = scmp.ne.s32.totalorder %s116, %s117
    %p128 = scmp.eq.s32.totalorder %s14, 0
    %p129 = por %p127, %p128
    %p130 = scmp.ne.s32.totalorder %s116, %s117
    %p131 = scmp.eq.s32.totalorder %s15, 1
    %p132 = por %p130, %p131
    %p134 = scmp.ne.s32.totalorder %s117, %s133
    %p135 = scmp.eq.s32.totalorder %s15, 0
    %p136 = por %p134, %p135
    %p137 = scmp.le.s32.totalorder 1, %s9
    %p138 = scmp.lt.s32.totalorder %s9, 3
    %p139 = pnand %p137, %p138
    %p140 = pneg %p139
    // Predicated region
    $region9: #{basic_block_forward.3} parent=5 // pred_check
      _
    $region10: #{basic_block_forward.3} parent=5 // pred_check_branch
      %142 = sbr.rel (%p139) target = $region12
    $region11: #{basic_block_forward.3} parent=5 // pred_region
      %s143 = ssub.s32 %s9, 1
      // Predicated region
      $region13: #{basic_block_forward.3} parent=11 // pred_check
        %p144 = pneg %p73
      $region14: #{basic_block_forward.3} parent=11 // pred_check_branch
        %146 = sbr.rel (%p144) target = $region16
      $region15: #{basic_block_forward.3} parent=11 // pred_region
        %p147 = scmp.lt.s32.totalorder %s18, 0
        %s148 = scalar_select %p147, %s18, 0
        %s149 = smul.addr %s148, 4
        %s150 = scalar_lea.vmem %s1, %s149
      $region16: #{basic_block_forward.3} parent=11 // pred_fallthru
        _
    $region12: #{basic_block_forward.3} parent=5 // pred_fallthru
      _
    %p151 = scmp.lt.s32.totalorder %s9, 2
    // Predicated region
    $region17: #{basic_block_forward.3} parent=5 // pred_check
      %p152 = pneg %p151
    $region18: #{basic_block_forward.3} parent=5 // pred_check_branch
      %154 = sbr.rel (%p152) target = $region20
    $region19: #{basic_block_forward.3} parent=5 // pred_region
      // Predicated region
      $region21: #{basic_block_forward.3} parent=19 // pred_check
        %p155 = pneg %p41
      $region22: #{basic_block_forward.3} parent=19 // pred_check_branch
        %157 = sbr.rel (%p155) target = $region24
      $region23: #{basic_block_forward.3} parent=19 // pred_region
        %p158 = scmp.lt.s32.totalorder %s17, 1
        %s159 = scalar_select %p158, %s17, 1
        %s160 = smul.addr %s159, 20
        %s161 = smul.addr %s160, 4
        %s162 = scalar_lea.vmem %s0, %s161
      $region24: #{basic_block_forward.3} parent=19 // pred_fallthru
        _
      // Predicated region
      $region25: #{basic_block_forward.3} parent=19 // pred_check
        %p163 = pneg %p95
      $region26: #{basic_block_forward.3} parent=19 // pred_check_branch
        %165 = sbr.rel (%p163) target = $region28
      $region27: #{basic_block_forward.3} parent=19 // pred_region
        %p166 = scmp.lt.s32.totalorder %s17, 1
        %s167 = scalar_select %p166, %s17, 1
        %p168 = scmp.lt.s32.totalorder %s16, 0
        %s169 = scalar_select %p168, %s16, 0
        %s170 = smul.addr %s167, 8
        %s171 = sadd.s32 %s169, %s170
        %s172 = smul.addr %s171, 8
        %s173 = scalar_lea.vmem %s2, %s172
      $region28: #{basic_block_forward.3} parent=19 // pred_fallthru
        _
    $region20: #{basic_block_forward.3} parent=5 // pred_fallthru
      _
    %p174 = scmp.le.s32.totalorder 1, %s9
    %p175 = scmp.lt.s32.totalorder %s9, 3
    %p176 = pnand %p174, %p175
    %p177 = pneg %p176
    // Predicated region
    $region29: #{basic_block_forward.3} parent=5 // pred_check
      _
    $region30: #{basic_block_forward.3} parent=5 // pred_check_branch
      %179 = sbr.rel (%p176) target = $region32
    $region31: #{basic_block_forward.3} parent=5 // pred_region
      %s180 = ssub.s32 %s9, 1
      %p181 = scmp.lt.s32.totalorder %s19, 1
      %s182 = scalar_select %p181, %s19, 1
      %s183 = smul.addr %s182, 20
      %s184 = smul.addr %s183, 4
      %s185 = scalar_lea.vmem %s0, %s184
      %p186 = pneg %p47
      %p187 = pneg %p44
      %p188 = scmp.lt.s32.totalorder %s18, 0
      %s189 = scalar_select %p188, %s18, 0
      %s190 = smul.addr %s189, 4
      %s191 = scalar_lea.vmem %s1, %s190
      %p192 = pneg %p73
      %p193 = pneg %p70
      %p194 = scmp.lt.s32.totalorder %s19, 1
      %s195 = scalar_select %p194, %s19, 1
      %p196 = scmp.lt.s32.totalorder %s18, 0
      %s197 = scalar_select %p196, %s18, 0
      %s198 = smul.addr %s195, 8
      %s199 = sadd.s32 %s197, %s198
      %s200 = smul.addr %s199, 8
      %s201 = scalar_lea.vmem %s2, %s200
      %p202 = pneg %p101
      %p203 = pneg %p98
      %p204 = pneg %p129
      %p205 = pneg %p126
      %p206 = scmp.lt.s32.totalorder %s19, 1
      %s207 = scalar_select %p206, %s19, 1
      %p208 = scmp.lt.s32.totalorder %s18, 0
      %s209 = scalar_select %p208, %s18, 0
      %s210 = smul.addr %s207, 8
      %s211 = sadd.s32 %s209, %s210
      %s212 = smul.addr %s211, 8
      %s213 = scalar_lea.vmem %s3, %s212
      %p214 = scmp.lt.s32.totalorder %s19, 1
      %s215 = scalar_select %p214, %s19, 1
      %s216 = smul.addr %s215, 20
      %s217 = smul.addr %s216, 4
      %s218 = scalar_lea.vmem %s0, %s217
      %p219 = scmp.lt.s32.totalorder %s18, 0
      %s220 = scalar_select %p219, %s18, 0
      %s221 = smul.addr %s220, 4
      %s222 = scalar_lea.vmem %s1, %s221
      %p223 = scmp.lt.s32.totalorder %s19, 1
      %s224 = scalar_select %p223, %s19, 1
      %p225 = scmp.lt.s32.totalorder %s18, 0
      %s226 = scalar_select %p225, %s18, 0
      %s227 = smul.addr %s224, 8
      %s228 = sadd.s32 %s226, %s227
      %s229 = smul.addr %s228, 8
      %s230 = scalar_lea.vmem %s2, %s229
      %p231 = scmp.lt.s32.totalorder %s19, 1
      %s232 = scalar_select %p231, %s19, 1
      %p233 = scmp.lt.s32.totalorder %s18, 0
      %s234 = scalar_select %p233, %s18, 0
      %s235 = smul.addr %s232, 8
      %s236 = sadd.s32 %s234, %s235
      %s237 = smul.addr %s236, 8
      %s238 = scalar_lea.vmem %s3, %s237
      %v239 = vld [vmem:[%s218] sm:$0xf]
      %v240 = vld [vmem:[%s218 + $0x4] sm:$0x1]
      %v241 = vld [vmem:[%s218 + $0x8] sm:$0xf]
      %v242 = vld [vmem:[%s218 + $0xc] sm:$0x1]
      %v243 = vld [vmem:[%s218 + $0x10] sm:$0xf]
      %v244 = vld [vmem:[%s218 + $0x14] sm:$0x1]
      %v245 = vld [vmem:[%s218 + $0x18] sm:$0xf]
      %v246 = vld [vmem:[%s218 + $0x1c] sm:$0x1]
      %v247 = vld [vmem:[%s218 + $0x20] sm:$0xf]
      %v248 = vld [vmem:[%s218 + $0x24] sm:$0x1]
      %v249 = vld [vmem:[%s218 + $0x28] sm:$0xf]
      %v250 = vld [vmem:[%s218 + $0x2c] sm:$0x1]
      %v251 = vld [vmem:[%s218 + $0x30] sm:$0xf]
      %v252 = vld [vmem:[%s218 + $0x34] sm:$0x1]
      %v253 = vld [vmem:[%s218 + $0x38] sm:$0xf]
      %v254 = vld [vmem:[%s218 + $0x3c] sm:$0x1]
      %v255 = vld [vmem:[%s218 + $0x40] sm:$0xf]
      %v256 = vld [vmem:[%s218 + $0x44] sm:$0x1]
      %v257 = vld [vmem:[%s218 + $0x48] sm:$0xf]
      %v258 = vld [vmem:[%s218 + $0x4c] sm:$0x1]
      %v269 = vunpack.c.l.b16 %v239
      %v270 = vunpack.c.l.b16 %v241
      %v271 = vunpack.c.l.b16 %v243
      %v272 = vunpack.c.l.b16 %v245
      %v273 = vunpack.c.l.b16 %v247
      %v274 = vunpack.c.l.b16 %v249
      %v275 = vunpack.c.l.b16 %v251
      %v276 = vunpack.c.l.b16 %v253
      %v277 = vunpack.c.l.b16 %v255
      %v278 = vunpack.c.l.b16 %v257
      %v279 = vld [vmem:[%s222] sm:$0xf]
      %v280 = vld [vmem:[%s222 + $0x4] sm:$0xf]
      %v281 = vld [vmem:[%s222 + $0x8] sm:$0xf]
      %v282 = vld [vmem:[%s222 + $0xc] sm:$0xf]
      %v283 = vld [vmem:[%s222 + $0x10] sm:$0xf]
      %v284 = vld [vmem:[%s222 + $0x14] sm:$0xf]
      %v285 = vld [vmem:[%s222 + $0x18] sm:$0xf]
      %v286 = vld [vmem:[%s222 + $0x1c] sm:$0xf]
      %v287 = vld [vmem:[%s222 + $0x20] sm:$0xf]
      %v288 = vld [vmem:[%s222 + $0x24] sm:$0xf]
      %v289 = vld [vmem:[%s222 + $0x28] sm:$0xf]
      %v290 = vld [vmem:[%s222 + $0x2c] sm:$0xf]
      %v291 = vld [vmem:[%s222 + $0x30] sm:$0xf]
      %v292 = vld [vmem:[%s222 + $0x34] sm:$0xf]
      %v293 = vld [vmem:[%s222 + $0x38] sm:$0xf]
      %v294 = vld [vmem:[%s222 + $0x3c] sm:$0xf]
      %v295 = vld [vmem:[%s222 + $0x40] sm:$0xf]
      %v296 = vld [vmem:[%s222 + $0x44] sm:$0xf]
      %v297 = vld [vmem:[%s222 + $0x48] sm:$0xf]
      %v298 = vld [vmem:[%s222 + $0x4c] sm:$0xf]
      %v299 = vld [vmem:[%s222 + $0x50] sm:$0xf]
      %v300 = vld [vmem:[%s222 + $0x54] sm:$0xf]
      %v301 = vld [vmem:[%s222 + $0x58] sm:$0xf]
      %v302 = vld [vmem:[%s222 + $0x5c] sm:$0xf]
      %v303 = vld [vmem:[%s222 + $0x60] sm:$0xf]
      %v304 = vld [vmem:[%s222 + $0x64] sm:$0xf]
      %v305 = vld [vmem:[%s222 + $0x68] sm:$0xf]
      %v306 = vld [vmem:[%s222 + $0x6c] sm:$0xf]
      %v307 = vld [vmem:[%s222 + $0x70] sm:$0xf]
      %v308 = vld [vmem:[%s222 + $0x74] sm:$0xf]
      %v309 = vld [vmem:[%s222 + $0x78] sm:$0xf]
      %v310 = vld [vmem:[%s222 + $0x7c] sm:$0xf]
      %v311 = vld [vmem:[%s222 + $0x80] sm:$0xf]
      %v312 = vld [vmem:[%s222 + $0x84] sm:$0xf]
      %v313 = vld [vmem:[%s222 + $0x88] sm:$0xf]
      %v314 = vld [vmem:[%s222 + $0x8c] sm:$0xf]
      %v315 = vld [vmem:[%s222 + $0x90] sm:$0xf]
      %v316 = vld [vmem:[%s222 + $0x94] sm:$0xf]
      %v317 = vld [vmem:[%s222 + $0x98] sm:$0xf]
      %v318 = vld [vmem:[%s222 + $0x9c] sm:$0xf]
      %v319 = vld [vmem:[%s222 + $0xa0] sm:$0xf]
      %v320 = vld [vmem:[%s222 + $0xa4] sm:$0xf]
      %v321 = vld [vmem:[%s222 + $0xa8] sm:$0xf]
      %v322 = vld [vmem:[%s222 + $0xac] sm:$0xf]
      %v323 = vld [vmem:[%s222 + $0xb0] sm:$0xf]
      %v324 = vld [vmem:[%s222 + $0xb4] sm:$0xf]
      %v325 = vld [vmem:[%s222 + $0xb8] sm:$0xf]
      %v326 = vld [vmem:[%s222 + $0xbc] sm:$0xf]
      %v335 = vunpack.c.l.b16 %v240
      %v336 = vunpack.c.l.b16 %v242
      %v337 = vunpack.c.l.b16 %v244
      %v338 = vunpack.c.l.b16 %v246
      %v339 = vunpack.c.l.b16 %v248
      %v340 = vunpack.c.l.b16 %v250
      %v341 = vunpack.c.l.b16 %v252
      %v342 = vunpack.c.l.b16 %v254
      %v344 = vunpack.c.l.b16 %v256
      %v346 = vunpack.c.l.b16 %v258
      %v347 = vpack.c.b16 %v270, %v269
      %v348 = vpack.c.b16 %v271, %v271
      %v349 = vpack.c.b16 %v336, %v335
      %v350 = vpack.c.b16 %v337, %v337
      %v351 = vpack.c.b16 %v271, %v270
      %v352 = vpack.c.b16 %v272, %v272
      %v353 = vpack.c.b16 %v337, %v336
      %v354 = vpack.c.b16 %v338, %v338
      %v355 = vpack.c.b16 %v272, %v271
      %v356 = vpack.c.b16 %v273, %v273
      %v357 = vpack.c.b16 %v338, %v337
      %v358 = vpack.c.b16 %v339, %v339
      %v359 = vpack.c.b16 %v273, %v272
      %v360 = vpack.c.b16 %v274, %v274
      %v361 = vpack.c.b16 %v339, %v338
      %v362 = vpack.c.b16 %v340, %v340
      %v363 = vpack.c.b16 %v274, %v273
      %v364 = vpack.c.b16 %v275, %v275
      %v365 = vpack.c.b16 %v340, %v339
      %v366 = vpack.c.b16 %v341, %v341
      %v367 = vpack.c.b16 %v275, %v274
      %v368 = vpack.c.b16 %v276, %v276
      %v369 = vpack.c.b16 %v341, %v340
      %v370 = vpack.c.b16 %v342, %v342
      %v371 = vpack.c.b16 %v276, %v275
      %v372 = vpack.c.b16 %v277, %v277
      %v373 = vpack.c.b16 %v342, %v341
      %v374 = vpack.c.b16 %v344, %v344
      %v375 = vpack.c.b16 %v277, %v276
      %v376 = vpack.c.b16 %v278, %v278
      %v377 = vpack.c.b16 %v344, %v342
      %v378 = vpack.c.b16 %v346, %v346
      %vm379 = vsmask.f32 3328
      %vm380 = vsmask.f32 7440
      %vm381 = vmor %vm379, %vm380
      %v383 = vshrl.u32 %v347, 16
      %v385 = vrot.slane %v383, 4
      %v386 = vshll.u32 %v347, 16
      %v388 = vrot.slane %v386, 5
      %v389 = vor.u32 %v385, %v388
      %v390 = vrot.slane %v389, 4
      %v392 = vshll.u32 %v349, 16
      %v394 = vrot.slane %v392, 5
      %v395 = vsel %vm381, %v390, %v394
      %v397 = vshrl.u32 %v348, 16
      %v399 = vrot.slane %v397, 4
      %v400 = vshll.u32 %v348, 16
      %v402 = vrot.slane %v400, 5
      %v403 = vor.u32 %v399, %v402
      %v404 = vrot.slane %v403, 4
      %v406 = vshll.u32 %v350, 16
      %v408 = vrot.slane %v406, 5
      %v409 = vsel %vm381, %v404, %v408
      %v411 = vshrl.u32 %v351, 16
      %v413 = vrot.slane %v411, 4
      %v414 = vshll.u32 %v351, 16
      %v416 = vrot.slane %v414, 5
      %v417 = vor.u32 %v413, %v416
      %v418 = vrot.slane %v417, 4
      %v420 = vshll.u32 %v353, 16
      %v422 = vrot.slane %v420, 5
      %v423 = vsel %vm381, %v418, %v422
      %v425 = vshrl.u32 %v352, 16
      %v427 = vrot.slane %v425, 4
      %v428 = vshll.u32 %v352, 16
      %v430 = vrot.slane %v428, 5
      %v431 = vor.u32 %v427, %v430
      %v432 = vrot.slane %v431, 4
      %v434 = vshll.u32 %v354, 16
      %v436 = vrot.slane %v434, 5
      %v437 = vsel %vm381, %v432, %v436
      %v439 = vshrl.u32 %v355, 16
      %v441 = vrot.slane %v439, 4
      %v442 = vshll.u32 %v355, 16
      %v444 = vrot.slane %v442, 5
      %v445 = vor.u32 %v441, %v444
      %v446 = vrot.slane %v445, 4
      %v448 = vshll.u32 %v357, 16
      %v450 = vrot.slane %v448, 5
      %v451 = vsel %vm381, %v446, %v450
      %v453 = vshrl.u32 %v356, 16
      %v455 = vrot.slane %v453, 4
      %v456 = vshll.u32 %v356, 16
      %v458 = vrot.slane %v456, 5
      %v459 = vor.u32 %v455, %v458
      %v460 = vrot.slane %v459, 4
      %v462 = vshll.u32 %v358, 16
      %v464 = vrot.slane %v462, 5
      %v465 = vsel %vm381, %v460, %v464
      %v467 = vshrl.u32 %v359, 16
      %v469 = vrot.slane %v467, 4
      %v470 = vshll.u32 %v359, 16
      %v472 = vrot.slane %v470, 5
      %v473 = vor.u32 %v469, %v472
      %v474 = vrot.slane %v473, 4
      %v476 = vshll.u32 %v361, 16
      %v478 = vrot.slane %v476, 5
      %v479 = vsel %vm381, %v474, %v478
      %v481 = vshrl.u32 %v360, 16
      %v483 = vrot.slane %v481, 4
      %v484 = vshll.u32 %v360, 16
      %v486 = vrot.slane %v484, 5
      %v487 = vor.u32 %v483, %v486
      %v488 = vrot.slane %v487, 4
      %v490 = vshll.u32 %v362, 16
      %v492 = vrot.slane %v490, 5
      %v493 = vsel %vm381, %v488, %v492
      %v495 = vshrl.u32 %v363, 16
      %v497 = vrot.slane %v495, 4
      %v498 = vshll.u32 %v363, 16
      %v500 = vrot.slane %v498, 5
      %v501 = vor.u32 %v497, %v500
      %v502 = vrot.slane %v501, 4
      %v504 = vshll.u32 %v365, 16
      %v506 = vrot.slane %v504, 5
      %v507 = vsel %vm381, %v502, %v506
      %v509 = vshrl.u32 %v364, 16
      %v511 = vrot.slane %v509, 4
      %v512 = vshll.u32 %v364, 16
      %v514 = vrot.slane %v512, 5
      %v515 = vor.u32 %v511, %v514
      %v516 = vrot.slane %v515, 4
      %v518 = vshll.u32 %v366, 16
      %v520 = vrot.slane %v518, 5
      %v521 = vsel %vm381, %v516, %v520
      %v523 = vshrl.u32 %v367, 16
      %v525 = vrot.slane %v523, 4
      %v526 = vshll.u32 %v367, 16
      %v528 = vrot.slane %v526, 5
      %v529 = vor.u32 %v525, %v528
      %v530 = vrot.slane %v529, 4
      %v532 = vshll.u32 %v369, 16
      %v534 = vrot.slane %v532, 5
      %v535 = vsel %vm381, %v530, %v534
      %v537 = vshrl.u32 %v368, 16
      %v539 = vrot.slane %v537, 4
      %v540 = vshll.u32 %v368, 16
      %v542 = vrot.slane %v540, 5
      %v543 = vor.u32 %v539, %v542
      %v544 = vrot.slane %v543, 4
      %v546 = vshll.u32 %v370, 16
      %v548 = vrot.slane %v546, 5
      %v549 = vsel %vm381, %v544, %v548
      %v551 = vshrl.u32 %v371, 16
      %v553 = vrot.slane %v551, 4
      %v554 = vshll.u32 %v371, 16
      %v556 = vrot.slane %v554, 5
      %v557 = vor.u32 %v553, %v556
      %v558 = vrot.slane %v557, 4
      %v560 = vshll.u32 %v373, 16
      %v562 = vrot.slane %v560, 5
      %v563 = vsel %vm381, %v558, %v562
      %v565 = vshrl.u32 %v372, 16
      %v567 = vrot.slane %v565, 4
      %v568 = vshll.u32 %v372, 16
      %v570 = vrot.slane %v568, 5
      %v571 = vor.u32 %v567, %v570
      %v572 = vrot.slane %v571, 4
      %v574 = vshll.u32 %v374, 16
      %v576 = vrot.slane %v574, 5
      %v577 = vsel %vm381, %v572, %v576
      %v579 = vshrl.u32 %v375, 16
      %v581 = vrot.slane %v579, 4
      %v582 = vshll.u32 %v375, 16
      %v584 = vrot.slane %v582, 5
      %v585 = vor.u32 %v581, %v584
      %v586 = vrot.slane %v585, 4
      %v588 = vshll.u32 %v377, 16
      %v590 = vrot.slane %v588, 5
      %v591 = vsel %vm381, %v586, %v590
      %v593 = vshrl.u32 %v376, 16
      %v595 = vrot.slane %v593, 4
      %v596 = vshll.u32 %v376, 16
      %v598 = vrot.slane %v596, 5
      %v599 = vor.u32 %v595, %v598
      %v600 = vrot.slane %v599, 4
      %v602 = vshll.u32 %v378, 16
      %v604 = vrot.slane %v602, 5
      %v605 = vsel %vm381, %v600, %v604
      %s606 = scalar_lea.vmem %s222, 192
      %v607 = vld [vmem:[%s606] sm:$0xf]
      %v608 = vld [vmem:[%s606 + $0x4] sm:$0xf]
      %v609 = vld [vmem:[%s606 + $0x8] sm:$0xf]
      %v610 = vld [vmem:[%s606 + $0xc] sm:$0xf]
      %v611 = vld [vmem:[%s606 + $0x10] sm:$0xf]
      %v612 = vld [vmem:[%s606 + $0x14] sm:$0xf]
      %v613 = vld [vmem:[%s606 + $0x18] sm:$0xf]
      %v614 = vld [vmem:[%s606 + $0x1c] sm:$0xf]
      %v615 = vld [vmem:[%s606 + $0x20] sm:$0xf]
      %v616 = vld [vmem:[%s606 + $0x24] sm:$0xf]
      %v617 = vld [vmem:[%s606 + $0x28] sm:$0xf]
      %v618 = vld [vmem:[%s606 + $0x2c] sm:$0xf]
      %v619 = vld [vmem:[%s606 + $0x30] sm:$0xf]
      %v620 = vld [vmem:[%s606 + $0x34] sm:$0xf]
      %v621 = vld [vmem:[%s606 + $0x38] sm:$0xf]
      %v622 = vld [vmem:[%s606 + $0x3c] sm:$0xf]
      %v623 = vld [vmem:[%s606 + $0x40] sm:$0xf]
      %v624 = vld [vmem:[%s606 + $0x44] sm:$0xf]
      %v625 = vld [vmem:[%s606 + $0x48] sm:$0xf]
      %v626 = vld [vmem:[%s606 + $0x4c] sm:$0xf]
      %v627 = vld [vmem:[%s606 + $0x50] sm:$0xf]
      %v628 = vld [vmem:[%s606 + $0x54] sm:$0xf]
      %v629 = vld [vmem:[%s606 + $0x58] sm:$0xf]
      %v630 = vld [vmem:[%s606 + $0x5c] sm:$0xf]
      %v631 = vld [vmem:[%s606 + $0x60] sm:$0xf]
      %v632 = vld [vmem:[%s606 + $0x64] sm:$0xf]
      %v633 = vld [vmem:[%s606 + $0x68] sm:$0xf]
      %v634 = vld [vmem:[%s606 + $0x6c] sm:$0xf]
      %v635 = vld [vmem:[%s606 + $0x70] sm:$0xf]
      %v636 = vld [vmem:[%s606 + $0x74] sm:$0xf]
      %v637 = vld [vmem:[%s606 + $0x78] sm:$0xf]
      %v638 = vld [vmem:[%s606 + $0x7c] sm:$0xf]
      %v639 = vld [vmem:[%s606 + $0x80] sm:$0xf]
      %v640 = vld [vmem:[%s606 + $0x84] sm:$0xf]
      %v641 = vld [vmem:[%s606 + $0x88] sm:$0xf]
      %v642 = vld [vmem:[%s606 + $0x8c] sm:$0xf]
      %v643 = vld [vmem:[%s606 + $0x90] sm:$0xf]
      %v644 = vld [vmem:[%s606 + $0x94] sm:$0xf]
      %v645 = vld [vmem:[%s606 + $0x98] sm:$0xf]
      %v646 = vld [vmem:[%s606 + $0x9c] sm:$0xf]
      %v647 = vld [vmem:[%s606 + $0xa0] sm:$0xf]
      %v648 = vld [vmem:[%s606 + $0xa4] sm:$0xf]
      %v649 = vld [vmem:[%s606 + $0xa8] sm:$0xf]
      %v650 = vld [vmem:[%s606 + $0xac] sm:$0xf]
      %v651 = vld [vmem:[%s606 + $0xb0] sm:$0xf]
      %v652 = vld [vmem:[%s606 + $0xb4] sm:$0xf]
      %v653 = vld [vmem:[%s606 + $0xb8] sm:$0xf]
      %v654 = vld [vmem:[%s606 + $0xbc] sm:$0xf]
      %v655 = vunpack.c.l.b16 %v395
      %v656 = vunpack.c.h.b16 %v395
      %v657 = vunpack.c.l.b16 %v409
      %v658 = vunpack.c.l.b16 %v423
      %v659 = vunpack.c.h.b16 %v423
      %v660 = vunpack.c.l.b16 %v437
      %v661 = vunpack.c.l.b16 %v451
      %v662 = vunpack.c.h.b16 %v451
      %v663 = vunpack.c.l.b16 %v465
      %v664 = vunpack.c.l.b16 %v479
      %v665 = vunpack.c.h.b16 %v479
      %v666 = vunpack.c.l.b16 %v493
      %v667 = vunpack.c.l.b16 %v507
      %v668 = vunpack.c.h.b16 %v507
      %v669 = vunpack.c.l.b16 %v521
      %v670 = vunpack.c.l.b16 %v535
      %v671 = vunpack.c.h.b16 %v535
      %v672 = vunpack.c.l.b16 %v549
      %v673 = vunpack.c.l.b16 %v563
      %v674 = vunpack.c.h.b16 %v563
      %v675 = vunpack.c.l.b16 %v577
      %v676 = vunpack.c.l.b16 %v591
      %v677 = vunpack.c.h.b16 %v591
      %v678 = vunpack.c.l.b16 %v605
      %v679 = vpack.c.b16 %v658, %v655
      %v680 = vpack.c.b16 %v659, %v656
      %v681 = vpack.c.b16 %v660, %v657
      %v682 = vpack.c.b16 %v664, %v661
      %v683 = vpack.c.b16 %v665, %v662
      %v684 = vpack.c.b16 %v666, %v663
      %v685 = vpack.c.b16 %v670, %v667
      %v686 = vpack.c.b16 %v671, %v668
      %v687 = vpack.c.b16 %v672, %v669
      %v688 = vpack.c.b16 %v676, %v673
      %v689 = vpack.c.b16 %v677, %v674
      %v690 = vpack.c.b16 %v678, %v675
      %v751 = vunpack.c.l.b16 %v607
      %v752 = vunpack.c.l.b16 %v608
      %v753 = vunpack.c.l.b16 %v609
      %v754 = vunpack.c.l.b16 %v610
      %v755 = vunpack.c.l.b16 %v611
      %v756 = vunpack.c.l.b16 %v612
      %v757 = vunpack.c.l.b16 %v613
      %v758 = vunpack.c.l.b16 %v614
      %v759 = vunpack.c.l.b16 %v615
      %v760 = vunpack.c.l.b16 %v616
      %v761 = vunpack.c.l.b16 %v617
      %v762 = vunpack.c.l.b16 %v618
      %v763 = vunpack.c.l.b16 %v619
      %v764 = vunpack.c.l.b16 %v620
      %v765 = vunpack.c.l.b16 %v621
      %v766 = vunpack.c.l.b16 %v622
      %v767 = vunpack.c.l.b16 %v623
      %v768 = vunpack.c.l.b16 %v624
      %v769 = vunpack.c.l.b16 %v625
      %v770 = vunpack.c.l.b16 %v626
      %v771 = vunpack.c.l.b16 %v627
      %v772 = vunpack.c.l.b16 %v628
      %v773 = vunpack.c.l.b16 %v629
      %v774 = vunpack.c.l.b16 %v630
      %v775 = vunpack.c.l.b16 %v631
      %v776 = vunpack.c.l.b16 %v632
      %v777 = vunpack.c.l.b16 %v633
      %v778 = vunpack.c.l.b16 %v634
      %v779 = vunpack.c.l.b16 %v635
      %v780 = vunpack.c.l.b16 %v636
      %v781 = vunpack.c.l.b16 %v637
      %v782 = vunpack.c.l.b16 %v638
      %v783 = vunpack.c.l.b16 %v639
      %v784 = vunpack.c.l.b16 %v640
      %v785 = vunpack.c.l.b16 %v641
      %v786 = vunpack.c.l.b16 %v642
      %v787 = vunpack.c.l.b16 %v643
      %v788 = vunpack.c.l.b16 %v644
      %v789 = vunpack.c.l.b16 %v645
      %v790 = vunpack.c.l.b16 %v646
      %v791 = vunpack.c.l.b16 %v647
      %v792 = vunpack.c.l.b16 %v648
      %v793 = vunpack.c.l.b16 %v649
      %v794 = vunpack.c.l.b16 %v650
      %v795 = vunpack.c.l.b16 %v651
      %v796 = vunpack.c.l.b16 %v652
      %v797 = vunpack.c.l.b16 %v653
      %v798 = vunpack.c.l.b16 %v654
      %v799 = vpack.c.b16 %v752, %v751
      %v800 = vpack.c.b16 %v754, %v753
      %v801 = vpack.c.b16 %v756, %v755
      %v802 = vpack.c.b16 %v758, %v757
      %v803 = vpack.c.b16 %v760, %v759
      %v804 = vpack.c.b16 %v762, %v761
      %v805 = vpack.c.b16 %v764, %v763
      %v806 = vpack.c.b16 %v766, %v765
      %v807 = vpack.c.b16 %v768, %v767
      %v808 = vpack.c.b16 %v770, %v769
      %v809 = vpack.c.b16 %v772, %v771
      %v810 = vpack.c.b16 %v774, %v773
      %v811 = vpack.c.b16 %v776, %v775
      %v812 = vpack.c.b16 %v778, %v777
      %v813 = vpack.c.b16 %v780, %v779
      %v814 = vpack.c.b16 %v782, %v781
      %v815 = vpack.c.b16 %v784, %v783
      %v816 = vpack.c.b16 %v786, %v785
      %v817 = vpack.c.b16 %v788, %v787
      %v818 = vpack.c.b16 %v790, %v789
      %v819 = vpack.c.b16 %v792, %v791
      %v820 = vpack.c.b16 %v794, %v793
      %v821 = vpack.c.b16 %v796, %v795
      %v822 = vpack.c.b16 %v798, %v797
      %847 = vmatpush.bf16.msra.mxu0 %v806
      %848 = vmatpush.bf16.msra.mxu0 %v805
      %849 = vmatpush.bf16.msra.mxu0 %v804
      %850 = vmatpush.bf16.msra.mxu0 %v803
      %851 = vmatpush.bf16.msra.mxu0 %v802
      %852 = vmatpush.bf16.msra.mxu0 %v801
      %853 = vmatpush.bf16.msra.mxu0 %v800
      %854 = vmatpush.bf16.msra.mxu0 %v799
      %855 = vmatmul.bf16.gmra.mxu0 %v679
      %v856 = vpop.f32.mrf.mxu0
      %v857 = vadd.f32 0.0, %v856
      %v858 = vpop.f32.mrf.mxu0
      %v859 = vadd.f32 0.0, %v858
      %860 = vmatmul.bf16.gmra.mxu0 %v682
      %v861 = vpop.f32.mrf.mxu0
      %v862 = vadd.f32 0.0, %v861
      %v863 = vpop.f32.mrf.mxu0
      %v864 = vadd.f32 0.0, %v863
      %865 = vmatmul.bf16.gmra.mxu0 %v685
      %v866 = vpop.f32.mrf.mxu0
      %v867 = vadd.f32 0.0, %v866
      %v868 = vpop.f32.mrf.mxu0
      %v869 = vadd.f32 0.0, %v868
      %870 = vmatmul.bf16.gmra.mxu0 %v688
      %v871 = vpop.f32.mrf.mxu0
      %v872 = vadd.f32 0.0, %v871
      %v873 = vpop.f32.mrf.mxu0
      %v874 = vadd.f32 0.0, %v873
      %875 = vdwg.mxu0
      %876 = vmatpush.bf16.msra.mxu0 %v814
      %877 = vmatpush.bf16.msra.mxu0 %v813
      %878 = vmatpush.bf16.msra.mxu0 %v812
      %879 = vmatpush.bf16.msra.mxu0 %v811
      %880 = vmatpush.bf16.msra.mxu0 %v810
      %881 = vmatpush.bf16.msra.mxu0 %v809
      %882 = vmatpush.bf16.msra.mxu0 %v808
      %883 = vmatpush.bf16.msra.mxu0 %v807
      %884 = vmatmul.bf16.gmra.mxu0 %v680
      %v885 = vpop.f32.mrf.mxu0
      %v886 = vadd.f32 %v857, %v885
      %v887 = vpop.f32.mrf.mxu0
      %v888 = vadd.f32 %v859, %v887
      %889 = vmatmul.bf16.gmra.mxu0 %v683
      %v890 = vpop.f32.mrf.mxu0
      %v891 = vadd.f32 %v862, %v890
      %v892 = vpop.f32.mrf.mxu0
      %v893 = vadd.f32 %v864, %v892
      %894 = vmatmul.bf16.gmra.mxu0 %v686
      %v895 = vpop.f32.mrf.mxu0
      %v896 = vadd.f32 %v867, %v895
      %v897 = vpop.f32.mrf.mxu0
      %v898 = vadd.f32 %v869, %v897
      %899 = vmatmul.bf16.gmra.mxu0 %v689
      %v900 = vpop.f32.mrf.mxu0
      %v901 = vadd.f32 %v872, %v900
      %v902 = vpop.f32.mrf.mxu0
      %v903 = vadd.f32 %v874, %v902
      %904 = vdwg.mxu0
      %905 = vmatpush.bf16.msra.mxu0 %v822
      %906 = vmatpush.bf16.msra.mxu0 %v821
      %907 = vmatpush.bf16.msra.mxu0 %v820
      %908 = vmatpush.bf16.msra.mxu0 %v819
      %909 = vmatpush.bf16.msra.mxu0 %v818
      %910 = vmatpush.bf16.msra.mxu0 %v817
      %911 = vmatpush.bf16.msra.mxu0 %v816
      %912 = vmatpush.bf16.msra.mxu0 %v815
      %913 = vmatmul.bf16.gmra.mxu0 %v681
      %v914 = vpop.f32.mrf.mxu0
      %v915 = vadd.f32 %v886, %v914
      %v916 = vpop.f32.mrf.mxu0
      %v917 = vadd.f32 %v888, %v916
      %918 = vmatmul.bf16.gmra.mxu0 %v684
      %v919 = vpop.f32.mrf.mxu0
      %v920 = vadd.f32 %v891, %v919
      %v921 = vpop.f32.mrf.mxu0
      %v922 = vadd.f32 %v893, %v921
      %923 = vmatmul.bf16.gmra.mxu0 %v687
      %v924 = vpop.f32.mrf.mxu0
      %v925 = vadd.f32 %v896, %v924
      %v926 = vpop.f32.mrf.mxu0
      %v927 = vadd.f32 %v898, %v926
      %928 = vmatmul.bf16.gmra.mxu0 %v690
      %v929 = vpop.f32.mrf.mxu0
      %v930 = vadd.f32 %v901, %v929
      %v931 = vpop.f32.mrf.mxu0
      %v932 = vadd.f32 %v903, %v931
      %933 = vdwg.mxu0
      %v934 = vpack.c.b16 %v278, %v277
      %v992 = vunpack.c.l.b16 %v279
      %v993 = vunpack.c.l.b16 %v280
      %v994 = vunpack.c.l.b16 %v281
      %v995 = vunpack.c.l.b16 %v282
      %v996 = vunpack.c.l.b16 %v283
      %v997 = vunpack.c.l.b16 %v284
      %v998 = vunpack.c.l.b16 %v285
      %v999 = vunpack.c.l.b16 %v286
      %v1000 = vunpack.c.l.b16 %v287
      %v1001 = vunpack.c.l.b16 %v288
      %v1002 = vunpack.c.l.b16 %v289
      %v1003 = vunpack.c.l.b16 %v290
      %v1004 = vunpack.c.l.b16 %v291
      %v1005 = vunpack.c.l.b16 %v292
      %v1006 = vunpack.c.l.b16 %v293
      %v1007 = vunpack.c.l.b16 %v294
      %v1008 = vunpack.c.l.b16 %v295
      %v1009 = vunpack.c.l.b16 %v296
      %v1010 = vunpack.c.l.b16 %v297
      %v1011 = vunpack.c.l.b16 %v298
      %v1012 = vunpack.c.l.b16 %v299
      %v1013 = vunpack.c.l.b16 %v300
      %v1014 = vunpack.c.l.b16 %v301
      %v1015 = vunpack.c.l.b16 %v302
      %v1016 = vunpack.c.l.b16 %v303
      %v1017 = vunpack.c.l.b16 %v304
      %v1018 = vunpack.c.l.b16 %v305
      %v1019 = vunpack.c.l.b16 %v306
      %v1020 = vunpack.c.l.b16 %v307
      %v1021 = vunpack.c.l.b16 %v308
      %v1022 = vunpack.c.l.b16 %v309
      %v1023 = vunpack.c.l.b16 %v310
      %v1024 = vunpack.c.l.b16 %v311
      %v1025 = vunpack.c.l.b16 %v312
      %v1026 = vunpack.c.l.b16 %v313
      %v1027 = vunpack.c.l.b16 %v314
      %v1028 = vunpack.c.l.b16 %v315
      %v1029 = vunpack.c.l.b16 %v316
      %v1030 = vunpack.c.l.b16 %v317
      %v1031 = vunpack.c.l.b16 %v318
      %v1032 = vunpack.c.l.b16 %v319
      %v1033 = vunpack.c.l.b16 %v320
      %v1034 = vunpack.c.l.b16 %v321
      %v1035 = vunpack.c.l.b16 %v322
      %v1036 = vunpack.c.l.b16 %v323
      %v1037 = vunpack.c.l.b16 %v324
      %v1038 = vunpack.c.l.b16 %v325
      %v1039 = vunpack.c.l.b16 %v326
      %v1040 = vpack.c.b16 %v993, %v992
      %v1041 = vpack.c.b16 %v995, %v994
      %v1042 = vpack.c.b16 %v997, %v996
      %v1043 = vpack.c.b16 %v999, %v998
      %v1044 = vpack.c.b16 %v1001, %v1000
      %v1045 = vpack.c.b16 %v1003, %v1002
      %v1046 = vpack.c.b16 %v1005, %v1004
      %v1047 = vpack.c.b16 %v1007, %v1006
      %v1048 = vpack.c.b16 %v1009, %v1008
      %v1049 = vpack.c.b16 %v1011, %v1010
      %v1050 = vpack.c.b16 %v1013, %v1012
      %v1051 = vpack.c.b16 %v1015, %v1014
      %v1052 = vpack.c.b16 %v1017, %v1016
      %v1053 = vpack.c.b16 %v1019, %v1018
      %v1054 = vpack.c.b16 %v1021, %v1020
      %v1055 = vpack.c.b16 %v1023, %v1022
      %v1056 = vpack.c.b16 %v1025, %v1024
      %v1057 = vpack.c.b16 %v1027, %v1026
      %v1058 = vpack.c.b16 %v1029, %v1028
      %v1059 = vpack.c.b16 %v1031, %v1030
      %v1060 = vpack.c.b16 %v1033, %v1032
      %v1061 = vpack.c.b16 %v1035, %v1034
      %v1062 = vpack.c.b16 %v1037, %v1036
      %v1063 = vpack.c.b16 %v1039, %v1038
      %1088 = vmatpush.bf16.msra.mxu0 %v1047
      %1089 = vmatpush.bf16.msra.mxu0 %v1046
      %1090 = vmatpush.bf16.msra.mxu0 %v1045
      %1091 = vmatpush.bf16.msra.mxu0 %v1044
      %1092 = vmatpush.bf16.msra.mxu0 %v1043
      %1093 = vmatpush.bf16.msra.mxu0 %v1042
      %1094 = vmatpush.bf16.msra.mxu0 %v1041
      %1095 = vmatpush.bf16.msra.mxu0 %v1040
      %1096 = vmatmul.bf16.gmra.mxu0 %v347
      %v1097 = vpop.f32.mrf.mxu0
      %v1098 = vadd.f32 %v915, %v1097
      %v1099 = vpop.f32.mrf.mxu0
      %v1100 = vadd.f32 %v917, %v1099
      %1101 = vmatmul.bf16.gmra.mxu0 %v355
      %v1102 = vpop.f32.mrf.mxu0
      %v1103 = vadd.f32 %v920, %v1102
      %v1104 = vpop.f32.mrf.mxu0
      %v1105 = vadd.f32 %v922, %v1104
      %1106 = vmatmul.bf16.gmra.mxu0 %v363
      %v1107 = vpop.f32.mrf.mxu0
      %v1108 = vadd.f32 %v925, %v1107
      %v1109 = vpop.f32.mrf.mxu0
      %v1110 = vadd.f32 %v927, %v1109
      %1111 = vmatmul.bf16.gmra.mxu0 %v371
      %v1112 = vpop.f32.mrf.mxu0
      %v1113 = vadd.f32 %v930, %v1112
      %v1114 = vpop.f32.mrf.mxu0
      %v1115 = vadd.f32 %v932, %v1114
      %1116 = vdwg.mxu0
      %1117 = vmatpush.bf16.msra.mxu0 %v1055
      %1118 = vmatpush.bf16.msra.mxu0 %v1054
      %1119 = vmatpush.bf16.msra.mxu0 %v1053
      %1120 = vmatpush.bf16.msra.mxu0 %v1052
      %1121 = vmatpush.bf16.msra.mxu0 %v1051
      %1122 = vmatpush.bf16.msra.mxu0 %v1050
      %1123 = vmatpush.bf16.msra.mxu0 %v1049
      %1124 = vmatpush.bf16.msra.mxu0 %v1048
      %1125 = vmatmul.bf16.gmra.mxu0 %v351
      %v1126 = vpop.f32.mrf.mxu0
      %v1127 = vadd.f32 %v1098, %v1126
      %v1128 = vpop.f32.mrf.mxu0
      %v1129 = vadd.f32 %v1100, %v1128
      %1130 = vmatmul.bf16.gmra.mxu0 %v359
      %v1131 = vpop.f32.mrf.mxu0
      %v1132 = vadd.f32 %v1103, %v1131
      %v1133 = vpop.f32.mrf.mxu0
      %v1134 = vadd.f32 %v1105, %v1133
      %1135 = vmatmul.bf16.gmra.mxu0 %v367
      %v1136 = vpop.f32.mrf.mxu0
      %v1137 = vadd.f32 %v1108, %v1136
      %v1138 = vpop.f32.mrf.mxu0
      %v1139 = vadd.f32 %v1110, %v1138
      %1140 = vmatmul.bf16.gmra.mxu0 %v375
      %v1141 = vpop.f32.mrf.mxu0
      %v1142 = vadd.f32 %v1113, %v1141
      %v1143 = vpop.f32.mrf.mxu0
      %v1144 = vadd.f32 %v1115, %v1143
      %1145 = vdwg.mxu0
      %1146 = vmatpush.bf16.msra.mxu0 %v1063
      %1147 = vmatpush.bf16.msra.mxu0 %v1062
      %1148 = vmatpush.bf16.msra.mxu0 %v1061
      %1149 = vmatpush.bf16.msra.mxu0 %v1060
      %1150 = vmatpush.bf16.msra.mxu0 %v1059
      %1151 = vmatpush.bf16.msra.mxu0 %v1058
      %1152 = vmatpush.bf16.msra.mxu0 %v1057
      %1153 = vmatpush.bf16.msra.mxu0 %v1056
      %1154 = vmatmul.bf16.gmra.mxu0 %v355
      %v1155 = vpop.f32.mrf.mxu0
      %v1156 = vadd.f32 %v1127, %v1155
      %v1157 = vpop.f32.mrf.mxu0
      %v1158 = vadd.f32 %v1129, %v1157
      %1159 = vmatmul.bf16.gmra.mxu0 %v363
      %v1160 = vpop.f32.mrf.mxu0
      %v1161 = vadd.f32 %v1132, %v1160
      %v1162 = vpop.f32.mrf.mxu0
      %v1163 = vadd.f32 %v1134, %v1162
      %1164 = vmatmul.bf16.gmra.mxu0 %v371
      %v1165 = vpop.f32.mrf.mxu0
      %v1166 = vadd.f32 %v1137, %v1165
      %v1167 = vpop.f32.mrf.mxu0
      %v1168 = vadd.f32 %v1139, %v1167
      %1169 = vmatmul.bf16.gmra.mxu0 %v934
      %v1170 = vpop.f32.mrf.mxu0
      %v1171 = vadd.f32 %v1142, %v1170
      %v1172 = vpop.f32.mrf.mxu0
      %v1173 = vadd.f32 %v1144, %v1172
      %1174 = vdwg.mxu0
      %vm1175 = vcmask 1042432
      %vm1176 = vcmask 1046532
      %vm1177 = vmor %vm1175, %vm1176
      %v1178 = vrot.slane %v347, 5
      %v1179 = vrot.slane %v1178, 4
      %v1180 = vrot.slane %v349, 5
      %v1181 = vsel %vm1177, %v1179, %v1180
      %v1182 = vrot.slane %v348, 5
      %v1183 = vrot.slane %v1182, 4
      %v1184 = vrot.slane %v350, 5
      %v1185 = vsel %vm1177, %v1183, %v1184
      %v1186 = vrot.slane %v351, 5
      %v1187 = vrot.slane %v1186, 4
      %v1188 = vrot.slane %v353, 5
      %v1189 = vsel %vm1177, %v1187, %v1188
      %v1190 = vrot.slane %v352, 5
      %v1191 = vrot.slane %v1190, 4
      %v1192 = vrot.slane %v354, 5
      %v1193 = vsel %vm1177, %v1191, %v1192
      %v1194 = vrot.slane %v355, 5
      %v1195 = vrot.slane %v1194, 4
      %v1196 = vrot.slane %v357, 5
      %v1197 = vsel %vm1177, %v1195, %v1196
      %v1198 = vrot.slane %v356, 5
      %v1199 = vrot.slane %v1198, 4
      %v1200 = vrot.slane %v358, 5
      %v1201 = vsel %vm1177, %v1199, %v1200
      %v1202 = vrot.slane %v359, 5
      %v1203 = vrot.slane %v1202, 4
      %v1204 = vrot.slane %v361, 5
      %v1205 = vsel %vm1177, %v1203, %v1204
      %v1206 = vrot.slane %v360, 5
      %v1207 = vrot.slane %v1206, 4
      %v1208 = vrot.slane %v362, 5
      %v1209 = vsel %vm1177, %v1207, %v1208
      %v1210 = vrot.slane %v363, 5
      %v1211 = vrot.slane %v1210, 4
      %v1212 = vrot.slane %v365, 5
      %v1213 = vsel %vm1177, %v1211, %v1212
      %v1214 = vrot.slane %v364, 5
      %v1215 = vrot.slane %v1214, 4
      %v1216 = vrot.slane %v366, 5
      %v1217 = vsel %vm1177, %v1215, %v1216
      %v1218 = vrot.slane %v367, 5
      %v1219 = vrot.slane %v1218, 4
      %v1220 = vrot.slane %v369, 5
      %v1221 = vsel %vm1177, %v1219, %v1220
      %v1222 = vrot.slane %v368, 5
      %v1223 = vrot.slane %v1222, 4
      %v1224 = vrot.slane %v370, 5
      %v1225 = vsel %vm1177, %v1223, %v1224
      %v1226 = vrot.slane %v371, 5
      %v1227 = vrot.slane %v1226, 4
      %v1228 = vrot.slane %v373, 5
      %v1229 = vsel %vm1177, %v1227, %v1228
      %v1230 = vrot.slane %v372, 5
      %v1231 = vrot.slane %v1230, 4
      %v1232 = vrot.slane %v374, 5
      %v1233 = vsel %vm1177, %v1231, %v1232
      %v1234 = vrot.slane %v375, 5
      %v1235 = vrot.slane %v1234, 4
      %v1236 = vrot.slane %v377, 5
      %v1237 = vsel %vm1177, %v1235, %v1236
      %v1238 = vrot.slane %v376, 5
      %v1239 = vrot.slane %v1238, 4
      %v1240 = vrot.slane %v378, 5
      %v1241 = vsel %vm1177, %v1239, %v1240
      %s1242 = scalar_lea.vmem %s222, 384
      %v1243 = vld [vmem:[%s1242] sm:$0xf]
      %v1244 = vld [vmem:[%s1242 + $0x4] sm:$0xf]
      %v1245 = vld [vmem:[%s1242 + $0x8] sm:$0xf]
      %v1246 = vld [vmem:[%s1242 + $0xc] sm:$0xf]
      %v1247 = vld [vmem:[%s1242 + $0x10] sm:$0xf]
      %v1248 = vld [vmem:[%s1242 + $0x14] sm:$0xf]
      %v1249 = vld [vmem:[%s1242 + $0x18] sm:$0xf]
      %v1250 = vld [vmem:[%s1242 + $0x1c] sm:$0xf]
      %v1251 = vld [vmem:[%s1242 + $0x20] sm:$0xf]
      %v1252 = vld [vmem:[%s1242 + $0x24] sm:$0xf]
      %v1253 = vld [vmem:[%s1242 + $0x28] sm:$0xf]
      %v1254 = vld [vmem:[%s1242 + $0x2c] sm:$0xf]
      %v1255 = vld [vmem:[%s1242 + $0x30] sm:$0xf]
      %v1256 = vld [vmem:[%s1242 + $0x34] sm:$0xf]
      %v1257 = vld [vmem:[%s1242 + $0x38] sm:$0xf]
      %v1258 = vld [vmem:[%s1242 + $0x3c] sm:$0xf]
      %v1259 = vld [vmem:[%s1242 + $0x40] sm:$0xf]
      %v1260 = vld [vmem:[%s1242 + $0x44] sm:$0xf]
      %v1261 = vld [vmem:[%s1242 + $0x48] sm:$0xf]
      %v1262 = vld [vmem:[%s1242 + $0x4c] sm:$0xf]
      %v1263 = vld [vmem:[%s1242 + $0x50] sm:$0xf]
      %v1264 = vld [vmem:[%s1242 + $0x54] sm:$0xf]
      %v1265 = vld [vmem:[%s1242 + $0x58] sm:$0xf]
      %v1266 = vld [vmem:[%s1242 + $0x5c] sm:$0xf]
      %v1267 = vld [vmem:[%s1242 + $0x60] sm:$0xf]
      %v1268 = vld [vmem:[%s1242 + $0x64] sm:$0xf]
      %v1269 = vld [vmem:[%s1242 + $0x68] sm:$0xf]
      %v1270 = vld [vmem:[%s1242 + $0x6c] sm:$0xf]
      %v1271 = vld [vmem:[%s1242 + $0x70] sm:$0xf]
      %v1272 = vld [vmem:[%s1242 + $0x74] sm:$0xf]
      %v1273 = vld [vmem:[%s1242 + $0x78] sm:$0xf]
      %v1274 = vld [vmem:[%s1242 + $0x7c] sm:$0xf]
      %v1275 = vld [vmem:[%s1242 + $0x80] sm:$0xf]
      %v1276 = vld [vmem:[%s1242 + $0x84] sm:$0xf]
      %v1277 = vld [vmem:[%s1242 + $0x88] sm:$0xf]
      %v1278 = vld [vmem:[%s1242 + $0x8c] sm:$0xf]
      %v1279 = vld [vmem:[%s1242 + $0x90] sm:$0xf]
      %v1280 = vld [vmem:[%s1242 + $0x94] sm:$0xf]
      %v1281 = vld [vmem:[%s1242 + $0x98] sm:$0xf]
      %v1282 = vld [vmem:[%s1242 + $0x9c] sm:$0xf]
      %v1283 = vld [vmem:[%s1242 + $0xa0] sm:$0xf]
      %v1284 = vld [vmem:[%s1242 + $0xa4] sm:$0xf]
      %v1285 = vld [vmem:[%s1242 + $0xa8] sm:$0xf]
      %v1286 = vld [vmem:[%s1242 + $0xac] sm:$0xf]
      %v1287 = vld [vmem:[%s1242 + $0xb0] sm:$0xf]
      %v1288 = vld [vmem:[%s1242 + $0xb4] sm:$0xf]
      %v1289 = vld [vmem:[%s1242 + $0xb8] sm:$0xf]
      %v1290 = vld [vmem:[%s1242 + $0xbc] sm:$0xf]
      %v1291 = vunpack.c.l.b16 %v1181
      %v1292 = vunpack.c.h.b16 %v1181
      %v1293 = vunpack.c.l.b16 %v1185
      %v1294 = vunpack.c.l.b16 %v1189
      %v1295 = vunpack.c.h.b16 %v1189
      %v1296 = vunpack.c.l.b16 %v1193
      %v1297 = vunpack.c.l.b16 %v1197
      %v1298 = vunpack.c.h.b16 %v1197
      %v1299 = vunpack.c.l.b16 %v1201
      %v1300 = vunpack.c.l.b16 %v1205
      %v1301 = vunpack.c.h.b16 %v1205
      %v1302 = vunpack.c.l.b16 %v1209
      %v1303 = vunpack.c.l.b16 %v1213
      %v1304 = vunpack.c.h.b16 %v1213
      %v1305 = vunpack.c.l.b16 %v1217
      %v1306 = vunpack.c.l.b16 %v1221
      %v1307 = vunpack.c.h.b16 %v1221
      %v1308 = vunpack.c.l.b16 %v1225
      %v1309 = vunpack.c.l.b16 %v1229
      %v1310 = vunpack.c.h.b16 %v1229
      %v1311 = vunpack.c.l.b16 %v1233
      %v1312 = vunpack.c.l.b16 %v1237
      %v1313 = vunpack.c.h.b16 %v1237
      %v1314 = vunpack.c.l.b16 %v1241
      %v1315 = vpack.c.b16 %v1294, %v1291
      %v1316 = vpack.c.b16 %v1295, %v1292
      %v1317 = vpack.c.b16 %v1296, %v1293
      %v1318 = vpack.c.b16 %v1300, %v1297
      %v1319 = vpack.c.b16 %v1301, %v1298
      %v1320 = vpack.c.b16 %v1302, %v1299
      %v1321 = vpack.c.b16 %v1306, %v1303
      %v1322 = vpack.c.b16 %v1307, %v1304
      %v1323 = vpack.c.b16 %v1308, %v1305
      %v1324 = vpack.c.b16 %v1312, %v1309
      %v1325 = vpack.c.b16 %v1313, %v1310
      %v1326 = vpack.c.b16 %v1314, %v1311
      %v1387 = vunpack.c.l.b16 %v1243
      %v1388 = vunpack.c.l.b16 %v1244
      %v1389 = vunpack.c.l.b16 %v1245
      %v1390 = vunpack.c.l.b16 %v1246
      %v1391 = vunpack.c.l.b16 %v1247
      %v1392 = vunpack.c.l.b16 %v1248
      %v1393 = vunpack.c.l.b16 %v1249
      %v1394 = vunpack.c.l.b16 %v1250
      %v1395 = vunpack.c.l.b16 %v1251
      %v1396 = vunpack.c.l.b16 %v1252
      %v1397 = vunpack.c.l.b16 %v1253
      %v1398 = vunpack.c.l.b16 %v1254
      %v1399 = vunpack.c.l.b16 %v1255
      %v1400 = vunpack.c.l.b16 %v1256
      %v1401 = vunpack.c.l.b16 %v1257
      %v1402 = vunpack.c.l.b16 %v1258
      %v1403 = vunpack.c.l.b16 %v1259
      %v1404 = vunpack.c.l.b16 %v1260
      %v1405 = vunpack.c.l.b16 %v1261
      %v1406 = vunpack.c.l.b16 %v1262
      %v1407 = vunpack.c.l.b16 %v1263
      %v1408 = vunpack.c.l.b16 %v1264
      %v1409 = vunpack.c.l.b16 %v1265
      %v1410 = vunpack.c.l.b16 %v1266
      %v1411 = vunpack.c.l.b16 %v1267
      %v1412 = vunpack.c.l.b16 %v1268
      %v1413 = vunpack.c.l.b16 %v1269
      %v1414 = vunpack.c.l.b16 %v1270
      %v1415 = vunpack.c.l.b16 %v1271
      %v1416 = vunpack.c.l.b16 %v1272
      %v1417 = vunpack.c.l.b16 %v1273
      %v1418 = vunpack.c.l.b16 %v1274
      %v1419 = vunpack.c.l.b16 %v1275
      %v1420 = vunpack.c.l.b16 %v1276
      %v1421 = vunpack.c.l.b16 %v1277
      %v1422 = vunpack.c.l.b16 %v1278
      %v1423 = vunpack.c.l.b16 %v1279
      %v1424 = vunpack.c.l.b16 %v1280
      %v1425 = vunpack.c.l.b16 %v1281
      %v1426 = vunpack.c.l.b16 %v1282
      %v1427 = vunpack.c.l.b16 %v1283
      %v1428 = vunpack.c.l.b16 %v1284
      %v1429 = vunpack.c.l.b16 %v1285
      %v1430 = vunpack.c.l.b16 %v1286
      %v1431 = vunpack.c.l.b16 %v1287
      %v1432 = vunpack.c.l.b16 %v1288
      %v1433 = vunpack.c.l.b16 %v1289
      %v1434 = vunpack.c.l.b16 %v1290
      %v1435 = vpack.c.b16 %v1388, %v1387
      %v1436 = vpack.c.b16 %v1390, %v1389
      %v1437 = vpack.c.b16 %v1392, %v1391
      %v1438 = vpack.c.b16 %v1394, %v1393
      %v1439 = vpack.c.b16 %v1396, %v1395
      %v1440 = vpack.c.b16 %v1398, %v1397
      %v1441 = vpack.c.b16 %v1400, %v1399
      %v1442 = vpack.c.b16 %v1402, %v1401
      %v1443 = vpack.c.b16 %v1404, %v1403
      %v1444 = vpack.c.b16 %v1406, %v1405
      %v1445 = vpack.c.b16 %v1408, %v1407
      %v1446 = vpack.c.b16 %v1410, %v1409
      %v1447 = vpack.c.b16 %v1412, %v1411
      %v1448 = vpack.c.b16 %v1414, %v1413
      %v1449 = vpack.c.b16 %v1416, %v1415
      %v1450 = vpack.c.b16 %v1418, %v1417
      %v1451 = vpack.c.b16 %v1420, %v1419
      %v1452 = vpack.c.b16 %v1422, %v1421
      %v1453 = vpack.c.b16 %v1424, %v1423
      %v1454 = vpack.c.b16 %v1426, %v1425
      %v1455 = vpack.c.b16 %v1428, %v1427
      %v1456 = vpack.c.b16 %v1430, %v1429
      %v1457 = vpack.c.b16 %v1432, %v1431
      %v1458 = vpack.c.b16 %v1434, %v1433
      %1483 = vmatpush.bf16.msra.mxu0 %v1442
      %1484 = vmatpush.bf16.msra.mxu0 %v1441
      %1485 = vmatpush.bf16.msra.mxu0 %v1440
      %1486 = vmatpush.bf16.msra.mxu0 %v1439
      %1487 = vmatpush.bf16.msra.mxu0 %v1438
      %1488 = vmatpush.bf16.msra.mxu0 %v1437
      %1489 = vmatpush.bf16.msra.mxu0 %v1436
      %1490 = vmatpush.bf16.msra.mxu0 %v1435
      %1491 = vmatmul.bf16.gmra.mxu0 %v1315
      %v1492 = vpop.f32.mrf.mxu0
      %v1493 = vadd.f32 0.0, %v1492
      %v1494 = vpop.f32.mrf.mxu0
      %v1495 = vadd.f32 0.0, %v1494
      %1496 = vmatmul.bf16.gmra.mxu0 %v1318
      %v1497 = vpop.f32.mrf.mxu0
      %v1498 = vadd.f32 0.0, %v1497
      %v1499 = vpop.f32.mrf.mxu0
      %v1500 = vadd.f32 0.0, %v1499
      %1501 = vmatmul.bf16.gmra.mxu0 %v1321
      %v1502 = vpop.f32.mrf.mxu0
      %v1503 = vadd.f32 0.0, %v1502
      %v1504 = vpop.f32.mrf.mxu0
      %v1505 = vadd.f32 0.0, %v1504
      %1506 = vmatmul.bf16.gmra.mxu0 %v1324
      %v1507 = vpop.f32.mrf.mxu0
      %v1508 = vadd.f32 0.0, %v1507
      %v1509 = vpop.f32.mrf.mxu0
      %v1510 = vadd.f32 0.0, %v1509
      %1511 = vdwg.mxu0
      %1512 = vmatpush.bf16.msra.mxu0 %v1450
      %1513 = vmatpush.bf16.msra.mxu0 %v1449
      %1514 = vmatpush.bf16.msra.mxu0 %v1448
      %1515 = vmatpush.bf16.msra.mxu0 %v1447
      %1516 = vmatpush.bf16.msra.mxu0 %v1446
      %1517 = vmatpush.bf16.msra.mxu0 %v1445
      %1518 = vmatpush.bf16.msra.mxu0 %v1444
      %1519 = vmatpush.bf16.msra.mxu0 %v1443
      %1520 = vmatmul.bf16.gmra.mxu0 %v1316
      %v1521 = vpop.f32.mrf.mxu0
      %v1522 = vadd.f32 %v1493, %v1521
      %v1523 = vpop.f32.mrf.mxu0
      %v1524 = vadd.f32 %v1495, %v1523
      %1525 = vmatmul.bf16.gmra.mxu0 %v1319
      %v1526 = vpop.f32.mrf.mxu0
      %v1527 = vadd.f32 %v1498, %v1526
      %v1528 = vpop.f32.mrf.mxu0
      %v1529 = vadd.f32 %v1500, %v1528
      %1530 = vmatmul.bf16.gmra.mxu0 %v1322
      %v1531 = vpop.f32.mrf.mxu0
      %v1532 = vadd.f32 %v1503, %v1531
      %v1533 = vpop.f32.mrf.mxu0
      %v1534 = vadd.f32 %v1505, %v1533
      %1535 = vmatmul.bf16.gmra.mxu0 %v1325
      %v1536 = vpop.f32.mrf.mxu0
      %v1537 = vadd.f32 %v1508, %v1536
      %v1538 = vpop.f32.mrf.mxu0
      %v1539 = vadd.f32 %v1510, %v1538
      %1540 = vdwg.mxu0
      %1541 = vmatpush.bf16.msra.mxu0 %v1458
      %1542 = vmatpush.bf16.msra.mxu0 %v1457
      %1543 = vmatpush.bf16.msra.mxu0 %v1456
      %1544 = vmatpush.bf16.msra.mxu0 %v1455
      %1545 = vmatpush.bf16.msra.mxu0 %v1454
      %1546 = vmatpush.bf16.msra.mxu0 %v1453
      %1547 = vmatpush.bf16.msra.mxu0 %v1452
      %1548 = vmatpush.bf16.msra.mxu0 %v1451
      %1549 = vmatmul.bf16.gmra.mxu0 %v1317
      %v1550 = vpop.f32.mrf.mxu0
      %v1551 = vadd.f32 %v1522, %v1550
      %v1552 = vpop.f32.mrf.mxu0
      %v1553 = vadd.f32 %v1524, %v1552
      %1554 = vmatmul.bf16.gmra.mxu0 %v1320
      %v1555 = vpop.f32.mrf.mxu0
      %v1556 = vadd.f32 %v1527, %v1555
      %v1557 = vpop.f32.mrf.mxu0
      %v1558 = vadd.f32 %v1529, %v1557
      %1559 = vmatmul.bf16.gmra.mxu0 %v1323
      %v1560 = vpop.f32.mrf.mxu0
      %v1561 = vadd.f32 %v1532, %v1560
      %v1562 = vpop.f32.mrf.mxu0
      %v1563 = vadd.f32 %v1534, %v1562
      %1564 = vmatmul.bf16.gmra.mxu0 %v1326
      %v1565 = vpop.f32.mrf.mxu0
      %v1566 = vadd.f32 %v1537, %v1565
      %v1567 = vpop.f32.mrf.mxu0
      %v1568 = vadd.f32 %v1539, %v1567
      %1569 = vdwg.mxu0
      %v1570 = vadd.f32 %v1156, %v1551
      %v1571 = vadd.f32 %v1158, %v1553
      %v1572 = vadd.f32 %v1161, %v1556
      %v1573 = vadd.f32 %v1163, %v1558
      %v1574 = vadd.f32 %v1166, %v1561
      %v1575 = vadd.f32 %v1168, %v1563
      %v1576 = vadd.f32 %v1171, %v1566
      %v1577 = vadd.f32 %v1173, %v1568
      %v1578 = vld [vmem:[%s230] sm:$0xff]
      %v1579 = vld [vmem:[%s230 + $0x8] sm:$0xff]
      %v1580 = vld [vmem:[%s230 + $0x10] sm:$0xff]
      %v1581 = vld [vmem:[%s230 + $0x18] sm:$0xff]
      %v1582 = vld [vmem:[%s230 + $0x20] sm:$0xff]
      %v1583 = vld [vmem:[%s230 + $0x28] sm:$0xff]
      %v1584 = vld [vmem:[%s230 + $0x30] sm:$0xff]
      %v1585 = vld [vmem:[%s230 + $0x38] sm:$0xff]
      %v1586 = vadd.f32 %v1570, %v1578
      %v1587 = vadd.f32 %v1571, %v1579
      %v1588 = vadd.f32 %v1572, %v1580
      %v1589 = vadd.f32 %v1573, %v1581
      %v1590 = vadd.f32 %v1574, %v1582
      %v1591 = vadd.f32 %v1575, %v1583
      %v1592 = vadd.f32 %v1576, %v1584
      %v1593 = vadd.f32 %v1577, %v1585
      %1594 = vst [vmem:[%s238] sm:$0xff] %v1586
      %1595 = vst [vmem:[%s238 + $0x8] sm:$0xff] %v1587
      %1596 = vst [vmem:[%s238 + $0x10] sm:$0xff] %v1588
      %1597 = vst [vmem:[%s238 + $0x18] sm:$0xff] %v1589
      %1598 = vst [vmem:[%s238 + $0x20] sm:$0xff] %v1590
      %1599 = vst [vmem:[%s238 + $0x28] sm:$0xff] %v1591
      %1600 = vst [vmem:[%s238 + $0x30] sm:$0xff] %v1592
      %1601 = vst [vmem:[%s238 + $0x38] sm:$0xff] %v1593
      %p1602 = scmp.lt.s32.totalorder %s19, 1
      %s1603 = scalar_select %p1602, %s19, 1
      %p1604 = scmp.lt.s32.totalorder %s18, 0
      %s1605 = scalar_select %p1604, %s18, 0
      %s1606 = smul.addr %s1603, 8
      %s1607 = sadd.s32 %s1605, %s1606
      %s1608 = smul.addr %s1607, 8
      %s1609 = scalar_lea.vmem %s3, %s1608
      // Predicated region
      $region33: #{basic_block_forward.3} parent=31 // pred_check
        %p1610 = pneg %p126
      $region34: #{basic_block_forward.3} parent=31 // pred_check_branch
        %1612 = sbr.rel (%p1610) target = $region36
      $region35: #{basic_block_forward.3} parent=31 // pred_region
        _
      $region36: #{basic_block_forward.3} parent=31 // pred_fallthru
        _
    $region32: #{basic_block_forward.3} parent=5 // pred_fallthru
      _
    %p1613 = scmp.le.s32.totalorder 2, %s9
    // Predicated region
    $region37: #{basic_block_forward.3} parent=5 // pred_check
      %p1614 = pneg %p1613
    $region38: #{basic_block_forward.3} parent=5 // pred_check_branch
      %1616 = sbr.rel (%p1614) target = $region40
    $region39: #{basic_block_forward.3} parent=5 // pred_region
      %s1617 = ssub.s32 %s9, 2
      // Predicated region
      $region41: #{basic_block_forward.3} parent=39 // pred_check
        %p1618 = pneg %p132
      $region42: #{basic_block_forward.3} parent=39 // pred_check_branch
        %1620 = sbr.rel (%p1618) target = $region44
      $region43: #{basic_block_forward.3} parent=39 // pred_region
        %p1621 = scmp.lt.s32.totalorder %s21, 1
        %s1622 = scalar_select %p1621, %s21, 1
        %p1623 = scmp.lt.s32.totalorder %s20, 0
        %s1624 = scalar_select %p1623, %s20, 0
        %s1625 = smul.addr %s1622, 8
        %s1626 = sadd.s32 %s1624, %s1625
        %s1627 = smul.addr %s1626, 8
        %s1628 = scalar_lea.vmem %s3, %s1627
      $region44: #{basic_block_forward.3} parent=39 // pred_fallthru
        _
    $region40: #{basic_block_forward.3} parent=5 // pred_fallthru
      _
  $region6: #{basic_block_forward.3} parent=0 // loop_footer
    %s13 = sadd.s32 1, %s9
  $region7: #{basic_block_forward.3} parent=0 // loop_footer_branch
    %8 = sbr.rel target = $region3
  $region8: #{basic_block_forward.3} parent=0 // loop_exit
    _

// kernel: basic_block_forward.2
$region0: #{basic_block_forward.2}
  #allocation0 [shape = 'u32[]', space=smem, size = 0x4, offset = 0x4, fixed_abs, tag = 'smem constant byte address 0x4 - core index']
  #allocation1 [shape = 'u32[72,128]{1,0:T(1,128)}', space=vmem, size = 0x9000, scoped, tag = 'internal scratch']
  %s0 = inlined_call_operand.vmem [shape: f32[2,36,9,4], index: 0, kind: input, shape index: {}]
  %s1 = inlined_call_operand.vmem [shape: f32[1,4], index: 1, kind: input, shape index: {}]
  %s2 = inlined_call_operand.vmem [shape: f32[1,4], index: 2, kind: input, shape index: {}]
  %s3 = inlined_call_operand.vmem [shape: bf16[9,4,128], index: 3, kind: input, shape index: {}]
  %s4 = inlined_call_operand.vmem [shape: f32[1,128], index: 4, kind: input, shape index: {}]
  %s5 = inlined_call_operand.vmem [shape: f32[1,128], index: 5, kind: input, shape index: {}]
  %s6 = inlined_call_operand.vmem [shape: f32[1,4], index: 6, kind: input, shape index: {}]
  %s7 = inlined_call_operand.vmem [shape: f32[1,4], index: 7, kind: input, shape index: {}]
  %s8 = inlined_call_operand.vmem [shape: bf16[9,4,128], index: 8, kind: input, shape index: {}]
  %s9 = inlined_call_operand.vmem [shape: bf16[2,8,8,128], index: 9, kind: output, shape index: {0}]
  %s10 = inlined_call_operand.vmem [shape: f32[2,8,8,128], index: 10, kind: output, shape index: {1}]
  %11 = xla_tuple %s9, %s10
  %s12 = sld [smem:[#allocation0]]
  $region77: #{basic_block_forward.2} parent=0
    _
  %s14 = ssub.s32 1, %s12
  %s15 = scalar_select 0, %s14, %s12
  loop: start=0, step=1, limit=4
  $region2: #{basic_block_forward.2} parent=0 // loop_pre_header
    _
  $region3: #{basic_block_forward.2} parent=0 // loop_header
    %s17 = sphi 0, %s21
    %p18 = scmp.ge.s32.totalorder %s17, 4
    %s24 = sphi 0, %s36
    %s25 = sphi 0, %s32
    %s26 = sphi 0, %s24
    %s27 = sphi 0, %s25
    %s28 = sphi 0, %s26
    %s29 = sphi 0, %s27
    %s39 = sphi 0, %s41
    %s42 = sphi 0, %s39
    %s43 = sphi 0, %s42
    %s59 = sphi 0, %s43
    %s63 = sphi 0, %s63
    %s65 = sphi 0, %s63
    %s66 = sphi 0, %s65
    %s80 = sphi 0, %s66
    %s84 = sphi 0, %s84
    %s86 = sphi 0, %s84
    %s87 = sphi 0, %s86
    %s101 = sphi 0, %s87
    %s107 = sphi 0, %s109
    %s110 = sphi 0, %s107
    %s111 = sphi 0, %s110
    %s127 = sphi 0, %s111
    %s133 = sphi 0, %s135
    %s136 = sphi 0, %s133
    %s137 = sphi 0, %s136
    %s153 = sphi 0, %s137
    %s159 = sphi 0, %s161
    %s162 = sphi 0, %s159
    %s163 = sphi 0, %s162
    %s179 = sphi 0, %s163
    %s183 = sphi 0, %s183
    %s185 = sphi 0, %s183
    %s186 = sphi 0, %s185
    %s200 = sphi 0, %s186
    %s204 = sphi 0, %s204
    %s206 = sphi 0, %s204
    %s207 = sphi 0, %s206
    %s221 = sphi 0, %s207
    %s227 = sphi 0, %s229
    %s230 = sphi 0, %s227
    %s231 = sphi 0, %s230
    %s247 = sphi 0, %s231
    %s255 = sphi 0, %s257
    %s258 = sphi 0, %s255
    %s259 = sphi 0, %s258
    %s275 = sphi 0, %s259
    %s283 = sphi 0, %s285
    %s286 = sphi 0, %s283
    %s287 = sphi 0, %s286
    %s303 = sphi 0, %s287
  $region4: #{basic_block_forward.2} parent=0 // loop_header_branch
    %20 = sbr.rel (%p18) target = $region8
  $region5: #{basic_block_forward.2} parent=0 // loop_body
    %s22 = ssub.s32 %s17, 1
    %s23 = ssub.s32 %s17, 2
    %s30 = sadd.s32 1, %s25
    %p31 = scmp.ge.s32.totalorder %s30, 2
    %s32 = scalar_select %p31, 0, %s30
    %s33 = sadd.s32 1, %s24
    %s34 = scalar_select %p31, %s33, %s24
    %p35 = scmp.ge.s32.totalorder %s34, 1
    %s36 = scalar_select %p35, 0, %s34
    %s37 = ssub.s32 %s25, %s32
    %p38 = scmp.eq.s32.totalorder %s37, 0
    %s40 = sadd.s32 %s39, 1
    %s41 = scalar_select %p38, %s39, %s40
    %p44 = pneg %p38
    %p45 = scmp.eq.s32.totalorder %s17, 1
    %p46 = por %p44, %p45
    %p47 = scmp.ne.s32.totalorder %s39, %s42
    %p48 = scmp.eq.s32.totalorder %s17, 0
    %p49 = por %p47, %p48
    %p50 = scmp.ne.s32.totalorder %s39, %s42
    %p51 = scmp.eq.s32.totalorder %s22, 1
    %p52 = por %p50, %p51
    %p53 = scmp.ne.s32.totalorder %s42, %s43
    %p54 = scmp.eq.s32.totalorder %s22, 0
    %p55 = por %p53, %p54
    %p56 = scmp.ne.s32.totalorder %s42, %s43
    %p57 = scmp.eq.s32.totalorder %s23, 1
    %p58 = por %p56, %p57
    %p60 = scmp.ne.s32.totalorder %s43, %s59
    %p61 = scmp.eq.s32.totalorder %s23, 0
    %p62 = por %p60, %p61
    %s64 = sadd.s32 %s63, 1
    %p67 = scmp.eq.s32.totalorder %s17, 1
    %p68 = scmp.ne.s32.totalorder %s63, %s65
    %p69 = scmp.eq.s32.totalorder %s17, 0
    %p70 = por %p68, %p69
    %p71 = scmp.ne.s32.totalorder %s63, %s65
    %p72 = scmp.eq.s32.totalorder %s22, 1
    %p73 = por %p71, %p72
    %p74 = scmp.ne.s32.totalorder %s65, %s66
    %p75 = scmp.eq.s32.totalorder %s22, 0
    %p76 = por %p74, %p75
    %p77 = scmp.ne.s32.totalorder %s65, %s66
    %p78 = scmp.eq.s32.totalorder %s23, 1
    %p79 = por %p77, %p78
    %p81 = scmp.ne.s32.totalorder %s66, %s80
    %p82 = scmp.eq.s32.totalorder %s23, 0
    %p83 = por %p81, %p82
    %s85 = sadd.s32 %s84, 1
    %p88 = scmp.eq.s32.totalorder %s17, 1
    %p89 = scmp.ne.s32.totalorder %s84, %s86
    %p90 = scmp.eq.s32.totalorder %s17, 0
    %p91 = por %p89, %p90
    %p92 = scmp.ne.s32.totalorder %s84, %s86
    %p93 = scmp.eq.s32.totalorder %s22, 1
    %p94 = por %p92, %p93
    %p95 = scmp.ne.s32.totalorder %s86, %s87
    %p96 = scmp.eq.s32.totalorder %s22, 0
    %p97 = por %p95, %p96
    %p98 = scmp.ne.s32.totalorder %s86, %s87
    %p99 = scmp.eq.s32.totalorder %s23, 1
    %p100 = por %p98, %p99
    %p102 = scmp.ne.s32.totalorder %s87, %s101
    %p103 = scmp.eq.s32.totalorder %s23, 0
    %p104 = por %p102, %p103
    %s105 = ssub.s32 %s24, %s36
    %p106 = scmp.eq.s32.totalorder %s105, 0
    %s108 = sadd.s32 %s107, 1
    %s109 = scalar_select %p106, %s107, %s108
    %p112 = pneg %p106
    %p113 = scmp.eq.s32.totalorder %s17, 1
    %p114 = por %p112, %p113
    %p115 = scmp.ne.s32.totalorder %s107, %s110
    %p116 = scmp.eq.s32.totalorder %s17, 0
    %p117 = por %p115, %p116
    %p118 = scmp.ne.s32.totalorder %s107, %s110
    %p119 = scmp.eq.s32.totalorder %s22, 1
    %p120 = por %p118, %p119
    %p121 = scmp.ne.s32.totalorder %s110, %s111
    %p122 = scmp.eq.s32.totalorder %s22, 0
    %p123 = por %p121, %p122
    %p124 = scmp.ne.s32.totalorder %s110, %s111
    %p125 = scmp.eq.s32.totalorder %s23, 1
    %p126 = por %p124, %p125
    %p128 = scmp.ne.s32.totalorder %s111, %s127
    %p129 = scmp.eq.s32.totalorder %s23, 0
    %p130 = por %p128, %p129
    %s131 = ssub.s32 %s24, %s36
    %p132 = scmp.eq.s32.totalorder %s131, 0
    %s134 = sadd.s32 %s133, 1
    %s135 = scalar_select %p132, %s133, %s134
    %p138 = pneg %p132
    %p139 = scmp.eq.s32.totalorder %s17, 1
    %p140 = por %p138, %p139
    %p141 = scmp.ne.s32.totalorder %s133, %s136
    %p142 = scmp.eq.s32.totalorder %s17, 0
    %p143 = por %p141, %p142
    %p144 = scmp.ne.s32.totalorder %s133, %s136
    %p145 = scmp.eq.s32.totalorder %s22, 1
    %p146 = por %p144, %p145
    %p147 = scmp.ne.s32.totalorder %s136, %s137
    %p148 = scmp.eq.s32.totalorder %s22, 0
    %p149 = por %p147, %p148
    %p150 = scmp.ne.s32.totalorder %s136, %s137
    %p151 = scmp.eq.s32.totalorder %s23, 1
    %p152 = por %p150, %p151
    %p154 = scmp.ne.s32.totalorder %s137, %s153
    %p155 = scmp.eq.s32.totalorder %s23, 0
    %p156 = por %p154, %p155
    %s157 = ssub.s32 %s24, %s36
    %p158 = scmp.eq.s32.totalorder %s157, 0
    %s160 = sadd.s32 %s159, 1
    %s161 = scalar_select %p158, %s159, %s160
    %p164 = pneg %p158
    %p165 = scmp.eq.s32.totalorder %s17, 1
    %p166 = por %p164, %p165
    %p167 = scmp.ne.s32.totalorder %s159, %s162
    %p168 = scmp.eq.s32.totalorder %s17, 0
    %p169 = por %p167, %p168
    %p170 = scmp.ne.s32.totalorder %s159, %s162
    %p171 = scmp.eq.s32.totalorder %s22, 1
    %p172 = por %p170, %p171
    %p173 = scmp.ne.s32.totalorder %s162, %s163
    %p174 = scmp.eq.s32.totalorder %s22, 0
    %p175 = por %p173, %p174
    %p176 = scmp.ne.s32.totalorder %s162, %s163
    %p177 = scmp.eq.s32.totalorder %s23, 1
    %p178 = por %p176, %p177
    %p180 = scmp.ne.s32.totalorder %s163, %s179
    %p181 = scmp.eq.s32.totalorder %s23, 0
    %p182 = por %p180, %p181
    %s184 = sadd.s32 %s183, 1
    %p187 = scmp.eq.s32.totalorder %s17, 1
    %p188 = scmp.ne.s32.totalorder %s183, %s185
    %p189 = scmp.eq.s32.totalorder %s17, 0
    %p190 = por %p188, %p189
    %p191 = scmp.ne.s32.totalorder %s183, %s185
    %p192 = scmp.eq.s32.totalorder %s22, 1
    %p193 = por %p191, %p192
    %p194 = scmp.ne.s32.totalorder %s185, %s186
    %p195 = scmp.eq.s32.totalorder %s22, 0
    %p196 = por %p194, %p195
    %p197 = scmp.ne.s32.totalorder %s185, %s186
    %p198 = scmp.eq.s32.totalorder %s23, 1
    %p199 = por %p197, %p198
    %p201 = scmp.ne.s32.totalorder %s186, %s200
    %p202 = scmp.eq.s32.totalorder %s23, 0
    %p203 = por %p201, %p202
    %s205 = sadd.s32 %s204, 1
    %p208 = scmp.eq.s32.totalorder %s17, 1
    %p209 = scmp.ne.s32.totalorder %s204, %s206
    %p210 = scmp.eq.s32.totalorder %s17, 0
    %p211 = por %p209, %p210
    %p212 = scmp.ne.s32.totalorder %s204, %s206
    %p213 = scmp.eq.s32.totalorder %s22, 1
    %p214 = por %p212, %p213
    %p215 = scmp.ne.s32.totalorder %s206, %s207
    %p216 = scmp.eq.s32.totalorder %s22, 0
    %p217 = por %p215, %p216
    %p218 = scmp.ne.s32.totalorder %s206, %s207
    %p219 = scmp.eq.s32.totalorder %s23, 1
    %p220 = por %p218, %p219
    %p222 = scmp.ne.s32.totalorder %s207, %s221
    %p223 = scmp.eq.s32.totalorder %s23, 0
    %p224 = por %p222, %p223
    %s225 = ssub.s32 %s24, %s36
    %p226 = scmp.eq.s32.totalorder %s225, 0
    %s228 = sadd.s32 %s227, 1
    %s229 = scalar_select %p226, %s227, %s228
    %p232 = pneg %p226
    %p233 = scmp.eq.s32.totalorder %s17, 1
    %p234 = por %p232, %p233
    %p235 = scmp.ne.s32.totalorder %s227, %s230
    %p236 = scmp.eq.s32.totalorder %s17, 0
    %p237 = por %p235, %p236
    %p238 = scmp.ne.s32.totalorder %s227, %s230
    %p239 = scmp.eq.s32.totalorder %s22, 1
    %p240 = por %p238, %p239
    %p241 = scmp.ne.s32.totalorder %s230, %s231
    %p242 = scmp.eq.s32.totalorder %s22, 0
    %p243 = por %p241, %p242
    %p244 = scmp.ne.s32.totalorder %s230, %s231
    %p245 = scmp.eq.s32.totalorder %s23, 1
    %p246 = por %p244, %p245
    %p248 = scmp.ne.s32.totalorder %s231, %s247
    %p249 = scmp.eq.s32.totalorder %s23, 0
    %p250 = por %p248, %p249
    %s251 = ssub.s32 %s25, %s32
    %s252 = ssub.s32 %s24, %s36
    %s253 = sor.u32 %s251, %s252
    %p254 = scmp.eq.s32.totalorder %s253, 0
    %s256 = sadd.s32 %s255, 1
    %s257 = scalar_select %p254, %s255, %s256
    %p260 = pneg %p254
    %p261 = scmp.eq.s32.totalorder %s17, 1
    %p262 = por %p260, %p261
    %p263 = scmp.ne.s32.totalorder %s255, %s258
    %p264 = scmp.eq.s32.totalorder %s17, 0
    %p265 = por %p263, %p264
    %p266 = scmp.ne.s32.totalorder %s255, %s258
    %p267 = scmp.eq.s32.totalorder %s22, 1
    %p268 = por %p266, %p267
    %p269 = scmp.ne.s32.totalorder %s258, %s259
    %p270 = scmp.eq.s32.totalorder %s22, 0
    %p271 = por %p269, %p270
    %p272 = scmp.ne.s32.totalorder %s258, %s259
    %p273 = scmp.eq.s32.totalorder %s23, 1
    %p274 = por %p272, %p273
    %p276 = scmp.ne.s32.totalorder %s259, %s275
    %p277 = scmp.eq.s32.totalorder %s23, 0
    %p278 = por %p276, %p277
    %s279 = ssub.s32 %s25, %s32
    %s280 = ssub.s32 %s24, %s36
    %s281 = sor.u32 %s279, %s280
    %p282 = scmp.eq.s32.totalorder %s281, 0
    %s284 = sadd.s32 %s283, 1
    %s285 = scalar_select %p282, %s283, %s284
    %p288 = pneg %p282
    %p289 = scmp.eq.s32.totalorder %s17, 1
    %p290 = por %p288, %p289
    %p291 = scmp.ne.s32.totalorder %s283, %s286
    %p292 = scmp.eq.s32.totalorder %s17, 0
    %p293 = por %p291, %p292
    %p294 = scmp.ne.s32.totalorder %s283, %s286
    %p295 = scmp.eq.s32.totalorder %s22, 1
    %p296 = por %p294, %p295
    %p297 = scmp.ne.s32.totalorder %s286, %s287
    %p298 = scmp.eq.s32.totalorder %s22, 0
    %p299 = por %p297, %p298
    %p300 = scmp.ne.s32.totalorder %s286, %s287
    %p301 = scmp.eq.s32.totalorder %s23, 1
    %p302 = por %p300, %p301
    %p304 = scmp.ne.s32.totalorder %s287, %s303
    %p305 = scmp.eq.s32.totalorder %s23, 0
    %p306 = por %p304, %p305
    %p307 = scmp.le.s32.totalorder 1, %s17
    %p308 = scmp.lt.s32.totalorder %s17, 3
    %p309 = pnand %p307, %p308
    %p310 = pneg %p309
    // Predicated region
    $region9: #{basic_block_forward.2} parent=5 // pred_check
      _
    $region10: #{basic_block_forward.2} parent=5 // pred_check_branch
      %312 = sbr.rel (%p309) target = $region12
    $region11: #{basic_block_forward.2} parent=5 // pred_region
      %s313 = ssub.s32 %s17, 1
      // Predicated region
      $region13: #{basic_block_forward.2} parent=11 // pred_check
        %p314 = pneg %p76
      $region14: #{basic_block_forward.2} parent=11 // pred_check_branch
        %316 = sbr.rel (%p314) target = $region16
      $region15: #{basic_block_forward.2} parent=11 // pred_region
        _
      $region16: #{basic_block_forward.2} parent=11 // pred_fallthru
        _
      // Predicated region
      $region17: #{basic_block_forward.2} parent=11 // pred_check
        %p317 = pneg %p97
      $region18: #{basic_block_forward.2} parent=11 // pred_check_branch
        %319 = sbr.rel (%p317) target = $region20
      $region19: #{basic_block_forward.2} parent=11 // pred_region
        _
      $region20: #{basic_block_forward.2} parent=11 // pred_fallthru
        _
      // Predicated region
      $region21: #{basic_block_forward.2} parent=11 // pred_check
        %p320 = pneg %p123
      $region22: #{basic_block_forward.2} parent=11 // pred_check_branch
        %322 = sbr.rel (%p320) target = $region24
      $region23: #{basic_block_forward.2} parent=11 // pred_region
        %p323 = scmp.lt.s32.totalorder %s26, 0
        %s324 = scalar_select %p323, %s26, 0
        %s325 = smul.addr %s324, 2
        %s326 = scalar_lea.vmem %s3, %s325
      $region24: #{basic_block_forward.2} parent=11 // pred_fallthru
        _
      // Predicated region
      $region25: #{basic_block_forward.2} parent=11 // pred_check
        %p327 = pneg %p149
      $region26: #{basic_block_forward.2} parent=11 // pred_check_branch
        %329 = sbr.rel (%p327) target = $region28
      $region27: #{basic_block_forward.2} parent=11 // pred_region
        %p330 = scmp.lt.s32.totalorder %s26, 0
        %s331 = scalar_select %p330, %s26, 0
        %s332 = scalar_lea.vmem %s4, %s331
      $region28: #{basic_block_forward.2} parent=11 // pred_fallthru
        _
      // Predicated region
      $region29: #{basic_block_forward.2} parent=11 // pred_check
        %p333 = pneg %p175
      $region30: #{basic_block_forward.2} parent=11 // pred_check_branch
        %335 = sbr.rel (%p333) target = $region32
      $region31: #{basic_block_forward.2} parent=11 // pred_region
        %p336 = scmp.lt.s32.totalorder %s26, 0
        %s337 = scalar_select %p336, %s26, 0
        %s338 = scalar_lea.vmem %s5, %s337
      $region32: #{basic_block_forward.2} parent=11 // pred_fallthru
        _
      // Predicated region
      $region33: #{basic_block_forward.2} parent=11 // pred_check
        %p339 = pneg %p196
      $region34: #{basic_block_forward.2} parent=11 // pred_check_branch
        %341 = sbr.rel (%p339) target = $region36
      $region35: #{basic_block_forward.2} parent=11 // pred_region
        _
      $region36: #{basic_block_forward.2} parent=11 // pred_fallthru
        _
      // Predicated region
      $region37: #{basic_block_forward.2} parent=11 // pred_check
        %p342 = pneg %p217
      $region38: #{basic_block_forward.2} parent=11 // pred_check_branch
        %344 = sbr.rel (%p342) target = $region40
      $region39: #{basic_block_forward.2} parent=11 // pred_region
        _
      $region40: #{basic_block_forward.2} parent=11 // pred_fallthru
        _
      // Predicated region
      $region41: #{basic_block_forward.2} parent=11 // pred_check
        %p345 = pneg %p243
      $region42: #{basic_block_forward.2} parent=11 // pred_check_branch
        %347 = sbr.rel (%p345) target = $region44
      $region43: #{basic_block_forward.2} parent=11 // pred_region
        %p348 = scmp.lt.s32.totalorder %s26, 0
        %s349 = scalar_select %p348, %s26, 0
        %s350 = smul.addr %s349, 2
        %s351 = scalar_lea.vmem %s8, %s350
      $region44: #{basic_block_forward.2} parent=11 // pred_fallthru
        _
    $region12: #{basic_block_forward.2} parent=5 // pred_fallthru
      _
    %p352 = scmp.lt.s32.totalorder %s17, 2
    // Predicated region
    $region45: #{basic_block_forward.2} parent=5 // pred_check
      %p353 = pneg %p352
    $region46: #{basic_block_forward.2} parent=5 // pred_check_branch
      %355 = sbr.rel (%p353) target = $region48
    $region47: #{basic_block_forward.2} parent=5 // pred_region
      // Predicated region
      $region49: #{basic_block_forward.2} parent=47 // pred_check
        %p356 = pneg %p49
      $region50: #{basic_block_forward.2} parent=47 // pred_check_branch
        %358 = sbr.rel (%p356) target = $region52
      $region51: #{basic_block_forward.2} parent=47 // pred_region
        %p359 = scmp.lt.s32.totalorder %s25, 1
        %s360 = scalar_select %p359, %s25, 1
        %s361 = smul.addr %s360, 72
        %s362 = smul.addr %s361, 8
        %s363 = scalar_lea.vmem %s0, %s362
      $region52: #{basic_block_forward.2} parent=47 // pred_fallthru
        _
    $region48: #{basic_block_forward.2} parent=5 // pred_fallthru
      _
    %p364 = scmp.le.s32.totalorder 1, %s17
    %p365 = scmp.lt.s32.totalorder %s17, 3
    %p366 = pnand %p364, %p365
    %p367 = pneg %p366
    // Predicated region
    $region53: #{basic_block_forward.2} parent=5 // pred_check
      _
    $region54: #{basic_block_forward.2} parent=5 // pred_check_branch
      %369 = sbr.rel (%p366) target = $region56
    $region55: #{basic_block_forward.2} parent=5 // pred_region
      %s370 = ssub.s32 %s17, 1
      %p371 = scmp.lt.s32.totalorder %s27, 1
      %s372 = scalar_select %p371, %s27, 1
      %s373 = smul.addr %s372, 72
      %s374 = smul.addr %s373, 8
      %s375 = scalar_lea.vmem %s0, %s374
      %p376 = pneg %p55
      %p377 = pneg %p52
      %p378 = pneg %p76
      %p379 = pneg %p73
      %p380 = pneg %p97
      %p381 = pneg %p94
      %p382 = scmp.lt.s32.totalorder %s26, 0
      %s383 = scalar_select %p382, %s26, 0
      %s384 = smul.addr %s383, 2
      %s385 = scalar_lea.vmem %s3, %s384
      %p386 = pneg %p123
      %p387 = pneg %p120
      %p388 = scmp.lt.s32.totalorder %s26, 0
      %s389 = scalar_select %p388, %s26, 0
      %s390 = scalar_lea.vmem %s4, %s389
      %p391 = pneg %p149
      %p392 = pneg %p146
      %p393 = scmp.lt.s32.totalorder %s26, 0
      %s394 = scalar_select %p393, %s26, 0
      %s395 = scalar_lea.vmem %s5, %s394
      %p396 = pneg %p175
      %p397 = pneg %p172
      %p398 = pneg %p196
      %p399 = pneg %p193
      %p400 = pneg %p217
      %p401 = pneg %p214
      %p402 = scmp.lt.s32.totalorder %s26, 0
      %s403 = scalar_select %p402, %s26, 0
      %s404 = smul.addr %s403, 2
      %s405 = scalar_lea.vmem %s8, %s404
      %p406 = pneg %p243
      %p407 = pneg %p240
      %p408 = pneg %p271
      %p409 = pneg %p268
      %p410 = scmp.lt.s32.totalorder %s27, 1
      %s411 = scalar_select %p410, %s27, 1
      %p412 = scmp.lt.s32.totalorder %s26, 0
      %s413 = scalar_select %p412, %s26, 0
      %s414 = smul.addr %s411, 8
      %s415 = sadd.s32 %s413, %s414
      %s416 = smul.addr %s415, 4
      %s417 = scalar_lea.vmem %s9, %s416
      %p418 = pneg %p299
      %p419 = pneg %p296
      %p420 = scmp.lt.s32.totalorder %s27, 1
      %s421 = scalar_select %p420, %s27, 1
      %p422 = scmp.lt.s32.totalorder %s26, 0
      %s423 = scalar_select %p422, %s26, 0
      %s424 = smul.addr %s421, 8
      %s425 = sadd.s32 %s423, %s424
      %s426 = smul.addr %s425, 8
      %s427 = scalar_lea.vmem %s10, %s426
      %p428 = scmp.lt.s32.totalorder %s27, 1
      %s429 = scalar_select %p428, %s27, 1
      %s430 = smul.addr %s429, 72
      %s431 = smul.addr %s430, 8
      %s432 = scalar_lea.vmem %s0, %s431
      %p433 = scmp.lt.s32.totalorder %s26, 0
      %s434 = scalar_select %p433, %s26, 0
      %s435 = smul.addr %s434, 2
      %s436 = scalar_lea.vmem %s3, %s435
      %p437 = scmp.lt.s32.totalorder %s26, 0
      %s438 = scalar_select %p437, %s26, 0
      %s439 = scalar_lea.vmem %s4, %s438
      %p440 = scmp.lt.s32.totalorder %s26, 0
      %s441 = scalar_select %p440, %s26, 0
      %s442 = scalar_lea.vmem %s5, %s441
      %p443 = scmp.lt.s32.totalorder %s26, 0
      %s444 = scalar_select %p443, %s26, 0
      %s445 = smul.addr %s444, 2
      %s446 = scalar_lea.vmem %s8, %s445
      %p447 = scmp.lt.s32.totalorder %s27, 1
      %s448 = scalar_select %p447, %s27, 1
      %p449 = scmp.lt.s32.totalorder %s26, 0
      %s450 = scalar_select %p449, %s26, 0
      %s451 = smul.addr %s448, 8
      %s452 = sadd.s32 %s450, %s451
      %s453 = smul.addr %s452, 4
      %s454 = scalar_lea.vmem %s9, %s453
      %p455 = scmp.lt.s32.totalorder %s27, 1
      %s456 = scalar_select %p455, %s27, 1
      %p457 = scmp.lt.s32.totalorder %s26, 0
      %s458 = scalar_select %p457, %s26, 0
      %s459 = smul.addr %s456, 8
      %s460 = sadd.s32 %s458, %s459
      %s461 = smul.addr %s460, 8
      %s462 = scalar_lea.vmem %s10, %s461
      %v464 = vld [vmem:[%s432] sm:$0xff]
      %v465 = vld [vmem:[%s432 + $0x8] sm:$0x1]
      %v466 = vld [vmem:[%s432 + $0x10] sm:$0xff]
      %v467 = vld [vmem:[%s432 + $0x18] sm:$0x1]
      %v468 = vld [vmem:[%s432 + $0x20] sm:$0xff]
      %v469 = vld [vmem:[%s432 + $0x28] sm:$0x1]
      %v470 = vld [vmem:[%s432 + $0x30] sm:$0xff]
      %v471 = vld [vmem:[%s432 + $0x38] sm:$0x1]
      %v472 = vld [vmem:[%s432 + $0x40] sm:$0xff]
      %v473 = vld [vmem:[%s432 + $0x48] sm:$0x1]
      %v474 = vld [vmem:[%s432 + $0x50] sm:$0xff]
      %v475 = vld [vmem:[%s432 + $0x58] sm:$0x1]
      %v476 = vld [vmem:[%s432 + $0x60] sm:$0xff]
      %v477 = vld [vmem:[%s432 + $0x68] sm:$0x1]
      %v478 = vld [vmem:[%s432 + $0x70] sm:$0xff]
      %v479 = vld [vmem:[%s432 + $0x78] sm:$0x1]
      %v480 = vld [vmem:[%s432 + $0x80] sm:$0xff]
      %v481 = vld [vmem:[%s432 + $0x88] sm:$0x1]
      %v482 = vld [vmem:[%s432 + $0x90] sm:$0xff]
      %v483 = vld [vmem:[%s432 + $0xa0] sm:$0xff]
      %v484 = vld [vmem:[%s432 + $0xb0] sm:$0xff]
      %v485 = vld [vmem:[%s432 + $0xc0] sm:$0xff]
      %v486 = vld [vmem:[%s432 + $0xd0] sm:$0xff]
      %v487 = vld [vmem:[%s432 + $0xe0] sm:$0xff]
      %v488 = vld [vmem:[%s432 + $0xf0] sm:$0xff]
      %v489 = vld [vmem:[%s432 + $0x100] sm:$0xff]
      %v490 = vld [vmem:[%s432 + $0x110] sm:$0xff]
      %v491 = vld [vmem:[%s432 + $0x120] sm:$0xff]
      %v492 = vld [vmem:[%s432 + $0x128] sm:$0x1]
      %v493 = vld [vmem:[%s432 + $0x130] sm:$0xff]
      %v494 = vld [vmem:[%s432 + $0x138] sm:$0x1]
      %v495 = vld [vmem:[%s432 + $0x140] sm:$0xff]
      %v496 = vld [vmem:[%s432 + $0x148] sm:$0x1]
      %v497 = vld [vmem:[%s432 + $0x150] sm:$0xff]
      %v498 = vld [vmem:[%s432 + $0x158] sm:$0x1]
      %v499 = vld [vmem:[%s432 + $0x160] sm:$0xff]
      %v500 = vld [vmem:[%s432 + $0x168] sm:$0x1]
      %v501 = vld [vmem:[%s432 + $0x170] sm:$0xff]
      %v502 = vld [vmem:[%s432 + $0x178] sm:$0x1]
      %v503 = vld [vmem:[%s432 + $0x180] sm:$0xff]
      %v504 = vld [vmem:[%s432 + $0x188] sm:$0x1]
      %v505 = vld [vmem:[%s432 + $0x190] sm:$0xff]
      %v506 = vld [vmem:[%s432 + $0x198] sm:$0x1]
      %v507 = vld [vmem:[%s432 + $0x1b0] sm:$0xff]
      %v508 = vld [vmem:[%s432 + $0x1c0] sm:$0xff]
      %v509 = vld [vmem:[%s432 + $0x1d0] sm:$0xff]
      %v510 = vld [vmem:[%s432 + $0x1e0] sm:$0xff]
      %v511 = vld [vmem:[%s432 + $0x1f0] sm:$0xff]
      %v512 = vld [vmem:[%s432 + $0x200] sm:$0xff]
      %v513 = vld [vmem:[%s432 + $0x210] sm:$0xff]
      %v514 = vld [vmem:[%s432 + $0x220] sm:$0xff]
      %v515 = vlaneseq
      %v516 = vshrl.u32 %v515, 7
      %v517 = vadd.s32 %v516, 8
      %vm518 = vcmp.ge.s32.totalorder %v516, 1
      %vm519 = vcmp.ge.s32.totalorder %v517, 1
      %vm520 = vmand 0, %vm518
      %vm521 = vmand 0, %vm519
      %vm522 = vmand 1, %vm518
      %vm523 = vmand 1, %vm519
      %vm524 = vcmp.le.s32.totalorder %v516, 8
      %vm525 = vcmp.le.s32.totalorder %v517, 8
      %vm526 = vmand %vm520, %vm524
      %vm527 = vmand %vm521, %vm525
      %vm528 = vmand %vm522, %vm524
      %vm529 = vmand %vm523, %vm525
      %vm530 = vcmp.ge.s32.totalorder %v516, 0
      %vm531 = vcmp.ge.s32.totalorder %v517, 0
      %vm532 = vmand 0, %vm530
      %vm533 = vmand 0, %vm531
      %vm534 = vmand 1, %vm530
      %vm535 = vcmp.le.s32.totalorder %v516, 7
      %vm536 = vcmp.le.s32.totalorder %v517, 7
      %vm537 = vmand %vm532, %vm535
      %vm538 = vmand %vm533, %vm536
      %vm539 = vmand %vm534, %vm535
      %vm540 = vmor %vm526, %vm537
      %vm541 = vmor %vm527, %vm538
      %vm542 = vmor %vm528, %vm537
      %vm543 = vmor %vm529, %vm538
      %vm544 = vmor %vm526, %vm539
      %vm545 = vmor %vm540, %vm526
      %vm546 = vmor %vm541, %vm527
      %vm547 = vmor %vm542, %vm526
      %vm548 = vmor %vm543, %vm527
      %vm549 = vmor %vm544, %vm526
      %vm550 = vmor %vm540, %vm528
      %vm551 = vmor %vm541, %vm529
      %vm552 = vmor %vm545, %vm537
      %vm553 = vmor %vm546, %vm538
      %vm554 = vmor %vm547, %vm537
      %vm555 = vmor %vm548, %vm538
      %vm556 = vmor %vm549, %vm537
      %vm557 = vmor %vm550, %vm537
      %vm558 = vmor %vm551, %vm538
      %vm559 = vmor %vm545, %vm539
      %v560 = vsel %vm552, 1, 0
      %v561 = vsel %vm553, 1, 0
      %v562 = vsel %vm554, 1, 0
      %v563 = vsel %vm555, 1, 0
      %v564 = vsel %vm556, 1, 0
      %v565 = vsel %vm557, 1, 0
      %v566 = vsel %vm558, 1, 0
      %v567 = vsel %vm559, 1, 0
      %v568 = vcvt.s32.f32 %v560
      %v569 = vcvt.s32.f32 %v561
      %v570 = vcvt.s32.f32 %v562
      %v571 = vcvt.s32.f32 %v563
      %v572 = vcvt.s32.f32 %v564
      %v573 = vcvt.s32.f32 %v565
      %v574 = vcvt.s32.f32 %v566
      %v575 = vcvt.s32.f32 %v567
      %v576 = vld [vmem:[%s1] sm:$0x1]
      %v577 = vld [vmem:[%s2] sm:$0x1]
      %v579 = vperm.slane %v576, 0
      %v581 = vmul.f32 %v464, %v579
      %v582 = vmul.f32 %v465, %v579
      %v583 = vmul.f32 %v466, %v579
      %v584 = vmul.f32 %v467, %v579
      %v585 = vmul.f32 %v468, %v579
      %v586 = vmul.f32 %v469, %v579
      %v587 = vmul.f32 %v470, %v579
      %v588 = vmul.f32 %v471, %v579
      %v589 = vmul.f32 %v472, %v579
      %v590 = vmul.f32 %v473, %v579
      %v591 = vmul.f32 %v474, %v579
      %v592 = vmul.f32 %v475, %v579
      %v593 = vmul.f32 %v476, %v579
      %v594 = vmul.f32 %v477, %v579
      %v595 = vmul.f32 %v478, %v579
      %v596 = vmul.f32 %v479, %v579
      %v597 = vmul.f32 %v480, %v579
      %v598 = vmul.f32 %v481, %v579
      %v599 = vmul.f32 %v482, %v579
      %v600 = vmul.f32 %v483, %v579
      %v601 = vmul.f32 %v484, %v579
      %v602 = vmul.f32 %v485, %v579
      %v603 = vmul.f32 %v486, %v579
      %v604 = vmul.f32 %v487, %v579
      %v605 = vmul.f32 %v488, %v579
      %v606 = vmul.f32 %v489, %v579
      %v607 = vmul.f32 %v490, %v579
      %v608 = vmul.f32 %v491, %v579
      %v609 = vmul.f32 %v492, %v579
      %v610 = vmul.f32 %v493, %v579
      %v611 = vmul.f32 %v494, %v579
      %v612 = vmul.f32 %v495, %v579
      %v613 = vmul.f32 %v496, %v579
      %v614 = vmul.f32 %v497, %v579
      %v615 = vmul.f32 %v498, %v579
      %v616 = vmul.f32 %v499, %v579
      %v617 = vmul.f32 %v500, %v579
      %v618 = vmul.f32 %v501, %v579
      %v619 = vmul.f32 %v502, %v579
      %v620 = vmul.f32 %v503, %v579
      %v621 = vmul.f32 %v504, %v579
      %v622 = vmul.f32 %v505, %v579
      %v623 = vmul.f32 %v506, %v579
      %v624 = vmul.f32 %v507, %v579
      %v625 = vmul.f32 %v508, %v579
      %v626 = vmul.f32 %v509, %v579
      %v627 = vmul.f32 %v510, %v579
      %v628 = vmul.f32 %v511, %v579
      %v629 = vmul.f32 %v512, %v579
      %v630 = vmul.f32 %v513, %v579
      %v631 = vmul.f32 %v514, %v579
      %v633 = vperm.slane %v577, 0
      %v635 = vadd.f32 %v581, %v633
      %v636 = vadd.f32 %v582, %v633
      %v637 = vadd.f32 %v583, %v633
      %v638 = vadd.f32 %v584, %v633
      %v639 = vadd.f32 %v585, %v633
      %v640 = vadd.f32 %v586, %v633
      %v641 = vadd.f32 %v587, %v633
      %v642 = vadd.f32 %v588, %v633
      %v643 = vadd.f32 %v589, %v633
      %v644 = vadd.f32 %v590, %v633
      %v645 = vadd.f32 %v591, %v633
      %v646 = vadd.f32 %v592, %v633
      %v647 = vadd.f32 %v593, %v633
      %v648 = vadd.f32 %v594, %v633
      %v649 = vadd.f32 %v595, %v633
      %v650 = vadd.f32 %v596, %v633
      %v651 = vadd.f32 %v597, %v633
      %v652 = vadd.f32 %v598, %v633
      %v653 = vadd.f32 %v599, %v633
      %v654 = vadd.f32 %v600, %v633
      %v655 = vadd.f32 %v601, %v633
      %v656 = vadd.f32 %v602, %v633
      %v657 = vadd.f32 %v603, %v633
      %v658 = vadd.f32 %v604, %v633
      %v659 = vadd.f32 %v605, %v633
      %v660 = vadd.f32 %v606, %v633
      %v661 = vadd.f32 %v607, %v633
      %v662 = vadd.f32 %v608, %v633
      %v663 = vadd.f32 %v609, %v633
      %v664 = vadd.f32 %v610, %v633
      %v665 = vadd.f32 %v611, %v633
      %v666 = vadd.f32 %v612, %v633
      %v667 = vadd.f32 %v613, %v633
      %v668 = vadd.f32 %v614, %v633
      %v669 = vadd.f32 %v615, %v633
      %v670 = vadd.f32 %v616, %v633
      %v671 = vadd.f32 %v617, %v633
      %v672 = vadd.f32 %v618, %v633
      %v673 = vadd.f32 %v619, %v633
      %v674 = vadd.f32 %v620, %v633
      %v675 = vadd.f32 %v621, %v633
      %v676 = vadd.f32 %v622, %v633
      %v677 = vadd.f32 %v623, %v633
      %v678 = vadd.f32 %v624, %v633
      %v679 = vadd.f32 %v625, %v633
      %v680 = vadd.f32 %v626, %v633
      %v681 = vadd.f32 %v627, %v633
      %v682 = vadd.f32 %v628, %v633
      %v683 = vadd.f32 %v629, %v633
      %v684 = vadd.f32 %v630, %v633
      %v685 = vadd.f32 %v631, %v633
      %v686 = vmax.f32 %v635, 0.0
      %v687 = vmax.f32 %v636, 0.0
      %v688 = vmax.f32 %v637, 0.0
      %v689 = vmax.f32 %v638, 0.0
      %v690 = vmax.f32 %v639, 0.0
      %v691 = vmax.f32 %v640, 0.0
      %v692 = vmax.f32 %v641, 0.0
      %v693 = vmax.f32 %v642, 0.0
      %v694 = vmax.f32 %v643, 0.0
      %v695 = vmax.f32 %v644, 0.0
      %v696 = vmax.f32 %v645, 0.0
      %v697 = vmax.f32 %v646, 0.0
      %v698 = vmax.f32 %v647, 0.0
      %v699 = vmax.f32 %v648, 0.0
      %v700 = vmax.f32 %v649, 0.0
      %v701 = vmax.f32 %v650, 0.0
      %v702 = vmax.f32 %v651, 0.0
      %v703 = vmax.f32 %v652, 0.0
      %v704 = vmax.f32 %v653, 0.0
      %v705 = vmax.f32 %v654, 0.0
      %v706 = vmax.f32 %v655, 0.0
      %v707 = vmax.f32 %v656, 0.0
      %v708 = vmax.f32 %v657, 0.0
      %v709 = vmax.f32 %v658, 0.0
      %v710 = vmax.f32 %v659, 0.0
      %v711 = vmax.f32 %v660, 0.0
      %v712 = vmax.f32 %v661, 0.0
      %v713 = vmax.f32 %v662, 0.0
      %v714 = vmax.f32 %v663, 0.0
      %v715 = vmax.f32 %v664, 0.0
      %v716 = vmax.f32 %v665, 0.0
      %v717 = vmax.f32 %v666, 0.0
      %v718 = vmax.f32 %v667, 0.0
      %v719 = vmax.f32 %v668, 0.0
      %v720 = vmax.f32 %v669, 0.0
      %v721 = vmax.f32 %v670, 0.0
      %v722 = vmax.f32 %v671, 0.0
      %v723 = vmax.f32 %v672, 0.0
      %v724 = vmax.f32 %v673, 0.0
      %v725 = vmax.f32 %v674, 0.0
      %v726 = vmax.f32 %v675, 0.0
      %v727 = vmax.f32 %v676, 0.0
      %v728 = vmax.f32 %v677, 0.0
      %v729 = vmax.f32 %v678, 0.0
      %v730 = vmax.f32 %v679, 0.0
      %v731 = vmax.f32 %v680, 0.0
      %v732 = vmax.f32 %v681, 0.0
      %v733 = vmax.f32 %v682, 0.0
      %v734 = vmax.f32 %v683, 0.0
      %v735 = vmax.f32 %v684, 0.0
      %v736 = vmax.f32 %v685, 0.0
      %v737 = vmul.f32 %v686, %v568
      %v738 = vmul.f32 %v687, %v569
      %v739 = vmul.f32 %v688, %v570
      %v740 = vmul.f32 %v689, %v571
      %v741 = vmul.f32 %v690, %v570
      %v742 = vmul.f32 %v691, %v571
      %v743 = vmul.f32 %v692, %v570
      %v744 = vmul.f32 %v693, %v571
      %v745 = vmul.f32 %v694, %v570
      %v746 = vmul.f32 %v695, %v571
      %v747 = vmul.f32 %v696, %v570
      %v748 = vmul.f32 %v697, %v571
      %v749 = vmul.f32 %v698, %v570
      %v750 = vmul.f32 %v699, %v571
      %v751 = vmul.f32 %v700, %v570
      %v752 = vmul.f32 %v701, %v571
      %v753 = vmul.f32 %v702, %v570
      %v754 = vmul.f32 %v703, %v571
      %v755 = vmul.f32 %v704, %v568
      %v756 = vmul.f32 %v705, %v572
      %v757 = vmul.f32 %v706, %v572
      %v758 = vmul.f32 %v707, %v572
      %v759 = vmul.f32 %v708, %v572
      %v760 = vmul.f32 %v709, %v572
      %v761 = vmul.f32 %v710, %v572
      %v762 = vmul.f32 %v711, %v572
      %v763 = vmul.f32 %v712, %v572
      %v764 = vmul.f32 %v713, %v573
      %v765 = vmul.f32 %v714, %v574
      %v766 = vmul.f32 %v715, %v573
      %v767 = vmul.f32 %v716, %v574
      %v768 = vmul.f32 %v717, %v573
      %v769 = vmul.f32 %v718, %v574
      %v770 = vmul.f32 %v719, %v573
      %v771 = vmul.f32 %v720, %v574
      %v772 = vmul.f32 %v721, %v573
      %v773 = vmul.f32 %v722, %v574
      %v774 = vmul.f32 %v723, %v573
      %v775 = vmul.f32 %v724, %v574
      %v776 = vmul.f32 %v725, %v573
      %v777 = vmul.f32 %v726, %v574
      %v778 = vmul.f32 %v727, %v573
      %v779 = vmul.f32 %v728, %v574
      %v780 = vmul.f32 %v729, %v575
      %v781 = vmul.f32 %v730, %v575
      %v782 = vmul.f32 %v731, %v575
      %v783 = vmul.f32 %v732, %v575
      %v784 = vmul.f32 %v733, %v575
      %v785 = vmul.f32 %v734, %v575
      %v786 = vmul.f32 %v735, %v575
      %v787 = vmul.f32 %v736, %v575
      %v788 = vpack.c.bf16 %v737, %v737
      %v789 = vpack.c.bf16 %v738, %v738
      %v790 = vpack.c.bf16 %v739, %v739
      %v791 = vpack.c.bf16 %v740, %v740
      %v792 = vpack.c.bf16 %v741, %v741
      %v793 = vpack.c.bf16 %v742, %v742
      %v794 = vpack.c.bf16 %v743, %v743
      %v795 = vpack.c.bf16 %v744, %v744
      %v796 = vpack.c.bf16 %v745, %v745
      %v797 = vpack.c.bf16 %v746, %v746
      %v798 = vpack.c.bf16 %v747, %v747
      %v799 = vpack.c.bf16 %v748, %v748
      %v800 = vpack.c.bf16 %v749, %v749
      %v801 = vpack.c.bf16 %v750, %v750
      %v802 = vpack.c.bf16 %v751, %v751
      %v803 = vpack.c.bf16 %v752, %v752
      %v804 = vpack.c.bf16 %v753, %v753
      %v805 = vpack.c.bf16 %v754, %v754
      %v806 = vpack.c.bf16 %v755, %v755
      %v807 = vpack.c.bf16 %v756, %v756
      %v808 = vpack.c.bf16 %v757, %v757
      %v809 = vpack.c.bf16 %v758, %v758
      %v810 = vpack.c.bf16 %v759, %v759
      %v811 = vpack.c.bf16 %v760, %v760
      %v812 = vpack.c.bf16 %v761, %v761
      %v813 = vpack.c.bf16 %v762, %v762
      %v814 = vpack.c.bf16 %v763, %v763
      %v815 = vpack.c.bf16 %v764, %v764
      %v816 = vpack.c.bf16 %v765, %v765
      %v817 = vpack.c.bf16 %v766, %v766
      %v818 = vpack.c.bf16 %v767, %v767
      %v819 = vpack.c.bf16 %v768, %v768
      %v820 = vpack.c.bf16 %v769, %v769
      %v821 = vpack.c.bf16 %v770, %v770
      %v822 = vpack.c.bf16 %v771, %v771
      %v823 = vpack.c.bf16 %v772, %v772
      %v824 = vpack.c.bf16 %v773, %v773
      %v825 = vpack.c.bf16 %v774, %v774
      %v826 = vpack.c.bf16 %v775, %v775
      %v827 = vpack.c.bf16 %v776, %v776
      %v828 = vpack.c.bf16 %v777, %v777
      %v829 = vpack.c.bf16 %v778, %v778
      %v830 = vpack.c.bf16 %v779, %v779
      %v831 = vpack.c.bf16 %v780, %v780
      %v832 = vpack.c.bf16 %v781, %v781
      %v833 = vpack.c.bf16 %v782, %v782
      %v834 = vpack.c.bf16 %v783, %v783
      %v835 = vpack.c.bf16 %v784, %v784
      %v836 = vpack.c.bf16 %v785, %v785
      %v837 = vpack.c.bf16 %v786, %v786
      %v838 = vpack.c.bf16 %v787, %v787
      %v839 = vld [vmem:[%s436] sm:$0x3]
      %s840 = scalar_lea.vmem %s436, 2
      %v841 = vld [vmem:[%s840] sm:$0x3]
      %v850 = vunpack.c.l.b16 %v806
      %v851 = vunpack.c.l.b16 %v807
      %v852 = vunpack.c.l.b16 %v808
      %v853 = vunpack.c.l.b16 %v809
      %v854 = vunpack.c.l.b16 %v810
      %v855 = vunpack.c.l.b16 %v811
      %v856 = vunpack.c.l.b16 %v812
      %v857 = vunpack.c.l.b16 %v813
      %v858 = vpack.c.b16 %v851, %v850
      %v859 = vpack.c.b16 %v853, %v852
      %v860 = vpack.c.b16 %v855, %v854
      %v861 = vpack.c.b16 %v857, %v856
      %vm862 = vcmask 31744
      %v864 = vsel %vm862, %v858, 0
      %v867 = vsel %vm862, %v859, 0
      %v870 = vsel %vm862, %v860, 0
      %v873 = vsel %vm862, %v861, 0
      %vm875 = vcmask 1041408
      %v877 = vsel %vm875, %v841, 0
      %879 = vmatpush.bf16.msra.mxu0 0
      %880 = vmatpush.bf16.msra.mxu0 0
      %881 = vmatpush.bf16.msra.mxu0 0
      %882 = vmatpush.bf16.msra.mxu0 0
      %883 = vmatpush.bf16.msra.mxu0 0
      %884 = vmatpush.bf16.msra.mxu0 0
      %885 = vmatpush.bf16.msra.mxu0 0
      %886 = vmatpush.bf16.msra.mxu0 %v877
      %887 = vmatmul.bf16.gmra.mxu0 %v864
      %v888 = vpop.f32.mrf.mxu0
      %v889 = vadd.f32 0.0, %v888
      %v890 = vpop.f32.mrf.mxu0
      %v891 = vadd.f32 0.0, %v890
      %892 = vmatmul.bf16.gmra.mxu0 %v867
      %v893 = vpop.f32.mrf.mxu0
      %v894 = vadd.f32 0.0, %v893
      %v895 = vpop.f32.mrf.mxu0
      %v896 = vadd.f32 0.0, %v895
      %897 = vmatmul.bf16.gmra.mxu0 %v870
      %v898 = vpop.f32.mrf.mxu0
      %v899 = vadd.f32 0.0, %v898
      %v900 = vpop.f32.mrf.mxu0
      %v901 = vadd.f32 0.0, %v900
      %902 = vmatmul.bf16.gmra.mxu0 %v873
      %v903 = vpop.f32.mrf.mxu0
      %v904 = vadd.f32 0.0, %v903
      %v905 = vpop.f32.mrf.mxu0
      %v906 = vadd.f32 0.0, %v905
      %907 = vdwg.mxu0
      %v916 = vunpack.c.l.b16 %v788
      %v917 = vunpack.c.l.b16 %v790
      %v918 = vunpack.c.l.b16 %v792
      %v919 = vunpack.c.l.b16 %v794
      %v920 = vunpack.c.l.b16 %v796
      %v921 = vunpack.c.l.b16 %v798
      %v922 = vunpack.c.l.b16 %v800
      %v923 = vunpack.c.l.b16 %v802
      %v924 = vpack.c.b16 %v917, %v916
      %v925 = vpack.c.b16 %v919, %v918
      %v926 = vpack.c.b16 %v921, %v920
      %v927 = vpack.c.b16 %v923, %v922
      %v929 = vsel %vm862, %v924, 0
      %v932 = vsel %vm862, %v925, 0
      %v935 = vsel %vm862, %v926, 0
      %v938 = vsel %vm862, %v927, 0
      %v941 = vsel %vm875, %v839, 0
      %943 = vmatpush.bf16.msra.mxu0 0
      %944 = vmatpush.bf16.msra.mxu0 0
      %945 = vmatpush.bf16.msra.mxu0 0
      %946 = vmatpush.bf16.msra.mxu0 0
      %947 = vmatpush.bf16.msra.mxu0 0
      %948 = vmatpush.bf16.msra.mxu0 0
      %949 = vmatpush.bf16.msra.mxu0 0
      %950 = vmatpush.bf16.msra.mxu0 %v941
      %951 = vmatmul.bf16.gmra.mxu0 %v929
      %v952 = vpop.f32.mrf.mxu0
      %v953 = vadd.f32 %v889, %v952
      %v954 = vpop.f32.mrf.mxu0
      %v955 = vadd.f32 %v891, %v954
      %956 = vmatmul.bf16.gmra.mxu0 %v932
      %v957 = vpop.f32.mrf.mxu0
      %v958 = vadd.f32 %v894, %v957
      %v959 = vpop.f32.mrf.mxu0
      %v960 = vadd.f32 %v896, %v959
      %961 = vmatmul.bf16.gmra.mxu0 %v935
      %v962 = vpop.f32.mrf.mxu0
      %v963 = vadd.f32 %v899, %v962
      %v964 = vpop.f32.mrf.mxu0
      %v965 = vadd.f32 %v901, %v964
      %966 = vmatmul.bf16.gmra.mxu0 %v938
      %v967 = vpop.f32.mrf.mxu0
      %v968 = vadd.f32 %v904, %v967
      %v969 = vpop.f32.mrf.mxu0
      %v970 = vadd.f32 %v906, %v969
      %971 = vdwg.mxu0
      %vm972 = vsmask.f32 3328
      %vm973 = vsmask.f32 7440
      %vm974 = vmor %vm972, %vm973
      %v976 = vshrl.u32 %v788, 16
      %v978 = vrot.slane %v976, 4
      %v979 = vshll.u32 %v788, 16
      %v981 = vrot.slane %v979, 5
      %v982 = vor.u32 %v978, %v981
      %v983 = vrot.slane %v982, 4
      %v985 = vshll.u32 %v789, 16
      %v987 = vrot.slane %v985, 5
      %v988 = vsel %vm974, %v983, %v987
      %v990 = vshrl.u32 %v790, 16
      %v992 = vrot.slane %v990, 4
      %v993 = vshll.u32 %v790, 16
      %v995 = vrot.slane %v993, 5
      %v996 = vor.u32 %v992, %v995
      %v997 = vrot.slane %v996, 4
      %v999 = vshll.u32 %v791, 16
      %v1001 = vrot.slane %v999, 5
      %v1002 = vsel %vm974, %v997, %v1001
      %v1004 = vshrl.u32 %v792, 16
      %v1006 = vrot.slane %v1004, 4
      %v1007 = vshll.u32 %v792, 16
      %v1009 = vrot.slane %v1007, 5
      %v1010 = vor.u32 %v1006, %v1009
      %v1011 = vrot.slane %v1010, 4
      %v1013 = vshll.u32 %v793, 16
      %v1015 = vrot.slane %v1013, 5
      %v1016 = vsel %vm974, %v1011, %v1015
      %v1018 = vshrl.u32 %v794, 16
      %v1020 = vrot.slane %v1018, 4
      %v1021 = vshll.u32 %v794, 16
      %v1023 = vrot.slane %v1021, 5
      %v1024 = vor.u32 %v1020, %v1023
      %v1025 = vrot.slane %v1024, 4
      %v1027 = vshll.u32 %v795, 16
      %v1029 = vrot.slane %v1027, 5
      %v1030 = vsel %vm974, %v1025, %v1029
      %v1032 = vshrl.u32 %v796, 16
      %v1034 = vrot.slane %v1032, 4
      %v1035 = vshll.u32 %v796, 16
      %v1037 = vrot.slane %v1035, 5
      %v1038 = vor.u32 %v1034, %v1037
      %v1039 = vrot.slane %v1038, 4
      %v1041 = vshll.u32 %v797, 16
      %v1043 = vrot.slane %v1041, 5
      %v1044 = vsel %vm974, %v1039, %v1043
      %v1046 = vshrl.u32 %v798, 16
      %v1048 = vrot.slane %v1046, 4
      %v1049 = vshll.u32 %v798, 16
      %v1051 = vrot.slane %v1049, 5
      %v1052 = vor.u32 %v1048, %v1051
      %v1053 = vrot.slane %v1052, 4
      %v1055 = vshll.u32 %v799, 16
      %v1057 = vrot.slane %v1055, 5
      %v1058 = vsel %vm974, %v1053, %v1057
      %v1060 = vshrl.u32 %v800, 16
      %v1062 = vrot.slane %v1060, 4
      %v1063 = vshll.u32 %v800, 16
      %v1065 = vrot.slane %v1063, 5
      %v1066 = vor.u32 %v1062, %v1065
      %v1067 = vrot.slane %v1066, 4
      %v1069 = vshll.u32 %v801, 16
      %v1071 = vrot.slane %v1069, 5
      %v1072 = vsel %vm974, %v1067, %v1071
      %v1074 = vshrl.u32 %v802, 16
      %v1076 = vrot.slane %v1074, 4
      %v1077 = vshll.u32 %v802, 16
      %v1079 = vrot.slane %v1077, 5
      %v1080 = vor.u32 %v1076, %v1079
      %v1081 = vrot.slane %v1080, 4
      %v1083 = vshll.u32 %v803, 16
      %v1085 = vrot.slane %v1083, 5
      %v1086 = vsel %vm974, %v1081, %v1085
      %s1087 = scalar_lea.vmem %s436, 4
      %v1088 = vld [vmem:[%s1087] sm:$0x3]
      %v1089 = vunpack.c.l.b16 %v988
      %v1090 = vunpack.c.l.b16 %v1002
      %v1091 = vunpack.c.l.b16 %v1016
      %v1092 = vunpack.c.l.b16 %v1030
      %v1093 = vunpack.c.l.b16 %v1044
      %v1094 = vunpack.c.l.b16 %v1058
      %v1095 = vunpack.c.l.b16 %v1072
      %v1096 = vunpack.c.l.b16 %v1086
      %v1097 = vpack.c.b16 %v1090, %v1089
      %v1098 = vpack.c.b16 %v1092, %v1091
      %v1099 = vpack.c.b16 %v1094, %v1093
      %v1100 = vpack.c.b16 %v1096, %v1095
      %v1102 = vsel %vm862, %v1097, 0
      %v1105 = vsel %vm862, %v1098, 0
      %v1108 = vsel %vm862, %v1099, 0
      %v1111 = vsel %vm862, %v1100, 0
      %v1114 = vsel %vm875, %v1088, 0
      %1116 = vmatpush.bf16.msra.mxu0 0
      %1117 = vmatpush.bf16.msra.mxu0 0
      %1118 = vmatpush.bf16.msra.mxu0 0
      %1119 = vmatpush.bf16.msra.mxu0 0
      %1120 = vmatpush.bf16.msra.mxu0 0
      %1121 = vmatpush.bf16.msra.mxu0 0
      %1122 = vmatpush.bf16.msra.mxu0 0
      %1123 = vmatpush.bf16.msra.mxu0 %v1114
      %1124 = vmatmul.bf16.gmra.mxu0 %v1102
      %v1125 = vpop.f32.mrf.mxu0
      %v1126 = vadd.f32 0.0, %v1125
      %v1127 = vpop.f32.mrf.mxu0
      %v1128 = vadd.f32 0.0, %v1127
      %1129 = vmatmul.bf16.gmra.mxu0 %v1105
      %v1130 = vpop.f32.mrf.mxu0
      %v1131 = vadd.f32 0.0, %v1130
      %v1132 = vpop.f32.mrf.mxu0
      %v1133 = vadd.f32 0.0, %v1132
      %1134 = vmatmul.bf16.gmra.mxu0 %v1108
      %v1135 = vpop.f32.mrf.mxu0
      %v1136 = vadd.f32 0.0, %v1135
      %v1137 = vpop.f32.mrf.mxu0
      %v1138 = vadd.f32 0.0, %v1137
      %1139 = vmatmul.bf16.gmra.mxu0 %v1111
      %v1140 = vpop.f32.mrf.mxu0
      %v1141 = vadd.f32 0.0, %v1140
      %v1142 = vpop.f32.mrf.mxu0
      %v1143 = vadd.f32 0.0, %v1142
      %1144 = vdwg.mxu0
      %v1145 = vadd.f32 %v953, %v1126
      %v1146 = vadd.f32 %v955, %v1128
      %v1147 = vadd.f32 %v958, %v1131
      %v1148 = vadd.f32 %v960, %v1133
      %v1149 = vadd.f32 %v963, %v1136
      %v1150 = vadd.f32 %v965, %v1138
      %v1151 = vadd.f32 %v968, %v1141
      %v1152 = vadd.f32 %v970, %v1143
      %s1153 = scalar_lea.vmem %s436, 6
      %v1154 = vld [vmem:[%s1153] sm:$0x3]
      %v1163 = vunpack.c.l.b16 %v815
      %v1164 = vunpack.c.l.b16 %v817
      %v1165 = vunpack.c.l.b16 %v819
      %v1166 = vunpack.c.l.b16 %v821
      %v1167 = vunpack.c.l.b16 %v823
      %v1168 = vunpack.c.l.b16 %v825
      %v1169 = vunpack.c.l.b16 %v827
      %v1170 = vunpack.c.l.b16 %v829
      %v1171 = vpack.c.b16 %v1164, %v1163
      %v1172 = vpack.c.b16 %v1166, %v1165
      %v1173 = vpack.c.b16 %v1168, %v1167
      %v1174 = vpack.c.b16 %v1170, %v1169
      %v1176 = vsel %vm862, %v1171, 0
      %v1179 = vsel %vm862, %v1172, 0
      %v1182 = vsel %vm862, %v1173, 0
      %v1185 = vsel %vm862, %v1174, 0
      %v1188 = vsel %vm875, %v1154, 0
      %1190 = vmatpush.bf16.msra.mxu0 0
      %1191 = vmatpush.bf16.msra.mxu0 0
      %1192 = vmatpush.bf16.msra.mxu0 0
      %1193 = vmatpush.bf16.msra.mxu0 0
      %1194 = vmatpush.bf16.msra.mxu0 0
      %1195 = vmatpush.bf16.msra.mxu0 0
      %1196 = vmatpush.bf16.msra.mxu0 0
      %1197 = vmatpush.bf16.msra.mxu0 %v1188
      %1198 = vmatmul.bf16.gmra.mxu0 %v1176
      %v1199 = vpop.f32.mrf.mxu0
      %v1200 = vadd.f32 0.0, %v1199
      %v1201 = vpop.f32.mrf.mxu0
      %v1202 = vadd.f32 0.0, %v1201
      %1203 = vmatmul.bf16.gmra.mxu0 %v1179
      %v1204 = vpop.f32.mrf.mxu0
      %v1205 = vadd.f32 0.0, %v1204
      %v1206 = vpop.f32.mrf.mxu0
      %v1207 = vadd.f32 0.0, %v1206
      %1208 = vmatmul.bf16.gmra.mxu0 %v1182
      %v1209 = vpop.f32.mrf.mxu0
      %v1210 = vadd.f32 0.0, %v1209
      %v1211 = vpop.f32.mrf.mxu0
      %v1212 = vadd.f32 0.0, %v1211
      %1213 = vmatmul.bf16.gmra.mxu0 %v1185
      %v1214 = vpop.f32.mrf.mxu0
      %v1215 = vadd.f32 0.0, %v1214
      %v1216 = vpop.f32.mrf.mxu0
      %v1217 = vadd.f32 0.0, %v1216
      %1218 = vdwg.mxu0
      %v1219 = vadd.f32 %v1145, %v1200
      %v1220 = vadd.f32 %v1146, %v1202
      %v1221 = vadd.f32 %v1147, %v1205
      %v1222 = vadd.f32 %v1148, %v1207
      %v1223 = vadd.f32 %v1149, %v1210
      %v1224 = vadd.f32 %v1150, %v1212
      %v1225 = vadd.f32 %v1151, %v1215
      %v1226 = vadd.f32 %v1152, %v1217
      %s1227 = scalar_lea.vmem %s436, 8
      %v1228 = vld [vmem:[%s1227] sm:$0x3]
      %v1237 = vunpack.c.l.b16 %v831
      %v1238 = vunpack.c.l.b16 %v832
      %v1239 = vunpack.c.l.b16 %v833
      %v1240 = vunpack.c.l.b16 %v834
      %v1241 = vunpack.c.l.b16 %v835
      %v1242 = vunpack.c.l.b16 %v836
      %v1243 = vunpack.c.l.b16 %v837
      %v1244 = vunpack.c.l.b16 %v838
      %v1245 = vpack.c.b16 %v1238, %v1237
      %v1246 = vpack.c.b16 %v1240, %v1239
      %v1247 = vpack.c.b16 %v1242, %v1241
      %v1248 = vpack.c.b16 %v1244, %v1243
      %v1250 = vsel %vm862, %v1245, 0
      %v1253 = vsel %vm862, %v1246, 0
      %v1256 = vsel %vm862, %v1247, 0
      %v1259 = vsel %vm862, %v1248, 0
      %v1262 = vsel %vm875, %v1228, 0
      %1264 = vmatpush.bf16.msra.mxu0 0
      %1265 = vmatpush.bf16.msra.mxu0 0
      %1266 = vmatpush.bf16.msra.mxu0 0
      %1267 = vmatpush.bf16.msra.mxu0 0
      %1268 = vmatpush.bf16.msra.mxu0 0
      %1269 = vmatpush.bf16.msra.mxu0 0
      %1270 = vmatpush.bf16.msra.mxu0 0
      %1271 = vmatpush.bf16.msra.mxu0 %v1262
      %1272 = vmatmul.bf16.gmra.mxu0 %v1250
      %v1273 = vpop.f32.mrf.mxu0
      %v1274 = vadd.f32 0.0, %v1273
      %v1275 = vpop.f32.mrf.mxu0
      %v1276 = vadd.f32 0.0, %v1275
      %1277 = vmatmul.bf16.gmra.mxu0 %v1253
      %v1278 = vpop.f32.mrf.mxu0
      %v1279 = vadd.f32 0.0, %v1278
      %v1280 = vpop.f32.mrf.mxu0
      %v1281 = vadd.f32 0.0, %v1280
      %1282 = vmatmul.bf16.gmra.mxu0 %v1256
      %v1283 = vpop.f32.mrf.mxu0
      %v1284 = vadd.f32 0.0, %v1283
      %v1285 = vpop.f32.mrf.mxu0
      %v1286 = vadd.f32 0.0, %v1285
      %1287 = vmatmul.bf16.gmra.mxu0 %v1259
      %v1288 = vpop.f32.mrf.mxu0
      %v1289 = vadd.f32 0.0, %v1288
      %v1290 = vpop.f32.mrf.mxu0
      %v1291 = vadd.f32 0.0, %v1290
      %1292 = vdwg.mxu0
      %v1293 = vadd.f32 %v1219, %v1274
      %v1294 = vadd.f32 %v1220, %v1276
      %v1295 = vadd.f32 %v1221, %v1279
      %v1296 = vadd.f32 %v1222, %v1281
      %v1297 = vadd.f32 %v1223, %v1284
      %v1298 = vadd.f32 %v1224, %v1286
      %v1299 = vadd.f32 %v1225, %v1289
      %v1300 = vadd.f32 %v1226, %v1291
      %v1302 = vshrl.u32 %v815, 16
      %v1304 = vrot.slane %v1302, 4
      %v1305 = vshll.u32 %v815, 16
      %v1307 = vrot.slane %v1305, 5
      %v1308 = vor.u32 %v1304, %v1307
      %v1309 = vrot.slane %v1308, 4
      %v1311 = vshll.u32 %v816, 16
      %v1313 = vrot.slane %v1311, 5
      %v1314 = vsel %vm974, %v1309, %v1313
      %v1316 = vshrl.u32 %v817, 16
      %v1318 = vrot.slane %v1316, 4
      %v1319 = vshll.u32 %v817, 16
      %v1321 = vrot.slane %v1319, 5
      %v1322 = vor.u32 %v1318, %v1321
      %v1323 = vrot.slane %v1322, 4
      %v1325 = vshll.u32 %v818, 16
      %v1327 = vrot.slane %v1325, 5
      %v1328 = vsel %vm974, %v1323, %v1327
      %v1330 = vshrl.u32 %v819, 16
      %v1332 = vrot.slane %v1330, 4
      %v1333 = vshll.u32 %v819, 16
      %v1335 = vrot.slane %v1333, 5
      %v1336 = vor.u32 %v1332, %v1335
      %v1337 = vrot.slane %v1336, 4
      %v1339 = vshll.u32 %v820, 16
      %v1341 = vrot.slane %v1339, 5
      %v1342 = vsel %vm974, %v1337, %v1341
      %v1344 = vshrl.u32 %v821, 16
      %v1346 = vrot.slane %v1344, 4
      %v1347 = vshll.u32 %v821, 16
      %v1349 = vrot.slane %v1347, 5
      %v1350 = vor.u32 %v1346, %v1349
      %v1351 = vrot.slane %v1350, 4
      %v1353 = vshll.u32 %v822, 16
      %v1355 = vrot.slane %v1353, 5
      %v1356 = vsel %vm974, %v1351, %v1355
      %v1358 = vshrl.u32 %v823, 16
      %v1360 = vrot.slane %v1358, 4
      %v1361 = vshll.u32 %v823, 16
      %v1363 = vrot.slane %v1361, 5
      %v1364 = vor.u32 %v1360, %v1363
      %v1365 = vrot.slane %v1364, 4
      %v1367 = vshll.u32 %v824, 16
      %v1369 = vrot.slane %v1367, 5
      %v1370 = vsel %vm974, %v1365, %v1369
      %v1372 = vshrl.u32 %v825, 16
      %v1374 = vrot.slane %v1372, 4
      %v1375 = vshll.u32 %v825, 16
      %v1377 = vrot.slane %v1375, 5
      %v1378 = vor.u32 %v1374, %v1377
      %v1379 = vrot.slane %v1378, 4
      %v1381 = vshll.u32 %v826, 16
      %v1383 = vrot.slane %v1381, 5
      %v1384 = vsel %vm974, %v1379, %v1383
      %v1386 = vshrl.u32 %v827, 16
      %v1388 = vrot.slane %v1386, 4
      %v1389 = vshll.u32 %v827, 16
      %v1391 = vrot.slane %v1389, 5
      %v1392 = vor.u32 %v1388, %v1391
      %v1393 = vrot.slane %v1392, 4
      %v1395 = vshll.u32 %v828, 16
      %v1397 = vrot.slane %v1395, 5
      %v1398 = vsel %vm974, %v1393, %v1397
      %v1400 = vshrl.u32 %v829, 16
      %v1402 = vrot.slane %v1400, 4
      %v1403 = vshll.u32 %v829, 16
      %v1405 = vrot.slane %v1403, 5
      %v1406 = vor.u32 %v1402, %v1405
      %v1407 = vrot.slane %v1406, 4
      %v1409 = vshll.u32 %v830, 16
      %v1411 = vrot.slane %v1409, 5
      %v1412 = vsel %vm974, %v1407, %v1411
      %s1413 = scalar_lea.vmem %s436, 10
      %v1414 = vld [vmem:[%s1413] sm:$0x3]
      %v1415 = vunpack.c.l.b16 %v1314
      %v1416 = vunpack.c.l.b16 %v1328
      %v1417 = vunpack.c.l.b16 %v1342
      %v1418 = vunpack.c.l.b16 %v1356
      %v1419 = vunpack.c.l.b16 %v1370
      %v1420 = vunpack.c.l.b16 %v1384
      %v1421 = vunpack.c.l.b16 %v1398
      %v1422 = vunpack.c.l.b16 %v1412
      %v1423 = vpack.c.b16 %v1416, %v1415
      %v1424 = vpack.c.b16 %v1418, %v1417
      %v1425 = vpack.c.b16 %v1420, %v1419
      %v1426 = vpack.c.b16 %v1422, %v1421
      %v1428 = vsel %vm862, %v1423, 0
      %v1431 = vsel %vm862, %v1424, 0
      %v1434 = vsel %vm862, %v1425, 0
      %v1437 = vsel %vm862, %v1426, 0
      %v1440 = vsel %vm875, %v1414, 0
      %1442 = vmatpush.bf16.msra.mxu0 0
      %1443 = vmatpush.bf16.msra.mxu0 0
      %1444 = vmatpush.bf16.msra.mxu0 0
      %1445 = vmatpush.bf16.msra.mxu0 0
      %1446 = vmatpush.bf16.msra.mxu0 0
      %1447 = vmatpush.bf16.msra.mxu0 0
      %1448 = vmatpush.bf16.msra.mxu0 0
      %1449 = vmatpush.bf16.msra.mxu0 %v1440
      %1450 = vmatmul.bf16.gmra.mxu0 %v1428
      %v1451 = vpop.f32.mrf.mxu0
      %v1452 = vadd.f32 0.0, %v1451
      %v1453 = vpop.f32.mrf.mxu0
      %v1454 = vadd.f32 0.0, %v1453
      %1455 = vmatmul.bf16.gmra.mxu0 %v1431
      %v1456 = vpop.f32.mrf.mxu0
      %v1457 = vadd.f32 0.0, %v1456
      %v1458 = vpop.f32.mrf.mxu0
      %v1459 = vadd.f32 0.0, %v1458
      %1460 = vmatmul.bf16.gmra.mxu0 %v1434
      %v1461 = vpop.f32.mrf.mxu0
      %v1462 = vadd.f32 0.0, %v1461
      %v1463 = vpop.f32.mrf.mxu0
      %v1464 = vadd.f32 0.0, %v1463
      %1465 = vmatmul.bf16.gmra.mxu0 %v1437
      %v1466 = vpop.f32.mrf.mxu0
      %v1467 = vadd.f32 0.0, %v1466
      %v1468 = vpop.f32.mrf.mxu0
      %v1469 = vadd.f32 0.0, %v1468
      %1470 = vdwg.mxu0
      %v1471 = vadd.f32 %v1293, %v1452
      %v1472 = vadd.f32 %v1294, %v1454
      %v1473 = vadd.f32 %v1295, %v1457
      %v1474 = vadd.f32 %v1296, %v1459
      %v1475 = vadd.f32 %v1297, %v1462
      %v1476 = vadd.f32 %v1298, %v1464
      %v1477 = vadd.f32 %v1299, %v1467
      %v1478 = vadd.f32 %v1300, %v1469
      %s1479 = scalar_lea.vmem %s436, 12
      %v1480 = vld [vmem:[%s1479] sm:$0x3]
      %v1482 = vunpack.c.l.b16 %v804
      %v1483 = vpack.c.b16 %v918, %v917
      %v1484 = vpack.c.b16 %v920, %v919
      %v1485 = vpack.c.b16 %v922, %v921
      %v1486 = vpack.c.b16 %v1482, %v923
      %v1488 = vsel %vm862, %v1483, 0
      %v1491 = vsel %vm862, %v1484, 0
      %v1494 = vsel %vm862, %v1485, 0
      %v1497 = vsel %vm862, %v1486, 0
      %v1500 = vsel %vm875, %v1480, 0
      %1502 = vmatpush.bf16.msra.mxu0 0
      %1503 = vmatpush.bf16.msra.mxu0 0
      %1504 = vmatpush.bf16.msra.mxu0 0
      %1505 = vmatpush.bf16.msra.mxu0 0
      %1506 = vmatpush.bf16.msra.mxu0 0
      %1507 = vmatpush.bf16.msra.mxu0 0
      %1508 = vmatpush.bf16.msra.mxu0 0
      %1509 = vmatpush.bf16.msra.mxu0 %v1500
      %1510 = vmatmul.bf16.gmra.mxu0 %v1488
      %v1511 = vpop.f32.mrf.mxu0
      %v1512 = vadd.f32 0.0, %v1511
      %v1513 = vpop.f32.mrf.mxu0
      %v1514 = vadd.f32 0.0, %v1513
      %1515 = vmatmul.bf16.gmra.mxu0 %v1491
      %v1516 = vpop.f32.mrf.mxu0
      %v1517 = vadd.f32 0.0, %v1516
      %v1518 = vpop.f32.mrf.mxu0
      %v1519 = vadd.f32 0.0, %v1518
      %1520 = vmatmul.bf16.gmra.mxu0 %v1494
      %v1521 = vpop.f32.mrf.mxu0
      %v1522 = vadd.f32 0.0, %v1521
      %v1523 = vpop.f32.mrf.mxu0
      %v1524 = vadd.f32 0.0, %v1523
      %1525 = vmatmul.bf16.gmra.mxu0 %v1497
      %v1526 = vpop.f32.mrf.mxu0
      %v1527 = vadd.f32 0.0, %v1526
      %v1528 = vpop.f32.mrf.mxu0
      %v1529 = vadd.f32 0.0, %v1528
      %1530 = vdwg.mxu0
      %v1531 = vadd.f32 %v1471, %v1512
      %v1532 = vadd.f32 %v1472, %v1514
      %v1533 = vadd.f32 %v1473, %v1517
      %v1534 = vadd.f32 %v1474, %v1519
      %v1535 = vadd.f32 %v1475, %v1522
      %v1536 = vadd.f32 %v1476, %v1524
      %v1537 = vadd.f32 %v1477, %v1527
      %v1538 = vadd.f32 %v1478, %v1529
      %s1539 = scalar_lea.vmem %s436, 14
      %v1540 = vld [vmem:[%s1539] sm:$0x3]
      %v1542 = vunpack.c.l.b16 %v814
      %v1543 = vpack.c.b16 %v852, %v851
      %v1544 = vpack.c.b16 %v854, %v853
      %v1545 = vpack.c.b16 %v856, %v855
      %v1546 = vpack.c.b16 %v1542, %v857
      %v1548 = vsel %vm862, %v1543, 0
      %v1551 = vsel %vm862, %v1544, 0
      %v1554 = vsel %vm862, %v1545, 0
      %v1557 = vsel %vm862, %v1546, 0
      %v1560 = vsel %vm875, %v1540, 0
      %1562 = vmatpush.bf16.msra.mxu0 0
      %1563 = vmatpush.bf16.msra.mxu0 0
      %1564 = vmatpush.bf16.msra.mxu0 0
      %1565 = vmatpush.bf16.msra.mxu0 0
      %1566 = vmatpush.bf16.msra.mxu0 0
      %1567 = vmatpush.bf16.msra.mxu0 0
      %1568 = vmatpush.bf16.msra.mxu0 0
      %1569 = vmatpush.bf16.msra.mxu0 %v1560
      %1570 = vmatmul.bf16.gmra.mxu0 %v1548
      %v1571 = vpop.f32.mrf.mxu0
      %v1572 = vadd.f32 0.0, %v1571
      %v1573 = vpop.f32.mrf.mxu0
      %v1574 = vadd.f32 0.0, %v1573
      %1575 = vmatmul.bf16.gmra.mxu0 %v1551
      %v1576 = vpop.f32.mrf.mxu0
      %v1577 = vadd.f32 0.0, %v1576
      %v1578 = vpop.f32.mrf.mxu0
      %v1579 = vadd.f32 0.0, %v1578
      %1580 = vmatmul.bf16.gmra.mxu0 %v1554
      %v1581 = vpop.f32.mrf.mxu0
      %v1582 = vadd.f32 0.0, %v1581
      %v1583 = vpop.f32.mrf.mxu0
      %v1584 = vadd.f32 0.0, %v1583
      %1585 = vmatmul.bf16.gmra.mxu0 %v1557
      %v1586 = vpop.f32.mrf.mxu0
      %v1587 = vadd.f32 0.0, %v1586
      %v1588 = vpop.f32.mrf.mxu0
      %v1589 = vadd.f32 0.0, %v1588
      %1590 = vdwg.mxu0
      %v1591 = vadd.f32 %v1531, %v1572
      %v1592 = vadd.f32 %v1532, %v1574
      %v1593 = vadd.f32 %v1533, %v1577
      %v1594 = vadd.f32 %v1534, %v1579
      %v1595 = vadd.f32 %v1535, %v1582
      %v1596 = vadd.f32 %v1536, %v1584
      %v1597 = vadd.f32 %v1537, %v1587
      %v1598 = vadd.f32 %v1538, %v1589
      %v1600 = vshrl.u32 %v804, 16
      %v1602 = vrot.slane %v1600, 4
      %v1603 = vshll.u32 %v804, 16
      %v1605 = vrot.slane %v1603, 5
      %v1606 = vor.u32 %v1602, %v1605
      %v1607 = vrot.slane %v1606, 4
      %v1609 = vshll.u32 %v805, 16
      %v1611 = vrot.slane %v1609, 5
      %v1612 = vsel %vm974, %v1607, %v1611
      %s1613 = scalar_lea.vmem %s436, 16
      %v1614 = vld [vmem:[%s1613] sm:$0x3]
      %v1615 = vunpack.c.l.b16 %v1612
      %v1616 = vpack.c.b16 %v1091, %v1090
      %v1617 = vpack.c.b16 %v1093, %v1092
      %v1618 = vpack.c.b16 %v1095, %v1094
      %v1619 = vpack.c.b16 %v1615, %v1096
      %v1621 = vsel %vm862, %v1616, 0
      %v1624 = vsel %vm862, %v1617, 0
      %v1627 = vsel %vm862, %v1618, 0
      %v1630 = vsel %vm862, %v1619, 0
      %v1633 = vsel %vm875, %v1614, 0
      %1635 = vmatpush.bf16.msra.mxu0 0
      %1636 = vmatpush.bf16.msra.mxu0 0
      %1637 = vmatpush.bf16.msra.mxu0 0
      %1638 = vmatpush.bf16.msra.mxu0 0
      %1639 = vmatpush.bf16.msra.mxu0 0
      %1640 = vmatpush.bf16.msra.mxu0 0
      %1641 = vmatpush.bf16.msra.mxu0 0
      %1642 = vmatpush.bf16.msra.mxu0 %v1633
      %1643 = vmatmul.bf16.gmra.mxu0 %v1621
      %v1644 = vpop.f32.mrf.mxu0
      %v1645 = vadd.f32 0.0, %v1644
      %v1646 = vpop.f32.mrf.mxu0
      %v1647 = vadd.f32 0.0, %v1646
      %1648 = vmatmul.bf16.gmra.mxu0 %v1624
      %v1649 = vpop.f32.mrf.mxu0
      %v1650 = vadd.f32 0.0, %v1649
      %v1651 = vpop.f32.mrf.mxu0
      %v1652 = vadd.f32 0.0, %v1651
      %1653 = vmatmul.bf16.gmra.mxu0 %v1627
      %v1654 = vpop.f32.mrf.mxu0
      %v1655 = vadd.f32 0.0, %v1654
      %v1656 = vpop.f32.mrf.mxu0
      %v1657 = vadd.f32 0.0, %v1656
      %1658 = vmatmul.bf16.gmra.mxu0 %v1630
      %v1659 = vpop.f32.mrf.mxu0
      %v1660 = vadd.f32 0.0, %v1659
      %v1661 = vpop.f32.mrf.mxu0
      %v1662 = vadd.f32 0.0, %v1661
      %1663 = vdwg.mxu0
      %v1664 = vadd.f32 %v1591, %v1645
      %v1665 = vadd.f32 %v1592, %v1647
      %v1666 = vadd.f32 %v1593, %v1650
      %v1667 = vadd.f32 %v1594, %v1652
      %v1668 = vadd.f32 %v1595, %v1655
      %v1669 = vadd.f32 %v1596, %v1657
      %v1670 = vadd.f32 %v1597, %v1660
      %v1671 = vadd.f32 %v1598, %v1662
      %v1672 = vld [vmem:[%s439] sm:$0x1]
      %v1674 = vperm.slane %v1672, 0
      %v1676 = vmul.f32 %v1664, %v1674
      %v1677 = vmul.f32 %v1665, %v1674
      %v1678 = vmul.f32 %v1666, %v1674
      %v1679 = vmul.f32 %v1667, %v1674
      %v1680 = vmul.f32 %v1668, %v1674
      %v1681 = vmul.f32 %v1669, %v1674
      %v1682 = vmul.f32 %v1670, %v1674
      %v1683 = vmul.f32 %v1671, %v1674
      %v1684 = vld [vmem:[%s442] sm:$0x1]
      %v1686 = vperm.slane %v1684, 0
      %v1688 = vadd.f32 %v1676, %v1686
      %v1689 = vadd.f32 %v1677, %v1686
      %v1690 = vadd.f32 %v1678, %v1686
      %v1691 = vadd.f32 %v1679, %v1686
      %v1692 = vadd.f32 %v1680, %v1686
      %v1693 = vadd.f32 %v1681, %v1686
      %v1694 = vadd.f32 %v1682, %v1686
      %v1695 = vadd.f32 %v1683, %v1686
      %v1696 = vmax.f32 %v1688, 0.0
      %v1697 = vmax.f32 %v1689, 0.0
      %v1698 = vmax.f32 %v1690, 0.0
      %v1699 = vmax.f32 %v1691, 0.0
      %v1700 = vmax.f32 %v1692, 0.0
      %v1701 = vmax.f32 %v1693, 0.0
      %v1702 = vmax.f32 %v1694, 0.0
      %v1703 = vmax.f32 %v1695, 0.0
      %v1704 = vpack.c.bf16 %v1696, %v1696
      %v1705 = vpack.c.bf16 %v1697, %v1697
      %v1706 = vpack.c.bf16 %v1698, %v1698
      %v1707 = vpack.c.bf16 %v1699, %v1699
      %v1708 = vpack.c.bf16 %v1700, %v1700
      %v1709 = vpack.c.bf16 %v1701, %v1701
      %v1710 = vpack.c.bf16 %v1702, %v1702
      %v1711 = vpack.c.bf16 %v1703, %v1703
      %1712 = vst [vmem:[%s454] sm:$0xf] %v1704
      %1713 = vst [vmem:[%s454 + $0x4] sm:$0xf] %v1705
      %1714 = vst [vmem:[%s454 + $0x8] sm:$0xf] %v1706
      %1715 = vst [vmem:[%s454 + $0xc] sm:$0xf] %v1707
      %1716 = vst [vmem:[%s454 + $0x10] sm:$0xf] %v1708
      %1717 = vst [vmem:[%s454 + $0x14] sm:$0xf] %v1709
      %1718 = vst [vmem:[%s454 + $0x18] sm:$0xf] %v1710
      %1719 = vst [vmem:[%s454 + $0x1c] sm:$0xf] %v1711
      %v1720 = vld [vmem:[%s6] sm:$0x1]
      %v1721 = vld [vmem:[%s7] sm:$0x1]
      %v1723 = vperm.slane %v1720, 0
      %v1725 = vmul.f32 %v464, %v1723
      %v1726 = vmul.f32 %v465, %v1723
      %v1727 = vmul.f32 %v466, %v1723
      %v1728 = vmul.f32 %v467, %v1723
      %v1729 = vmul.f32 %v468, %v1723
      %v1730 = vmul.f32 %v469, %v1723
      %v1731 = vmul.f32 %v470, %v1723
      %v1732 = vmul.f32 %v471, %v1723
      %v1733 = vmul.f32 %v472, %v1723
      %v1734 = vmul.f32 %v473, %v1723
      %v1735 = vmul.f32 %v474, %v1723
      %v1736 = vmul.f32 %v475, %v1723
      %v1737 = vmul.f32 %v476, %v1723
      %v1738 = vmul.f32 %v477, %v1723
      %v1739 = vmul.f32 %v478, %v1723
      %v1740 = vmul.f32 %v479, %v1723
      %v1741 = vmul.f32 %v480, %v1723
      %v1742 = vmul.f32 %v481, %v1723
      %v1743 = vmul.f32 %v482, %v1723
      %v1744 = vmul.f32 %v483, %v1723
      %v1745 = vmul.f32 %v484, %v1723
      %v1746 = vmul.f32 %v485, %v1723
      %v1747 = vmul.f32 %v486, %v1723
      %v1748 = vmul.f32 %v487, %v1723
      %v1749 = vmul.f32 %v488, %v1723
      %v1750 = vmul.f32 %v489, %v1723
      %v1751 = vmul.f32 %v490, %v1723
      %v1752 = vmul.f32 %v491, %v1723
      %v1753 = vmul.f32 %v492, %v1723
      %v1754 = vmul.f32 %v493, %v1723
      %v1755 = vmul.f32 %v494, %v1723
      %v1756 = vmul.f32 %v495, %v1723
      %v1757 = vmul.f32 %v496, %v1723
      %v1758 = vmul.f32 %v497, %v1723
      %v1759 = vmul.f32 %v498, %v1723
      %v1760 = vmul.f32 %v499, %v1723
      %v1761 = vmul.f32 %v500, %v1723
      %v1762 = vmul.f32 %v501, %v1723
      %v1763 = vmul.f32 %v502, %v1723
      %v1764 = vmul.f32 %v503, %v1723
      %v1765 = vmul.f32 %v504, %v1723
      %v1766 = vmul.f32 %v505, %v1723
      %v1767 = vmul.f32 %v506, %v1723
      %v1768 = vmul.f32 %v507, %v1723
      %v1769 = vmul.f32 %v508, %v1723
      %v1770 = vmul.f32 %v509, %v1723
      %v1771 = vmul.f32 %v510, %v1723
      %v1772 = vmul.f32 %v511, %v1723
      %v1773 = vmul.f32 %v512, %v1723
      %v1774 = vmul.f32 %v513, %v1723
      %v1775 = vmul.f32 %v514, %v1723
      %v1777 = vperm.slane %v1721, 0
      %v1779 = vadd.f32 %v1725, %v1777
      %v1780 = vadd.f32 %v1726, %v1777
      %v1781 = vadd.f32 %v1727, %v1777
      %v1782 = vadd.f32 %v1728, %v1777
      %v1783 = vadd.f32 %v1729, %v1777
      %v1784 = vadd.f32 %v1730, %v1777
      %v1785 = vadd.f32 %v1731, %v1777
      %v1786 = vadd.f32 %v1732, %v1777
      %v1787 = vadd.f32 %v1733, %v1777
      %v1788 = vadd.f32 %v1734, %v1777
      %v1789 = vadd.f32 %v1735, %v1777
      %v1790 = vadd.f32 %v1736, %v1777
      %v1791 = vadd.f32 %v1737, %v1777
      %v1792 = vadd.f32 %v1738, %v1777
      %v1793 = vadd.f32 %v1739, %v1777
      %v1794 = vadd.f32 %v1740, %v1777
      %v1795 = vadd.f32 %v1741, %v1777
      %v1796 = vadd.f32 %v1742, %v1777
      %v1797 = vadd.f32 %v1743, %v1777
      %v1798 = vadd.f32 %v1744, %v1777
      %v1799 = vadd.f32 %v1745, %v1777
      %v1800 = vadd.f32 %v1746, %v1777
      %v1801 = vadd.f32 %v1747, %v1777
      %v1802 = vadd.f32 %v1748, %v1777
      %v1803 = vadd.f32 %v1749, %v1777
      %v1804 = vadd.f32 %v1750, %v1777
      %v1805 = vadd.f32 %v1751, %v1777
      %v1806 = vadd.f32 %v1752, %v1777
      %v1807 = vadd.f32 %v1753, %v1777
      %v1808 = vadd.f32 %v1754, %v1777
      %v1809 = vadd.f32 %v1755, %v1777
      %v1810 = vadd.f32 %v1756, %v1777
      %v1811 = vadd.f32 %v1757, %v1777
      %v1812 = vadd.f32 %v1758, %v1777
      %v1813 = vadd.f32 %v1759, %v1777
      %v1814 = vadd.f32 %v1760, %v1777
      %v1815 = vadd.f32 %v1761, %v1777
      %v1816 = vadd.f32 %v1762, %v1777
      %v1817 = vadd.f32 %v1763, %v1777
      %v1818 = vadd.f32 %v1764, %v1777
      %v1819 = vadd.f32 %v1765, %v1777
      %v1820 = vadd.f32 %v1766, %v1777
      %v1821 = vadd.f32 %v1767, %v1777
      %v1822 = vadd.f32 %v1768, %v1777
      %v1823 = vadd.f32 %v1769, %v1777
      %v1824 = vadd.f32 %v1770, %v1777
      %v1825 = vadd.f32 %v1771, %v1777
      %v1826 = vadd.f32 %v1772, %v1777
      %v1827 = vadd.f32 %v1773, %v1777
      %v1828 = vadd.f32 %v1774, %v1777
      %v1829 = vadd.f32 %v1775, %v1777
      %v1830 = vmax.f32 %v1779, 0.0
      %v1831 = vmax.f32 %v1780, 0.0
      %v1832 = vmax.f32 %v1781, 0.0
      %v1833 = vmax.f32 %v1782, 0.0
      %v1834 = vmax.f32 %v1783, 0.0
      %v1835 = vmax.f32 %v1784, 0.0
      %v1836 = vmax.f32 %v1785, 0.0
      %v1837 = vmax.f32 %v1786, 0.0
      %v1838 = vmax.f32 %v1787, 0.0
      %v1839 = vmax.f32 %v1788, 0.0
      %v1840 = vmax.f32 %v1789, 0.0
      %v1841 = vmax.f32 %v1790, 0.0
      %v1842 = vmax.f32 %v1791, 0.0
      %v1843 = vmax.f32 %v1792, 0.0
      %v1844 = vmax.f32 %v1793, 0.0
      %v1845 = vmax.f32 %v1794, 0.0
      %v1846 = vmax.f32 %v1795, 0.0
      %v1847 = vmax.f32 %v1796, 0.0
      %v1848 = vmax.f32 %v1797, 0.0
      %v1849 = vmax.f32 %v1798, 0.0
      %v1850 = vmax.f32 %v1799, 0.0
      %v1851 = vmax.f32 %v1800, 0.0
      %v1852 = vmax.f32 %v1801, 0.0
      %v1853 = vmax.f32 %v1802, 0.0
      %v1854 = vmax.f32 %v1803, 0.0
      %v1855 = vmax.f32 %v1804, 0.0
      %v1856 = vmax.f32 %v1805, 0.0
      %v1857 = vmax.f32 %v1806, 0.0
      %v1858 = vmax.f32 %v1807, 0.0
      %v1859 = vmax.f32 %v1808, 0.0
      %v1860 = vmax.f32 %v1809, 0.0
      %v1861 = vmax.f32 %v1810, 0.0
      %v1862 = vmax.f32 %v1811, 0.0
      %v1863 = vmax.f32 %v1812, 0.0
      %v1864 = vmax.f32 %v1813, 0.0
      %v1865 = vmax.f32 %v1814, 0.0
      %v1866 = vmax.f32 %v1815, 0.0
      %v1867 = vmax.f32 %v1816, 0.0
      %v1868 = vmax.f32 %v1817, 0.0
      %v1869 = vmax.f32 %v1818, 0.0
      %v1870 = vmax.f32 %v1819, 0.0
      %v1871 = vmax.f32 %v1820, 0.0
      %v1872 = vmax.f32 %v1821, 0.0
      %v1873 = vmax.f32 %v1822, 0.0
      %v1874 = vmax.f32 %v1823, 0.0
      %v1875 = vmax.f32 %v1824, 0.0
      %v1876 = vmax.f32 %v1825, 0.0
      %v1877 = vmax.f32 %v1826, 0.0
      %v1878 = vmax.f32 %v1827, 0.0
      %v1879 = vmax.f32 %v1828, 0.0
      %v1880 = vmax.f32 %v1829, 0.0
      %v1881 = vmul.f32 %v1830, %v568
      %v1882 = vmul.f32 %v1831, %v569
      %v1883 = vmul.f32 %v1832, %v570
      %v1884 = vmul.f32 %v1833, %v571
      %v1885 = vmul.f32 %v1834, %v570
      %v1886 = vmul.f32 %v1835, %v571
      %v1887 = vmul.f32 %v1836, %v570
      %v1888 = vmul.f32 %v1837, %v571
      %v1889 = vmul.f32 %v1838, %v570
      %v1890 = vmul.f32 %v1839, %v571
      %v1891 = vmul.f32 %v1840, %v570
      %v1892 = vmul.f32 %v1841, %v571
      %v1893 = vmul.f32 %v1842, %v570
      %v1894 = vmul.f32 %v1843, %v571
      %v1895 = vmul.f32 %v1844, %v570
      %v1896 = vmul.f32 %v1845, %v571
      %v1897 = vmul.f32 %v1846, %v570
      %v1898 = vmul.f32 %v1847, %v571
      %v1899 = vmul.f32 %v1848, %v568
      %v1900 = vmul.f32 %v1849, %v572
      %v1901 = vmul.f32 %v1850, %v572
      %v1902 = vmul.f32 %v1851, %v572
      %v1903 = vmul.f32 %v1852, %v572
      %v1904 = vmul.f32 %v1853, %v572
      %v1905 = vmul.f32 %v1854, %v572
      %v1906 = vmul.f32 %v1855, %v572
      %v1907 = vmul.f32 %v1856, %v572
      %v1908 = vmul.f32 %v1857, %v573
      %v1909 = vmul.f32 %v1858, %v574
      %v1910 = vmul.f32 %v1859, %v573
      %v1911 = vmul.f32 %v1860, %v574
      %v1912 = vmul.f32 %v1861, %v573
      %v1913 = vmul.f32 %v1862, %v574
      %v1914 = vmul.f32 %v1863, %v573
      %v1915 = vmul.f32 %v1864, %v574
      %v1916 = vmul.f32 %v1865, %v573
      %v1917 = vmul.f32 %v1866, %v574
      %v1918 = vmul.f32 %v1867, %v573
      %v1919 = vmul.f32 %v1868, %v574
      %v1920 = vmul.f32 %v1869, %v573
      %v1921 = vmul.f32 %v1870, %v574
      %v1922 = vmul.f32 %v1871, %v573
      %v1923 = vmul.f32 %v1872, %v574
      %v1924 = vmul.f32 %v1873, %v575
      %v1925 = vmul.f32 %v1874, %v575
      %v1926 = vmul.f32 %v1875, %v575
      %v1927 = vmul.f32 %v1876, %v575
      %v1928 = vmul.f32 %v1877, %v575
      %v1929 = vmul.f32 %v1878, %v575
      %v1930 = vmul.f32 %v1879, %v575
      %v1931 = vmul.f32 %v1880, %v575
      %v1932 = vpack.c.bf16 %v1881, %v1881
      %v1933 = vpack.c.bf16 %v1882, %v1882
      %v1934 = vpack.c.bf16 %v1883, %v1883
      %v1935 = vpack.c.bf16 %v1884, %v1884
      %v1936 = vpack.c.bf16 %v1885, %v1885
      %v1937 = vpack.c.bf16 %v1886, %v1886
      %v1938 = vpack.c.bf16 %v1887, %v1887
      %v1939 = vpack.c.bf16 %v1888, %v1888
      %v1940 = vpack.c.bf16 %v1889, %v1889
      %v1941 = vpack.c.bf16 %v1890, %v1890
      %v1942 = vpack.c.bf16 %v1891, %v1891
      %v1943 = vpack.c.bf16 %v1892, %v1892
      %v1944 = vpack.c.bf16 %v1893, %v1893
      %v1945 = vpack.c.bf16 %v1894, %v1894
      %v1946 = vpack.c.bf16 %v1895, %v1895
      %v1947 = vpack.c.bf16 %v1896, %v1896
      %v1948 = vpack.c.bf16 %v1897, %v1897
      %v1949 = vpack.c.bf16 %v1898, %v1898
      %v1950 = vpack.c.bf16 %v1899, %v1899
      %v1951 = vpack.c.bf16 %v1900, %v1900
      %v1952 = vpack.c.bf16 %v1901, %v1901
      %v1953 = vpack.c.bf16 %v1902, %v1902
      %v1954 = vpack.c.bf16 %v1903, %v1903
      %v1955 = vpack.c.bf16 %v1904, %v1904
      %v1956 = vpack.c.bf16 %v1905, %v1905
      %v1957 = vpack.c.bf16 %v1906, %v1906
      %v1958 = vpack.c.bf16 %v1907, %v1907
      %v1959 = vpack.c.bf16 %v1908, %v1908
      %v1960 = vpack.c.bf16 %v1909, %v1909
      %v1961 = vpack.c.bf16 %v1910, %v1910
      %v1962 = vpack.c.bf16 %v1911, %v1911
      %v1963 = vpack.c.bf16 %v1912, %v1912
      %v1964 = vpack.c.bf16 %v1913, %v1913
      %v1965 = vpack.c.bf16 %v1914, %v1914
      %v1966 = vpack.c.bf16 %v1915, %v1915
      %v1967 = vpack.c.bf16 %v1916, %v1916
      %v1968 = vpack.c.bf16 %v1917, %v1917
      %v1969 = vpack.c.bf16 %v1918, %v1918
      %v1970 = vpack.c.bf16 %v1919, %v1919
      %v1971 = vpack.c.bf16 %v1920, %v1920
      %v1972 = vpack.c.bf16 %v1921, %v1921
      %v1973 = vpack.c.bf16 %v1922, %v1922
      %v1974 = vpack.c.bf16 %v1923, %v1923
      %v1975 = vpack.c.bf16 %v1924, %v1924
      %v1976 = vpack.c.bf16 %v1925, %v1925
      %v1977 = vpack.c.bf16 %v1926, %v1926
      %v1978 = vpack.c.bf16 %v1927, %v1927
      %v1979 = vpack.c.bf16 %v1928, %v1928
      %v1980 = vpack.c.bf16 %v1929, %v1929
      %v1981 = vpack.c.bf16 %v1930, %v1930
      %v1982 = vpack.c.bf16 %v1931, %v1931
      %v1983 = vld [vmem:[%s446] sm:$0x3]
      %s1984 = scalar_lea.vmem %s446, 2
      %v1985 = vld [vmem:[%s1984] sm:$0x3]
      %v1994 = vunpack.c.l.b16 %v1950
      %v1995 = vunpack.c.l.b16 %v1951
      %v1996 = vunpack.c.l.b16 %v1952
      %v1997 = vunpack.c.l.b16 %v1953
      %v1998 = vunpack.c.l.b16 %v1954
      %v1999 = vunpack.c.l.b16 %v1955
      %v2000 = vunpack.c.l.b16 %v1956
      %v2001 = vunpack.c.l.b16 %v1957
      %v2002 = vpack.c.b16 %v1995, %v1994
      %v2003 = vpack.c.b16 %v1997, %v1996
      %v2004 = vpack.c.b16 %v1999, %v1998
      %v2005 = vpack.c.b16 %v2001, %v2000
      %v2007 = vsel %vm862, %v2002, 0
      %v2010 = vsel %vm862, %v2003, 0
      %v2013 = vsel %vm862, %v2004, 0
      %v2016 = vsel %vm862, %v2005, 0
      %v2019 = vsel %vm875, %v1985, 0
      %2021 = vmatpush.bf16.msra.mxu0 0
      %2022 = vmatpush.bf16.msra.mxu0 0
      %2023 = vmatpush.bf16.msra.mxu0 0
      %2024 = vmatpush.bf16.msra.mxu0 0
      %2025 = vmatpush.bf16.msra.mxu0 0
      %2026 = vmatpush.bf16.msra.mxu0 0
      %2027 = vmatpush.bf16.msra.mxu0 0
      %2028 = vmatpush.bf16.msra.mxu0 %v2019
      %2029 = vmatmul.bf16.gmra.mxu0 %v2007
      %v2030 = vpop.f32.mrf.mxu0
      %v2031 = vadd.f32 0.0, %v2030
      %v2032 = vpop.f32.mrf.mxu0
      %v2033 = vadd.f32 0.0, %v2032
      %2034 = vmatmul.bf16.gmra.mxu0 %v2010
      %v2035 = vpop.f32.mrf.mxu0
      %v2036 = vadd.f32 0.0, %v2035
      %v2037 = vpop.f32.mrf.mxu0
      %v2038 = vadd.f32 0.0, %v2037
      %2039 = vmatmul.bf16.gmra.mxu0 %v2013
      %v2040 = vpop.f32.mrf.mxu0
      %v2041 = vadd.f32 0.0, %v2040
      %v2042 = vpop.f32.mrf.mxu0
      %v2043 = vadd.f32 0.0, %v2042
      %2044 = vmatmul.bf16.gmra.mxu0 %v2016
      %v2045 = vpop.f32.mrf.mxu0
      %v2046 = vadd.f32 0.0, %v2045
      %v2047 = vpop.f32.mrf.mxu0
      %v2048 = vadd.f32 0.0, %v2047
      %2049 = vdwg.mxu0
      %v2058 = vunpack.c.l.b16 %v1932
      %v2059 = vunpack.c.l.b16 %v1934
      %v2060 = vunpack.c.l.b16 %v1936
      %v2061 = vunpack.c.l.b16 %v1938
      %v2062 = vunpack.c.l.b16 %v1940
      %v2063 = vunpack.c.l.b16 %v1942
      %v2064 = vunpack.c.l.b16 %v1944
      %v2065 = vunpack.c.l.b16 %v1946
      %v2066 = vpack.c.b16 %v2059, %v2058
      %v2067 = vpack.c.b16 %v2061, %v2060
      %v2068 = vpack.c.b16 %v2063, %v2062
      %v2069 = vpack.c.b16 %v2065, %v2064
      %v2071 = vsel %vm862, %v2066, 0
      %v2074 = vsel %vm862, %v2067, 0
      %v2077 = vsel %vm862, %v2068, 0
      %v2080 = vsel %vm862, %v2069, 0
      %v2083 = vsel %vm875, %v1983, 0
      %2085 = vmatpush.bf16.msra.mxu0 0
      %2086 = vmatpush.bf16.msra.mxu0 0
      %2087 = vmatpush.bf16.msra.mxu0 0
      %2088 = vmatpush.bf16.msra.mxu0 0
      %2089 = vmatpush.bf16.msra.mxu0 0
      %2090 = vmatpush.bf16.msra.mxu0 0
      %2091 = vmatpush.bf16.msra.mxu0 0
      %2092 = vmatpush.bf16.msra.mxu0 %v2083
      %2093 = vmatmul.bf16.gmra.mxu0 %v2071
      %v2094 = vpop.f32.mrf.mxu0
      %v2095 = vadd.f32 %v2031, %v2094
      %v2096 = vpop.f32.mrf.mxu0
      %v2097 = vadd.f32 %v2033, %v2096
      %2098 = vmatmul.bf16.gmra.mxu0 %v2074
      %v2099 = vpop.f32.mrf.mxu0
      %v2100 = vadd.f32 %v2036, %v2099
      %v2101 = vpop.f32.mrf.mxu0
      %v2102 = vadd.f32 %v2038, %v2101
      %2103 = vmatmul.bf16.gmra.mxu0 %v2077
      %v2104 = vpop.f32.mrf.mxu0
      %v2105 = vadd.f32 %v2041, %v2104
      %v2106 = vpop.f32.mrf.mxu0
      %v2107 = vadd.f32 %v2043, %v2106
      %2108 = vmatmul.bf16.gmra.mxu0 %v2080
      %v2109 = vpop.f32.mrf.mxu0
      %v2110 = vadd.f32 %v2046, %v2109
      %v2111 = vpop.f32.mrf.mxu0
      %v2112 = vadd.f32 %v2048, %v2111
      %2113 = vdwg.mxu0
      %v2115 = vshrl.u32 %v1932, 16
      %v2117 = vrot.slane %v2115, 4
      %v2118 = vshll.u32 %v1932, 16
      %v2120 = vrot.slane %v2118, 5
      %v2121 = vor.u32 %v2117, %v2120
      %v2122 = vrot.slane %v2121, 4
      %v2124 = vshll.u32 %v1933, 16
      %v2126 = vrot.slane %v2124, 5
      %v2127 = vsel %vm974, %v2122, %v2126
      %v2129 = vshrl.u32 %v1934, 16
      %v2131 = vrot.slane %v2129, 4
      %v2132 = vshll.u32 %v1934, 16
      %v2134 = vrot.slane %v2132, 5
      %v2135 = vor.u32 %v2131, %v2134
      %v2136 = vrot.slane %v2135, 4
      %v2138 = vshll.u32 %v1935, 16
      %v2140 = vrot.slane %v2138, 5
      %v2141 = vsel %vm974, %v2136, %v2140
      %v2143 = vshrl.u32 %v1936, 16
      %v2145 = vrot.slane %v2143, 4
      %v2146 = vshll.u32 %v1936, 16
      %v2148 = vrot.slane %v2146, 5
      %v2149 = vor.u32 %v2145, %v2148
      %v2150 = vrot.slane %v2149, 4
      %v2152 = vshll.u32 %v1937, 16
      %v2154 = vrot.slane %v2152, 5
      %v2155 = vsel %vm974, %v2150, %v2154
      %v2157 = vshrl.u32 %v1938, 16
      %v2159 = vrot.slane %v2157, 4
      %v2160 = vshll.u32 %v1938, 16
      %v2162 = vrot.slane %v2160, 5
      %v2163 = vor.u32 %v2159, %v2162
      %v2164 = vrot.slane %v2163, 4
      %v2166 = vshll.u32 %v1939, 16
      %v2168 = vrot.slane %v2166, 5
      %v2169 = vsel %vm974, %v2164, %v2168
      %v2171 = vshrl.u32 %v1940, 16
      %v2173 = vrot.slane %v2171, 4
      %v2174 = vshll.u32 %v1940, 16
      %v2176 = vrot.slane %v2174, 5
      %v2177 = vor.u32 %v2173, %v2176
      %v2178 = vrot.slane %v2177, 4
      %v2180 = vshll.u32 %v1941, 16
      %v2182 = vrot.slane %v2180, 5
      %v2183 = vsel %vm974, %v2178, %v2182
      %v2185 = vshrl.u32 %v1942, 16
      %v2187 = vrot.slane %v2185, 4
      %v2188 = vshll.u32 %v1942, 16
      %v2190 = vrot.slane %v2188, 5
      %v2191 = vor.u32 %v2187, %v2190
      %v2192 = vrot.slane %v2191, 4
      %v2194 = vshll.u32 %v1943, 16
      %v2196 = vrot.slane %v2194, 5
      %v2197 = vsel %vm974, %v2192, %v2196
      %v2199 = vshrl.u32 %v1944, 16
      %v2201 = vrot.slane %v2199, 4
      %v2202 = vshll.u32 %v1944, 16
      %v2204 = vrot.slane %v2202, 5
      %v2205 = vor.u32 %v2201, %v2204
      %v2206 = vrot.slane %v2205, 4
      %v2208 = vshll.u32 %v1945, 16
      %v2210 = vrot.slane %v2208, 5
      %v2211 = vsel %vm974, %v2206, %v2210
      %v2213 = vshrl.u32 %v1946, 16
      %v2215 = vrot.slane %v2213, 4
      %v2216 = vshll.u32 %v1946, 16
      %v2218 = vrot.slane %v2216, 5
      %v2219 = vor.u32 %v2215, %v2218
      %v2220 = vrot.slane %v2219, 4
      %v2222 = vshll.u32 %v1947, 16
      %v2224 = vrot.slane %v2222, 5
      %v2225 = vsel %vm974, %v2220, %v2224
      %s2226 = scalar_lea.vmem %s446, 4
      %v2227 = vld [vmem:[%s2226] sm:$0x3]
      %v2228 = vunpack.c.l.b16 %v2127
      %v2229 = vunpack.c.l.b16 %v2141
      %v2230 = vunpack.c.l.b16 %v2155
      %v2231 = vunpack.c.l.b16 %v2169
      %v2232 = vunpack.c.l.b16 %v2183
      %v2233 = vunpack.c.l.b16 %v2197
      %v2234 = vunpack.c.l.b16 %v2211
      %v2235 = vunpack.c.l.b16 %v2225
      %v2236 = vpack.c.b16 %v2229, %v2228
      %v2237 = vpack.c.b16 %v2231, %v2230
      %v2238 = vpack.c.b16 %v2233, %v2232
      %v2239 = vpack.c.b16 %v2235, %v2234
      %v2241 = vsel %vm862, %v2236, 0
      %v2244 = vsel %vm862, %v2237, 0
      %v2247 = vsel %vm862, %v2238, 0
      %v2250 = vsel %vm862, %v2239, 0
      %v2253 = vsel %vm875, %v2227, 0
      %2255 = vmatpush.bf16.msra.mxu0 0
      %2256 = vmatpush.bf16.msra.mxu0 0
      %2257 = vmatpush.bf16.msra.mxu0 0
      %2258 = vmatpush.bf16.msra.mxu0 0
      %2259 = vmatpush.bf16.msra.mxu0 0
      %2260 = vmatpush.bf16.msra.mxu0 0
      %2261 = vmatpush.bf16.msra.mxu0 0
      %2262 = vmatpush.bf16.msra.mxu0 %v2253
      %2263 = vmatmul.bf16.gmra.mxu0 %v2241
      %v2264 = vpop.f32.mrf.mxu0
      %v2265 = vadd.f32 0.0, %v2264
      %v2266 = vpop.f32.mrf.mxu0
      %v2267 = vadd.f32 0.0, %v2266
      %2268 = vmatmul.bf16.gmra.mxu0 %v2244
      %v2269 = vpop.f32.mrf.mxu0
      %v2270 = vadd.f32 0.0, %v2269
      %v2271 = vpop.f32.mrf.mxu0
      %v2272 = vadd.f32 0.0, %v2271
      %2273 = vmatmul.bf16.gmra.mxu0 %v2247
      %v2274 = vpop.f32.mrf.mxu0
      %v2275 = vadd.f32 0.0, %v2274
      %v2276 = vpop.f32.mrf.mxu0
      %v2277 = vadd.f32 0.0, %v2276
      %2278 = vmatmul.bf16.gmra.mxu0 %v2250
      %v2279 = vpop.f32.mrf.mxu0
      %v2280 = vadd.f32 0.0, %v2279
      %v2281 = vpop.f32.mrf.mxu0
      %v2282 = vadd.f32 0.0, %v2281
      %2283 = vdwg.mxu0
      %v2284 = vadd.f32 %v2095, %v2265
      %v2285 = vadd.f32 %v2097, %v2267
      %v2286 = vadd.f32 %v2100, %v2270
      %v2287 = vadd.f32 %v2102, %v2272
      %v2288 = vadd.f32 %v2105, %v2275
      %v2289 = vadd.f32 %v2107, %v2277
      %v2290 = vadd.f32 %v2110, %v2280
      %v2291 = vadd.f32 %v2112, %v2282
      %s2292 = scalar_lea.vmem %s446, 6
      %v2293 = vld [vmem:[%s2292] sm:$0x3]
      %v2302 = vunpack.c.l.b16 %v1959
      %v2303 = vunpack.c.l.b16 %v1961
      %v2304 = vunpack.c.l.b16 %v1963
      %v2305 = vunpack.c.l.b16 %v1965
      %v2306 = vunpack.c.l.b16 %v1967
      %v2307 = vunpack.c.l.b16 %v1969
      %v2308 = vunpack.c.l.b16 %v1971
      %v2309 = vunpack.c.l.b16 %v1973
      %v2310 = vpack.c.b16 %v2303, %v2302
      %v2311 = vpack.c.b16 %v2305, %v2304
      %v2312 = vpack.c.b16 %v2307, %v2306
      %v2313 = vpack.c.b16 %v2309, %v2308
      %v2315 = vsel %vm862, %v2310, 0
      %v2318 = vsel %vm862, %v2311, 0
      %v2321 = vsel %vm862, %v2312, 0
      %v2324 = vsel %vm862, %v2313, 0
      %v2327 = vsel %vm875, %v2293, 0
      %2329 = vmatpush.bf16.msra.mxu0 0
      %2330 = vmatpush.bf16.msra.mxu0 0
      %2331 = vmatpush.bf16.msra.mxu0 0
      %2332 = vmatpush.bf16.msra.mxu0 0
      %2333 = vmatpush.bf16.msra.mxu0 0
      %2334 = vmatpush.bf16.msra.mxu0 0
      %2335 = vmatpush.bf16.msra.mxu0 0
      %2336 = vmatpush.bf16.msra.mxu0 %v2327
      %2337 = vmatmul.bf16.gmra.mxu0 %v2315
      %v2338 = vpop.f32.mrf.mxu0
      %v2339 = vadd.f32 0.0, %v2338
      %v2340 = vpop.f32.mrf.mxu0
      %v2341 = vadd.f32 0.0, %v2340
      %2342 = vmatmul.bf16.gmra.mxu0 %v2318
      %v2343 = vpop.f32.mrf.mxu0
      %v2344 = vadd.f32 0.0, %v2343
      %v2345 = vpop.f32.mrf.mxu0
      %v2346 = vadd.f32 0.0, %v2345
      %2347 = vmatmul.bf16.gmra.mxu0 %v2321
      %v2348 = vpop.f32.mrf.mxu0
      %v2349 = vadd.f32 0.0, %v2348
      %v2350 = vpop.f32.mrf.mxu0
      %v2351 = vadd.f32 0.0, %v2350
      %2352 = vmatmul.bf16.gmra.mxu0 %v2324
      %v2353 = vpop.f32.mrf.mxu0
      %v2354 = vadd.f32 0.0, %v2353
      %v2355 = vpop.f32.mrf.mxu0
      %v2356 = vadd.f32 0.0, %v2355
      %2357 = vdwg.mxu0
      %v2358 = vadd.f32 %v2284, %v2339
      %v2359 = vadd.f32 %v2285, %v2341
      %v2360 = vadd.f32 %v2286, %v2344
      %v2361 = vadd.f32 %v2287, %v2346
      %v2362 = vadd.f32 %v2288, %v2349
      %v2363 = vadd.f32 %v2289, %v2351
      %v2364 = vadd.f32 %v2290, %v2354
      %v2365 = vadd.f32 %v2291, %v2356
      %s2366 = scalar_lea.vmem %s446, 8
      %v2367 = vld [vmem:[%s2366] sm:$0x3]
      %v2376 = vunpack.c.l.b16 %v1975
      %v2377 = vunpack.c.l.b16 %v1976
      %v2378 = vunpack.c.l.b16 %v1977
      %v2379 = vunpack.c.l.b16 %v1978
      %v2380 = vunpack.c.l.b16 %v1979
      %v2381 = vunpack.c.l.b16 %v1980
      %v2382 = vunpack.c.l.b16 %v1981
      %v2383 = vunpack.c.l.b16 %v1982
      %v2384 = vpack.c.b16 %v2377, %v2376
      %v2385 = vpack.c.b16 %v2379, %v2378
      %v2386 = vpack.c.b16 %v2381, %v2380
      %v2387 = vpack.c.b16 %v2383, %v2382
      %v2389 = vsel %vm862, %v2384, 0
      %v2392 = vsel %vm862, %v2385, 0
      %v2395 = vsel %vm862, %v2386, 0
      %v2398 = vsel %vm862, %v2387, 0
      %v2401 = vsel %vm875, %v2367, 0
      %2403 = vmatpush.bf16.msra.mxu0 0
      %2404 = vmatpush.bf16.msra.mxu0 0
      %2405 = vmatpush.bf16.msra.mxu0 0
      %2406 = vmatpush.bf16.msra.mxu0 0
      %2407 = vmatpush.bf16.msra.mxu0 0
      %2408 = vmatpush.bf16.msra.mxu0 0
      %2409 = vmatpush.bf16.msra.mxu0 0
      %2410 = vmatpush.bf16.msra.mxu0 %v2401
      %2411 = vmatmul.bf16.gmra.mxu0 %v2389
      %v2412 = vpop.f32.mrf.mxu0
      %v2413 = vadd.f32 0.0, %v2412
      %v2414 = vpop.f32.mrf.mxu0
      %v2415 = vadd.f32 0.0, %v2414
      %2416 = vmatmul.bf16.gmra.mxu0 %v2392
      %v2417 = vpop.f32.mrf.mxu0
      %v2418 = vadd.f32 0.0, %v2417
      %v2419 = vpop.f32.mrf.mxu0
      %v2420 = vadd.f32 0.0, %v2419
      %2421 = vmatmul.bf16.gmra.mxu0 %v2395
      %v2422 = vpop.f32.mrf.mxu0
      %v2423 = vadd.f32 0.0, %v2422
      %v2424 = vpop.f32.mrf.mxu0
      %v2425 = vadd.f32 0.0, %v2424
      %2426 = vmatmul.bf16.gmra.mxu0 %v2398
      %v2427 = vpop.f32.mrf.mxu0
      %v2428 = vadd.f32 0.0, %v2427
      %v2429 = vpop.f32.mrf.mxu0
      %v2430 = vadd.f32 0.0, %v2429
      %2431 = vdwg.mxu0
      %v2432 = vadd.f32 %v2358, %v2413
      %v2433 = vadd.f32 %v2359, %v2415
      %v2434 = vadd.f32 %v2360, %v2418
      %v2435 = vadd.f32 %v2361, %v2420
      %v2436 = vadd.f32 %v2362, %v2423
      %v2437 = vadd.f32 %v2363, %v2425
      %v2438 = vadd.f32 %v2364, %v2428
      %v2439 = vadd.f32 %v2365, %v2430
      %v2441 = vshrl.u32 %v1959, 16
      %v2443 = vrot.slane %v2441, 4
      %v2444 = vshll.u32 %v1959, 16
      %v2446 = vrot.slane %v2444, 5
      %v2447 = vor.u32 %v2443, %v2446
      %v2448 = vrot.slane %v2447, 4
      %v2450 = vshll.u32 %v1960, 16
      %v2452 = vrot.slane %v2450, 5
      %v2453 = vsel %vm974, %v2448, %v2452
      %v2455 = vshrl.u32 %v1961, 16
      %v2457 = vrot.slane %v2455, 4
      %v2458 = vshll.u32 %v1961, 16
      %v2460 = vrot.slane %v2458, 5
      %v2461 = vor.u32 %v2457, %v2460
      %v2462 = vrot.slane %v2461, 4
      %v2464 = vshll.u32 %v1962, 16
      %v2466 = vrot.slane %v2464, 5
      %v2467 = vsel %vm974, %v2462, %v2466
      %v2469 = vshrl.u32 %v1963, 16
      %v2471 = vrot.slane %v2469, 4
      %v2472 = vshll.u32 %v1963, 16
      %v2474 = vrot.slane %v2472, 5
      %v2475 = vor.u32 %v2471, %v2474
      %v2476 = vrot.slane %v2475, 4
      %v2478 = vshll.u32 %v1964, 16
      %v2480 = vrot.slane %v2478, 5
      %v2481 = vsel %vm974, %v2476, %v2480
      %v2483 = vshrl.u32 %v1965, 16
      %v2485 = vrot.slane %v2483, 4
      %v2486 = vshll.u32 %v1965, 16
      %v2488 = vrot.slane %v2486, 5
      %v2489 = vor.u32 %v2485, %v2488
      %v2490 = vrot.slane %v2489, 4
      %v2492 = vshll.u32 %v1966, 16
      %v2494 = vrot.slane %v2492, 5
      %v2495 = vsel %vm974, %v2490, %v2494
      %v2497 = vshrl.u32 %v1967, 16
      %v2499 = vrot.slane %v2497, 4
      %v2500 = vshll.u32 %v1967, 16
      %v2502 = vrot.slane %v2500, 5
      %v2503 = vor.u32 %v2499, %v2502
      %v2504 = vrot.slane %v2503, 4
      %v2506 = vshll.u32 %v1968, 16
      %v2508 = vrot.slane %v2506, 5
      %v2509 = vsel %vm974, %v2504, %v2508
      %v2511 = vshrl.u32 %v1969, 16
      %v2513 = vrot.slane %v2511, 4
      %v2514 = vshll.u32 %v1969, 16
      %v2516 = vrot.slane %v2514, 5
      %v2517 = vor.u32 %v2513, %v2516
      %v2518 = vrot.slane %v2517, 4
      %v2520 = vshll.u32 %v1970, 16
      %v2522 = vrot.slane %v2520, 5
      %v2523 = vsel %vm974, %v2518, %v2522
      %v2525 = vshrl.u32 %v1971, 16
      %v2527 = vrot.slane %v2525, 4
      %v2528 = vshll.u32 %v1971, 16
      %v2530 = vrot.slane %v2528, 5
      %v2531 = vor.u32 %v2527, %v2530
      %v2532 = vrot.slane %v2531, 4
      %v2534 = vshll.u32 %v1972, 16
      %v2536 = vrot.slane %v2534, 5
      %v2537 = vsel %vm974, %v2532, %v2536
      %v2539 = vshrl.u32 %v1973, 16
      %v2541 = vrot.slane %v2539, 4
      %v2542 = vshll.u32 %v1973, 16
      %v2544 = vrot.slane %v2542, 5
      %v2545 = vor.u32 %v2541, %v2544
      %v2546 = vrot.slane %v2545, 4
      %v2548 = vshll.u32 %v1974, 16
      %v2550 = vrot.slane %v2548, 5
      %v2551 = vsel %vm974, %v2546, %v2550
      %s2552 = scalar_lea.vmem %s446, 10
      %v2553 = vld [vmem:[%s2552] sm:$0x3]
      %v2554 = vunpack.c.l.b16 %v2453
      %v2555 = vunpack.c.l.b16 %v2467
      %v2556 = vunpack.c.l.b16 %v2481
      %v2557 = vunpack.c.l.b16 %v2495
      %v2558 = vunpack.c.l.b16 %v2509
      %v2559 = vunpack.c.l.b16 %v2523
      %v2560 = vunpack.c.l.b16 %v2537
      %v2561 = vunpack.c.l.b16 %v2551
      %v2562 = vpack.c.b16 %v2555, %v2554
      %v2563 = vpack.c.b16 %v2557, %v2556
      %v2564 = vpack.c.b16 %v2559, %v2558
      %v2565 = vpack.c.b16 %v2561, %v2560
      %v2567 = vsel %vm862, %v2562, 0
      %v2570 = vsel %vm862, %v2563, 0
      %v2573 = vsel %vm862, %v2564, 0
      %v2576 = vsel %vm862, %v2565, 0
      %v2579 = vsel %vm875, %v2553, 0
      %2581 = vmatpush.bf16.msra.mxu0 0
      %2582 = vmatpush.bf16.msra.mxu0 0
      %2583 = vmatpush.bf16.msra.mxu0 0
      %2584 = vmatpush.bf16.msra.mxu0 0
      %2585 = vmatpush.bf16.msra.mxu0 0
      %2586 = vmatpush.bf16.msra.mxu0 0
      %2587 = vmatpush.bf16.msra.mxu0 0
      %2588 = vmatpush.bf16.msra.mxu0 %v2579
      %2589 = vmatmul.bf16.gmra.mxu0 %v2567
      %v2590 = vpop.f32.mrf.mxu0
      %v2591 = vadd.f32 0.0, %v2590
      %v2592 = vpop.f32.mrf.mxu0
      %v2593 = vadd.f32 0.0, %v2592
      %2594 = vmatmul.bf16.gmra.mxu0 %v2570
      %v2595 = vpop.f32.mrf.mxu0
      %v2596 = vadd.f32 0.0, %v2595
      %v2597 = vpop.f32.mrf.mxu0
      %v2598 = vadd.f32 0.0, %v2597
      %2599 = vmatmul.bf16.gmra.mxu0 %v2573
      %v2600 = vpop.f32.mrf.mxu0
      %v2601 = vadd.f32 0.0, %v2600
      %v2602 = vpop.f32.mrf.mxu0
      %v2603 = vadd.f32 0.0, %v2602
      %2604 = vmatmul.bf16.gmra.mxu0 %v2576
      %v2605 = vpop.f32.mrf.mxu0
      %v2606 = vadd.f32 0.0, %v2605
      %v2607 = vpop.f32.mrf.mxu0
      %v2608 = vadd.f32 0.0, %v2607
      %2609 = vdwg.mxu0
      %v2610 = vadd.f32 %v2432, %v2591
      %v2611 = vadd.f32 %v2433, %v2593
      %v2612 = vadd.f32 %v2434, %v2596
      %v2613 = vadd.f32 %v2435, %v2598
      %v2614 = vadd.f32 %v2436, %v2601
      %v2615 = vadd.f32 %v2437, %v2603
      %v2616 = vadd.f32 %v2438, %v2606
      %v2617 = vadd.f32 %v2439, %v2608
      %s2618 = scalar_lea.vmem %s446, 12
      %v2619 = vld [vmem:[%s2618] sm:$0x3]
      %v2621 = vunpack.c.l.b16 %v1948
      %v2622 = vpack.c.b16 %v2060, %v2059
      %v2623 = vpack.c.b16 %v2062, %v2061
      %v2624 = vpack.c.b16 %v2064, %v2063
      %v2625 = vpack.c.b16 %v2621, %v2065
      %v2627 = vsel %vm862, %v2622, 0
      %v2630 = vsel %vm862, %v2623, 0
      %v2633 = vsel %vm862, %v2624, 0
      %v2636 = vsel %vm862, %v2625, 0
      %v2639 = vsel %vm875, %v2619, 0
      %2641 = vmatpush.bf16.msra.mxu0 0
      %2642 = vmatpush.bf16.msra.mxu0 0
      %2643 = vmatpush.bf16.msra.mxu0 0
      %2644 = vmatpush.bf16.msra.mxu0 0
      %2645 = vmatpush.bf16.msra.mxu0 0
      %2646 = vmatpush.bf16.msra.mxu0 0
      %2647 = vmatpush.bf16.msra.mxu0 0
      %2648 = vmatpush.bf16.msra.mxu0 %v2639
      %2649 = vmatmul.bf16.gmra.mxu0 %v2627
      %v2650 = vpop.f32.mrf.mxu0
      %v2651 = vadd.f32 0.0, %v2650
      %v2652 = vpop.f32.mrf.mxu0
      %v2653 = vadd.f32 0.0, %v2652
      %2654 = vmatmul.bf16.gmra.mxu0 %v2630
      %v2655 = vpop.f32.mrf.mxu0
      %v2656 = vadd.f32 0.0, %v2655
      %v2657 = vpop.f32.mrf.mxu0
      %v2658 = vadd.f32 0.0, %v2657
      %2659 = vmatmul.bf16.gmra.mxu0 %v2633
      %v2660 = vpop.f32.mrf.mxu0
      %v2661 = vadd.f32 0.0, %v2660
      %v2662 = vpop.f32.mrf.mxu0
      %v2663 = vadd.f32 0.0, %v2662
      %2664 = vmatmul.bf16.gmra.mxu0 %v2636
      %v2665 = vpop.f32.mrf.mxu0
      %v2666 = vadd.f32 0.0, %v2665
      %v2667 = vpop.f32.mrf.mxu0
      %v2668 = vadd.f32 0.0, %v2667
      %2669 = vdwg.mxu0
      %v2670 = vadd.f32 %v2610, %v2651
      %v2671 = vadd.f32 %v2611, %v2653
      %v2672 = vadd.f32 %v2612, %v2656
      %v2673 = vadd.f32 %v2613, %v2658
      %v2674 = vadd.f32 %v2614, %v2661
      %v2675 = vadd.f32 %v2615, %v2663
      %v2676 = vadd.f32 %v2616, %v2666
      %v2677 = vadd.f32 %v2617, %v2668
      %s2678 = scalar_lea.vmem %s446, 14
      %v2679 = vld [vmem:[%s2678] sm:$0x3]
      %v2681 = vunpack.c.l.b16 %v1958
      %v2682 = vpack.c.b16 %v1996, %v1995
      %v2683 = vpack.c.b16 %v1998, %v1997
      %v2684 = vpack.c.b16 %v2000, %v1999
      %v2685 = vpack.c.b16 %v2681, %v2001
      %v2687 = vsel %vm862, %v2682, 0
      %v2690 = vsel %vm862, %v2683, 0
      %v2693 = vsel %vm862, %v2684, 0
      %v2696 = vsel %vm862, %v2685, 0
      %v2699 = vsel %vm875, %v2679, 0
      %2701 = vmatpush.bf16.msra.mxu0 0
      %2702 = vmatpush.bf16.msra.mxu0 0
      %2703 = vmatpush.bf16.msra.mxu0 0
      %2704 = vmatpush.bf16.msra.mxu0 0
      %2705 = vmatpush.bf16.msra.mxu0 0
      %2706 = vmatpush.bf16.msra.mxu0 0
      %2707 = vmatpush.bf16.msra.mxu0 0
      %2708 = vmatpush.bf16.msra.mxu0 %v2699
      %2709 = vmatmul.bf16.gmra.mxu0 %v2687
      %v2710 = vpop.f32.mrf.mxu0
      %v2711 = vadd.f32 0.0, %v2710
      %v2712 = vpop.f32.mrf.mxu0
      %v2713 = vadd.f32 0.0, %v2712
      %2714 = vmatmul.bf16.gmra.mxu0 %v2690
      %v2715 = vpop.f32.mrf.mxu0
      %v2716 = vadd.f32 0.0, %v2715
      %v2717 = vpop.f32.mrf.mxu0
      %v2718 = vadd.f32 0.0, %v2717
      %2719 = vmatmul.bf16.gmra.mxu0 %v2693
      %v2720 = vpop.f32.mrf.mxu0
      %v2721 = vadd.f32 0.0, %v2720
      %v2722 = vpop.f32.mrf.mxu0
      %v2723 = vadd.f32 0.0, %v2722
      %2724 = vmatmul.bf16.gmra.mxu0 %v2696
      %v2725 = vpop.f32.mrf.mxu0
      %v2726 = vadd.f32 0.0, %v2725
      %v2727 = vpop.f32.mrf.mxu0
      %v2728 = vadd.f32 0.0, %v2727
      %2729 = vdwg.mxu0
      %v2730 = vadd.f32 %v2670, %v2711
      %v2731 = vadd.f32 %v2671, %v2713
      %v2732 = vadd.f32 %v2672, %v2716
      %v2733 = vadd.f32 %v2673, %v2718
      %v2734 = vadd.f32 %v2674, %v2721
      %v2735 = vadd.f32 %v2675, %v2723
      %v2736 = vadd.f32 %v2676, %v2726
      %v2737 = vadd.f32 %v2677, %v2728
      %v2739 = vshrl.u32 %v1948, 16
      %v2741 = vrot.slane %v2739, 4
      %v2742 = vshll.u32 %v1948, 16
      %v2744 = vrot.slane %v2742, 5
      %v2745 = vor.u32 %v2741, %v2744
      %v2746 = vrot.slane %v2745, 4
      %v2748 = vshll.u32 %v1949, 16
      %v2750 = vrot.slane %v2748, 5
      %v2751 = vsel %vm974, %v2746, %v2750
      %s2752 = scalar_lea.vmem %s446, 16
      %v2753 = vld [vmem:[%s2752] sm:$0x3]
      %v2754 = vunpack.c.l.b16 %v2751
      %v2755 = vpack.c.b16 %v2230, %v2229
      %v2756 = vpack.c.b16 %v2232, %v2231
      %v2757 = vpack.c.b16 %v2234, %v2233
      %v2758 = vpack.c.b16 %v2754, %v2235
      %v2760 = vsel %vm862, %v2755, 0
      %v2763 = vsel %vm862, %v2756, 0
      %v2766 = vsel %vm862, %v2757, 0
      %v2769 = vsel %vm862, %v2758, 0
      %v2772 = vsel %vm875, %v2753, 0
      %2774 = vmatpush.bf16.msra.mxu0 0
      %2775 = vmatpush.bf16.msra.mxu0 0
      %2776 = vmatpush.bf16.msra.mxu0 0
      %2777 = vmatpush.bf16.msra.mxu0 0
      %2778 = vmatpush.bf16.msra.mxu0 0
      %2779 = vmatpush.bf16.msra.mxu0 0
      %2780 = vmatpush.bf16.msra.mxu0 0
      %2781 = vmatpush.bf16.msra.mxu0 %v2772
      %2782 = vmatmul.bf16.gmra.mxu0 %v2760
      %v2783 = vpop.f32.mrf.mxu0
      %v2784 = vadd.f32 0.0, %v2783
      %v2785 = vpop.f32.mrf.mxu0
      %v2786 = vadd.f32 0.0, %v2785
      %2787 = vmatmul.bf16.gmra.mxu0 %v2763
      %v2788 = vpop.f32.mrf.mxu0
      %v2789 = vadd.f32 0.0, %v2788
      %v2790 = vpop.f32.mrf.mxu0
      %v2791 = vadd.f32 0.0, %v2790
      %2792 = vmatmul.bf16.gmra.mxu0 %v2766
      %v2793 = vpop.f32.mrf.mxu0
      %v2794 = vadd.f32 0.0, %v2793
      %v2795 = vpop.f32.mrf.mxu0
      %v2796 = vadd.f32 0.0, %v2795
      %2797 = vmatmul.bf16.gmra.mxu0 %v2769
      %v2798 = vpop.f32.mrf.mxu0
      %v2799 = vadd.f32 0.0, %v2798
      %v2800 = vpop.f32.mrf.mxu0
      %v2801 = vadd.f32 0.0, %v2800
      %2802 = vdwg.mxu0
      %v2803 = vadd.f32 %v2730, %v2784
      %v2804 = vadd.f32 %v2731, %v2786
      %v2805 = vadd.f32 %v2732, %v2789
      %v2806 = vadd.f32 %v2733, %v2791
      %v2807 = vadd.f32 %v2734, %v2794
      %v2808 = vadd.f32 %v2735, %v2796
      %v2809 = vadd.f32 %v2736, %v2799
      %v2810 = vadd.f32 %v2737, %v2801
      %2811 = vst [vmem:[%s462] sm:$0xff] %v2803
      %2812 = vst [vmem:[%s462 + $0x8] sm:$0xff] %v2804
      %2813 = vst [vmem:[%s462 + $0x10] sm:$0xff] %v2805
      %2814 = vst [vmem:[%s462 + $0x18] sm:$0xff] %v2806
      %2815 = vst [vmem:[%s462 + $0x20] sm:$0xff] %v2807
      %2816 = vst [vmem:[%s462 + $0x28] sm:$0xff] %v2808
      %2817 = vst [vmem:[%s462 + $0x30] sm:$0xff] %v2809
      %2818 = vst [vmem:[%s462 + $0x38] sm:$0xff] %v2810
      %p2819 = scmp.lt.s32.totalorder %s27, 1
      %s2820 = scalar_select %p2819, %s27, 1
      %p2821 = scmp.lt.s32.totalorder %s26, 0
      %s2822 = scalar_select %p2821, %s26, 0
      %s2823 = smul.addr %s2820, 8
      %s2824 = sadd.s32 %s2822, %s2823
      %s2825 = smul.addr %s2824, 4
      %s2826 = scalar_lea.vmem %s9, %s2825
      %p2827 = scmp.lt.s32.totalorder %s27, 1
      %s2828 = scalar_select %p2827, %s27, 1
      %p2829 = scmp.lt.s32.totalorder %s26, 0
      %s2830 = scalar_select %p2829, %s26, 0
      %s2831 = smul.addr %s2828, 8
      %s2832 = sadd.s32 %s2830, %s2831
      %s2833 = smul.addr %s2832, 8
      %s2834 = scalar_lea.vmem %s10, %s2833
      // Predicated region
      $region57: #{basic_block_forward.2} parent=55 // pred_check
        %p2835 = pneg %p268
      $region58: #{basic_block_forward.2} parent=55 // pred_check_branch
        %2837 = sbr.rel (%p2835) target = $region60
      $region59: #{basic_block_forward.2} parent=55 // pred_region
        _
      $region60: #{basic_block_forward.2} parent=55 // pred_fallthru
        _
      // Predicated region
      $region61: #{basic_block_forward.2} parent=55 // pred_check
        %p2838 = pneg %p296
      $region62: #{basic_block_forward.2} parent=55 // pred_check_branch
        %2840 = sbr.rel (%p2838) target = $region64
      $region63: #{basic_block_forward.2} parent=55 // pred_region
        _
      $region64: #{basic_block_forward.2} parent=55 // pred_fallthru
        _
    $region56: #{basic_block_forward.2} parent=5 // pred_fallthru
      _
    %p2841 = scmp.le.s32.totalorder 2, %s17
    // Predicated region
    $region65: #{basic_block_forward.2} parent=5 // pred_check
      %p2842 = pneg %p2841
    $region66: #{basic_block_forward.2} parent=5 // pred_check_branch
      %2844 = sbr.rel (%p2842) target = $region68
    $region67: #{basic_block_forward.2} parent=5 // pred_region
      %s2845 = ssub.s32 %s17, 2
      // Predicated region
      $region69: #{basic_block_forward.2} parent=67 // pred_check
        %p2846 = pneg %p274
      $region70: #{basic_block_forward.2} parent=67 // pred_check_branch
        %2848 = sbr.rel (%p2846) target = $region72
      $region71: #{basic_block_forward.2} parent=67 // pred_region
        %p2849 = scmp.lt.s32.totalorder %s29, 1
        %s2850 = scalar_select %p2849, %s29, 1
        %p2851 = scmp.lt.s32.totalorder %s28, 0
        %s2852 = scalar_select %p2851, %s28, 0
        %s2853 = smul.addr %s2850, 8
        %s2854 = sadd.s32 %s2852, %s2853
        %s2855 = smul.addr %s2854, 4
        %s2856 = scalar_lea.vmem %s9, %s2855
      $region72: #{basic_block_forward.2} parent=67 // pred_fallthru
        _
      // Predicated region
      $region73: #{basic_block_forward.2} parent=67 // pred_check
        %p2857 = pneg %p302
      $region74: #{basic_block_forward.2} parent=67 // pred_check_branch
        %2859 = sbr.rel (%p2857) target = $region76
      $region75: #{basic_block_forward.2} parent=67 // pred_region
        %p2860 = scmp.lt.s32.totalorder %s29, 1
        %s2861 = scalar_select %p2860, %s29, 1
        %p2862 = scmp.lt.s32.totalorder %s28, 0
        %s2863 = scalar_select %p2862, %s28, 0
        %s2864 = smul.addr %s2861, 8
        %s2865 = sadd.s32 %s2863, %s2864
        %s2866 = smul.addr %s2865, 8
        %s2867 = scalar_lea.vmem %s10, %s2866
      $region76: #{basic_block_forward.2} parent=67 // pred_fallthru
        _
    $region68: #{basic_block_forward.2} parent=5 // pred_fallthru
      _
  $region6: #{basic_block_forward.2} parent=0 // loop_footer
    %s21 = sadd.s32 1, %s17
  $region7: #{basic_block_forward.2} parent=0 // loop_footer_branch
    %16 = sbr.rel target = $region3
  $region8: #{basic_block_forward.2} parent=0 // loop_exit
    _

</llo_original>
